<compile_context>
chip_gen: v7x
topology: tpu7x:2x2x1
jax: 0.10.0
libtpu: 0.0.40
codegen_flags: <defaults>
</compile_context>

<pallas_src>
import functools
import math

import jax
import jax.numpy as jnp
from jax.experimental import pallas as pl
from jax.experimental.pallas import tpu as pltpu


def _round_up(x, m):
    return ((x + m - 1) // m) * m


def _attn_kernel(q_ref, k_ref, v_ref, tsm_ref,
                 wq_ref, bq_ref, wk_ref, bk_ref, wv_ref, bv_ref,
                 hsum_ref, hexp_ref, out_ref, *, n_keys, n_heads, has_mask):
    """One grid step processes a tile of g_tile (batch*type) groups.

    q_ref:    (Gt, hidden)        bf16 -- single query per group (Sq == 1)
    k_ref:    (Gt*N, hidden)      bf16
    v_ref:    (Gt*N, hidden)      bf16
    tsm_ref:  (Gt, N, C)          f32  -- C=1: [type_score]; C=2: [type_score, mask]
    wq/wk/wv: (hidden, all_head)  bf16 -- pre-transposed in the wrapper
    bq/bk/bv: (1, all_head)       f32
    hsum_ref: (all_head, H)       f32  -- per-head SUM matrix, pre-scaled 1/sqrt(D)
    hexp_ref: (H, all_head)       f32  -- 0/1 per-head EXPAND matrix
    out_ref:  (Gt, all_head)
    """
    gt = q_ref.shape[0]
    a = out_ref.shape[-1]
    f32 = jnp.float32

    # QKV projections: bf16 operands straight to the MXU, f32 accumulation.
    q = jnp.dot(q_ref[...], wq_ref[...], preferred_element_type=f32) + bq_ref[...]
    k = jnp.dot(k_ref[...], wk_ref[...], preferred_element_type=f32) + bk_ref[...]
    v = jnp.dot(v_ref[...], wv_ref[...], preferred_element_type=f32) + bv_ref[...]

    k3 = k.reshape(gt, n_keys, a)
    v3 = v.reshape(gt, n_keys, a)

    # All-heads scores at compact per-head width H (Sq == 1):
    #   qk[g,n,:] = q[g,:] * k[g,n,:]                         (VPU broadcast-mul)
    #   s[g,n,h]  = (1/sqrt(D)) * sum_{d in head h} qk[g,n,d] (small MXU matmul)
    qk = q[:, None, :] * k3
    s = jnp.dot(qk.reshape(gt * n_keys, a), hsum_ref[...],
                preferred_element_type=f32).reshape(gt, n_keys, n_heads)

    tsm = tsm_ref[...].astype(f32)
    if has_mask:
        s = s + tsm[:, :, 1:2]                    # additive mask, broadcast over H only

    # Softmax over the key axis (axis=1), numerically stabilized; normalization is
    # fused with the post-softmax type-score scaling (EUP approx reciprocal).
    s = s - jnp.max(s, axis=1, keepdims=True)
    e = jnp.exp(s)
    inv_l = pl.reciprocal(jnp.sum(e, axis=1, keepdims=True), approx=True)
    p = e * inv_l * tsm[:, :, 0:1]                # (Gt, N, H)
    # TODO(synk): nn.Dropout is identity here (eval / inference mode only).

    # Expand compact probabilities back to all_head lanes (tiny 0/1 matmul) and
    # fold into the PV reduction; heads stay fused -> result is already in the
    # "concatenated heads" layout.
    p_exp = jnp.dot(p.reshape(gt * n_keys, n_heads), hexp_ref[...],
                    preferred_element_type=f32).reshape(gt, n_keys, a)
    out_ref[...] = jnp.sum(p_exp * v3, axis=1).astype(out_ref.dtype)


def _pick_g_tile(G, N, hidden, all_head, n_heads, in_bytes, budget_bytes):
    """Largest group tile whose per-step VMEM residency fits the budget."""
    # Streamed q/k/v (+ packed ts/mask, + output), double-buffered.
    stream = 2 * ((1 + 2 * N) * hidden * in_bytes + N * 2 * 4 + all_head * 4)
    # Live f32 intermediates in the body (qk, p_exp, p_exp*v at N x all_head,
    # plus compact-width softmax temporaries).
    interm = 3 * N * all_head * 4 + 4 * N * n_heads * 4
    g = int(budget_bytes) // (stream + interm)
    return max(8, (g // 8) * 8)


def type_one_to_many_attention(q_in, k_in, v_in, type_score, params,
                               attention_mask=None, *, num_heads, g_tile=None,
                               compute_dtype=jnp.bfloat16):
    B, M, Sq, hidden = q_in.shape
    N = k_in.shape[2]
    head_dim = hidden // num_heads
    all_head = num_heads * head_dim
    if Sq != 1:
        # TODO(synk): only the "one"-query case (Sq == 1) of TypeOneToManyAttention
        # is implemented (that is the module's intended use; output squeezes Sq).
        raise NotImplementedError("Sq != 1 is not supported by this kernel")

    wq, bq, wk, bk, wv, bv = params
    bq = bq.reshape(1, all_head).astype(jnp.float32)
    bk = bk.reshape(1, all_head).astype(jnp.float32)
    bv = bv.reshape(1, all_head).astype(jnp.float32)
    # Pre-transpose nn.Linear weights once (no in-kernel transpose) and cast the
    # big streamed operands to bf16; f32 accumulation happens inside the kernel.
    wq_t = jnp.transpose(wq).astype(compute_dtype)
    wk_t = jnp.transpose(wk).astype(compute_dtype)
    wv_t = jnp.transpose(wv).astype(compute_dtype)

    # Per-head SUM (all_head x H, pre-scaled by 1/sqrt(D)) and 0/1 EXPAND
    # (H x all_head) matrices: the softmax runs at compact width H.
    hidx = jnp.arange(all_head) // head_dim
    onehot = (hidx[:, None] == jnp.arange(num_heads)[None, :]).astype(jnp.float32)
    head_sum = onehot / math.sqrt(head_dim)            # (all_head, H)
    head_exp = jnp.transpose(onehot)                   # (H, all_head)

    # VMEM-budget-driven tile of the flattened (B*M) group axis.
    in_bytes = jnp.dtype(compute_dtype).itemsize
    try:
        vmem_cap = pltpu.get_tpu_info().vmem_capacity_bytes
    except Exception:
        vmem_cap = 64 * 1024 * 1024                    # v7x-sized conservative fallback
    vmem_limit = int(vmem_cap) * 3 // 4
    const_bytes = 2 * (3 * hidden * all_head * in_bytes + 3 * all_head * 4
                       + 2 * all_head * num_heads * 4)
    budget = max(vmem_limit * 7 // 10 - const_bytes, 1)

    G = B * M
    if g_tile is None:
        g_tile = _pick_g_tile(G, N, hidden, all_head, num_heads, in_bytes, budget)
        # Keep at least 2 grid steps so both v7x TensorCores get work.
        g_tile = min(g_tile, _round_up(-(-G // 2), 8))
        # TODO(synk): for very large N*hidden a second "arbitrary" grid axis over N
        # with an online-softmax accumulator would be preferable to a tiny g_tile.
    g_tile = _round_up(g_tile, 8)
    steps = max(2, -(-G // g_tile))
    if steps % 2:
        steps += 1                                     # even step count (megacore balance)
    G_pad = steps * g_tile
    pad = G_pad - G

    q2 = q_in.reshape(G, hidden).astype(compute_dtype)
    k2 = k_in.reshape(G, N, hidden).astype(compute_dtype)
    v2 = v_in.reshape(G, N, hidden).astype(compute_dtype)
    ts2 = jnp.broadcast_to(type_score, (B, M, 1, 1, N)).reshape(G, N, 1)
    ts2 = ts2.astype(jnp.float32)
    has_mask = attention_mask is not None
    if has_mask:
        mask2 = jnp.broadcast_to(attention_mask, (B, M, 1, 1, N)).reshape(G, N, 1)
        tsm = jnp.concatenate([ts2, mask2.astype(jnp.float32)], axis=-1)  # one DMA stream
    else:
        tsm = ts2                                      # no mask array allocated / DMA'd

    if pad:
        q2 = jnp.pad(q2, ((0, pad), (0, 0)))
        k2 = jnp.pad(k2, ((0, pad), (0, 0), (0, 0)))
        v2 = jnp.pad(v2, ((0, pad), (0, 0), (0, 0)))
        tsm = jnp.pad(tsm, ((0, pad), (0, 0), (0, 0)))

    k2 = k2.reshape(G_pad * N, hidden)
    v2 = v2.reshape(G_pad * N, hidden)

    gmap2 = lambda g: (g, 0)
    gmap3 = lambda g: (g, 0, 0)
    cmap2 = lambda g: (0, 0)

    kernel = functools.partial(_attn_kernel, n_keys=N, n_heads=num_heads,
                               has_mask=has_mask)
    args = (q2, k2, v2, tsm, wq_t, bq, wk_t, bk, wv_t, bv, head_sum, head_exp)

    def build(const_mode):
        def cspec(shape):
            if const_mode is None:
                return pl.BlockSpec(shape, cmap2)
            return pl.BlockSpec(shape, cmap2, pipeline_mode=const_mode)
        in_specs = [
            pl.BlockSpec((g_tile, hidden), gmap2),              # q      (G, hidden)
            pl.BlockSpec((g_tile * N, hidden), gmap2),          # k      (G*N, hidden)
            pl.BlockSpec((g_tile * N, hidden), gmap2),          # v      (G*N, hidden)
            pl.BlockSpec((g_tile, N, tsm.shape[-1]), gmap3),    # packed type_score(+mask)
            cspec((hidden, all_head)),                          # Wq^T
            cspec((1, all_head)),                               # bq
            cspec((hidden, all_head)),                          # Wk^T
            cspec((1, all_head)),                               # bk
            cspec((hidden, all_head)),                          # Wv^T
            cspec((1, all_head)),                               # bv
            cspec((all_head, num_heads)),                       # per-head SUM matrix
            cspec((num_heads, all_head)),                       # per-head EXPAND matrix
        ]
        return pl.pallas_call(
            kernel,
            out_shape=jax.ShapeDtypeStruct((G_pad, all_head), q_in.dtype),
            grid_spec=pltpu.PrefetchScalarGridSpec(
                num_scalar_prefetch=0,
                grid=(G_pad // g_tile,),
                in_specs=in_specs,
                out_specs=pl.BlockSpec((g_tile, all_head), gmap2),
            ),
            compiler_params=pltpu.CompilerParams(
                dimension_semantics=("parallel",),
                vmem_limit_bytes=vmem_limit),
        )

    try:
        # Constant-index operands only ever need a single VMEM buffer.
        out = build(pl.Buffered(1))(*args)
    except Exception:
        # Graceful fallback to default double-buffering if Buffered(1) is rejected.
        out = build(None)(*args)

    return out[:G].reshape(B, M, all_head)   # == torch's .squeeze(-2) output


def _reference(q_in, k_in, v_in, type_score, params, num_heads,
               attention_mask=None):
    """Pure-JAX reference mirroring the PyTorch forward (eval mode)."""
    B, M, Sq, hidden = q_in.shape
    d = hidden // num_heads
    wq, bq, wk, bk, wv, bv = params

    def proj(x, w, b):
        y = jnp.einsum("bmsh,oh->bmso", x, w) + b.reshape(-1)
        return y.reshape(B, M, -1, num_heads, d).transpose(0, 1, 3, 2, 4)

    q = proj(q_in, wq, bq)
    k = proj(k_in, wk, bk)
    v = proj(v_in, wv, bv)
    s = jnp.einsum("bmhqd,bmhkd->bmhqk", q, k) / math.sqrt(d)
    if attention_mask is not None:
        s = s + attention_mask
    p = jax.nn.softmax(s, axis=-1) * type_score
    ctx = jnp.einsum("bmhqk,bmhkd->bmhqd", p, v)
    ctx = ctx.transpose(0, 1, 3, 2, 4).reshape(B, M, Sq, hidden)
    return ctx[:, :, 0, :] if Sq == 1 else ctx


if __name__ == "__main__":
    B, M, Sq, N = 2, 3, 1, 8
    hidden, num_heads = 32, 4
    all_head = hidden

    key = jax.random.PRNGKey(0)
    ks = jax.random.split(key, 11)
    bound = 1.0 / math.sqrt(hidden)  # PyTorch nn.Linear default init scale

    wq = jax.random.uniform(ks[0], (all_head, hidden), jnp.float32, -bound, bound)
    bq = jax.random.uniform(ks[1], (1, all_head), jnp.float32, -bound, bound)
    wk = jax.random.uniform(ks[2], (all_head, hidden), jnp.float32, -bound, bound)
    bk = jax.random.uniform(ks[3], (1, all_head), jnp.float32, -bound, bound)
    wv = jax.random.uniform(ks[4], (all_head, hidden), jnp.float32, -bound, bound)
    bv = jax.random.uniform(ks[5], (1, all_head), jnp.float32, -bound, bound)
    params = (wq, bq, wk, bk, wv, bv)

    q_in = jax.random.normal(ks[6], (B, M, Sq, hidden), jnp.float32)
    k_in = jax.random.normal(ks[7], (B, M, N, hidden), jnp.float32)
    v_in = jax.random.normal(ks[8], (B, M, N, hidden), jnp.float32)
    type_score = jax.random.uniform(ks[9], (B, M, 1, 1, N), jnp.float32)
    attn_mask = 0.5 * jax.random.normal(ks[10], (B, M, 1, Sq, N), jnp.float32)

    # Reference on bf16-rounded streamed operands (kernel casts q/k/v and weights
    # to bf16 for DMA/MXU; all accumulation / softmax math stays f32).
    rnd = lambda x: x.astype(jnp.bfloat16).astype(jnp.float32)
    params_ref = (rnd(wq), bq, rnd(wk), bk, rnd(wv), bv)
    q_r, k_r, v_r = rnd(q_in), rnd(k_in), rnd(v_in)

    # No-mask path (mask input / DMA compiled out).
    out = type_one_to_many_attention(q_in, k_in, v_in, type_score, params,
                                     attention_mask=None, num_heads=num_heads)
    out = jax.block_until_ready(out)
    ref = _reference(q_r, k_r, v_r, type_score, params_ref, num_heads)
    assert out.shape == (B, M, all_head)
    assert jnp.allclose(out, ref, atol=5e-3, rtol=5e-3), "mismatch (no mask) vs reference"

    # Masked path.
    out_m = type_one_to_many_attention(q_in, k_in, v_in, type_score, params,
                                       attention_mask=attn_mask,
                                       num_heads=num_heads)
    out_m = jax.block_until_ready(out_m)
    ref_m = _reference(q_r, k_r, v_r, type_score, params_ref, num_heads, attn_mask)
    assert jnp.allclose(out_m, ref_m, atol=5e-3, rtol=5e-3), "mismatch (mask) vs reference"

    print("KERNEL_OK")
</pallas_src>

<mosaic_0001>
module attributes {stable_mosaic.version = 11 : i64} {
  func.func @_attn_kernel(%arg0: i32, %arg1: memref<8x32xbf16, #tpu.memory_space<vmem>>, %arg2: memref<64x32xbf16, #tpu.memory_space<vmem>>, %arg3: memref<64x32xbf16, #tpu.memory_space<vmem>>, %arg4: memref<8x8x1xf32, #tpu.memory_space<vmem>>, %arg5: memref<32x32xbf16, #tpu.memory_space<vmem>>, %arg6: memref<1x32xf32, #tpu.memory_space<vmem>>, %arg7: memref<32x32xbf16, #tpu.memory_space<vmem>>, %arg8: memref<1x32xf32, #tpu.memory_space<vmem>>, %arg9: memref<32x32xbf16, #tpu.memory_space<vmem>>, %arg10: memref<1x32xf32, #tpu.memory_space<vmem>>, %arg11: memref<32x4xf32, #tpu.memory_space<vmem>>, %arg12: memref<4x32xf32, #tpu.memory_space<vmem>>, %arg13: memref<8x32xf32, #tpu.memory_space<vmem>>) attributes {dimension_semantics = [#tpu.dimension_semantics<parallel>], iteration_bounds = array<i64: 2>, scalar_prefetch = 0 : i64, scratch_operands = 0 : i64, tpu.core_type = #tpu.core_type<tc>, window_params = [{transform_indices = @transform_0, window_bounds = array<i64: 8, 32>}, {transform_indices = @transform_1, window_bounds = array<i64: 64, 32>}, {transform_indices = @transform_2, window_bounds = array<i64: 64, 32>}, {transform_indices = @transform_3, window_bounds = array<i64: 8, 8, 1>}, {pipeline_mode = #tpu.pipeline_mode<synchronous>, transform_indices = @transform_4, window_bounds = array<i64: 32, 32>}, {pipeline_mode = #tpu.pipeline_mode<synchronous>, transform_indices = @transform_5, window_bounds = array<i64: 1, 32>}, {pipeline_mode = #tpu.pipeline_mode<synchronous>, transform_indices = @transform_6, window_bounds = array<i64: 32, 32>}, {pipeline_mode = #tpu.pipeline_mode<synchronous>, transform_indices = @transform_7, window_bounds = array<i64: 1, 32>}, {pipeline_mode = #tpu.pipeline_mode<synchronous>, transform_indices = @transform_8, window_bounds = array<i64: 32, 32>}, {pipeline_mode = #tpu.pipeline_mode<synchronous>, transform_indices = @transform_9, window_bounds = array<i64: 1, 32>}, {pipeline_mode = #tpu.pipeline_mode<synchronous>, transform_indices = @transform_10, window_bounds = array<i64: 32, 4>}, {pipeline_mode = #tpu.pipeline_mode<synchronous>, transform_indices = @transform_11, window_bounds = array<i64: 4, 32>}, {transform_indices = @transform_12, window_bounds = array<i64: 8, 32>}]} {
    %c0 = arith.constant 0 : index
    %c0_0 = arith.constant 0 : index
    %0 = vector.load %arg1[%c0, %c0_0] : memref<8x32xbf16, #tpu.memory_space<vmem>>, vector<8x32xbf16>
    %c0_1 = arith.constant 0 : index
    %c0_2 = arith.constant 0 : index
    %1 = vector.load %arg5[%c0_1, %c0_2] : memref<32x32xbf16, #tpu.memory_space<vmem>>, vector<32x32xbf16>
    %cst = arith.constant dense<0.000000e+00> : vector<8x32xf32>
    %2 = tpu.matmul %0, %1, %cst {dimension_numbers = #tpu.dot_dimension_numbers<[1], [0], [0], [1], [0, 0, 1, 1], [], []>} : vector<8x32xbf16>, vector<32x32xbf16>, vector<8x32xf32> -> vector<8x32xf32>
    %c0_3 = arith.constant 0 : index
    %c0_4 = arith.constant 0 : index
    %3 = vector.load %arg6[%c0_3, %c0_4] : memref<1x32xf32, #tpu.memory_space<vmem>>, vector<1x32xf32>
    %4 = vector.broadcast %3 : vector<1x32xf32> to vector<8x32xf32>
    %5 = arith.addf %2, %4 : vector<8x32xf32>
    %c0_5 = arith.constant 0 : index
    %c0_6 = arith.constant 0 : index
    %6 = vector.load %arg2[%c0_5, %c0_6] : memref<64x32xbf16, #tpu.memory_space<vmem>>, vector<64x32xbf16>
    %c0_7 = arith.constant 0 : index
    %c0_8 = arith.constant 0 : index
    %7 = vector.load %arg7[%c0_7, %c0_8] : memref<32x32xbf16, #tpu.memory_space<vmem>>, vector<32x32xbf16>
    %cst_9 = arith.constant dense<0.000000e+00> : vector<64x32xf32>
    %8 = tpu.matmul %6, %7, %cst_9 {dimension_numbers = #tpu.dot_dimension_numbers<[1], [0], [0], [1], [0, 0, 1, 1], [], []>} : vector<64x32xbf16>, vector<32x32xbf16>, vector<64x32xf32> -> vector<64x32xf32>
    %c0_10 = arith.constant 0 : index
    %c0_11 = arith.constant 0 : index
    %9 = vector.load %arg8[%c0_10, %c0_11] : memref<1x32xf32, #tpu.memory_space<vmem>>, vector<1x32xf32>
    %10 = vector.broadcast %9 : vector<1x32xf32> to vector<64x32xf32>
    %11 = arith.addf %8, %10 : vector<64x32xf32>
    %c0_12 = arith.constant 0 : index
    %c0_13 = arith.constant 0 : index
    %12 = vector.load %arg3[%c0_12, %c0_13] : memref<64x32xbf16, #tpu.memory_space<vmem>>, vector<64x32xbf16>
    %c0_14 = arith.constant 0 : index
    %c0_15 = arith.constant 0 : index
    %13 = vector.load %arg9[%c0_14, %c0_15] : memref<32x32xbf16, #tpu.memory_space<vmem>>, vector<32x32xbf16>
    %cst_16 = arith.constant dense<0.000000e+00> : vector<64x32xf32>
    %14 = tpu.matmul %12, %13, %cst_16 {dimension_numbers = #tpu.dot_dimension_numbers<[1], [0], [0], [1], [0, 0, 1, 1], [], []>} : vector<64x32xbf16>, vector<32x32xbf16>, vector<64x32xf32> -> vector<64x32xf32>
    %c0_17 = arith.constant 0 : index
    %c0_18 = arith.constant 0 : index
    %15 = vector.load %arg10[%c0_17, %c0_18] : memref<1x32xf32, #tpu.memory_space<vmem>>, vector<1x32xf32>
    %16 = vector.broadcast %15 : vector<1x32xf32> to vector<64x32xf32>
    %17 = arith.addf %14, %16 : vector<64x32xf32>
    %18 = vector.shape_cast %11 : vector<64x32xf32> to vector<8x8x32xf32>
    %19 = vector.shape_cast %17 : vector<64x32xf32> to vector<8x8x32xf32>
    %20 = vector.shape_cast %5 : vector<8x32xf32> to vector<8x1x32xf32>
    %21 = vector.broadcast %20 : vector<8x1x32xf32> to vector<8x8x32xf32>
    %22 = arith.mulf %21, %18 : vector<8x8x32xf32>
    %23 = vector.shape_cast %22 : vector<8x8x32xf32> to vector<64x32xf32>
    %c0_19 = arith.constant 0 : index
    %c0_20 = arith.constant 0 : index
    %24 = vector.load %arg11[%c0_19, %c0_20] : memref<32x4xf32, #tpu.memory_space<vmem>>, vector<32x4xf32>
    %cst_21 = arith.constant dense<0.000000e+00> : vector<64x4xf32>
    %25 = tpu.matmul %23, %24, %cst_21 {dimension_numbers = #tpu.dot_dimension_numbers<[1], [0], [0], [1], [0, 0, 1, 1], [], []>} : vector<64x32xf32>, vector<32x4xf32>, vector<64x4xf32> -> vector<64x4xf32>
    %26 = vector.shape_cast %25 : vector<64x4xf32> to vector<8x8x4xf32>
    %c0_22 = arith.constant 0 : index
    %c0_23 = arith.constant 0 : index
    %c0_24 = arith.constant 0 : index
    %27 = vector.load %arg4[%c0_22, %c0_23, %c0_24] : memref<8x8x1xf32, #tpu.memory_space<vmem>>, vector<8x8x1xf32>
    %cst_25 = arith.constant dense<0xFF800000> : vector<8x4xf32>
    %28 = vector.multi_reduction <maximumf>, %26, %cst_25 [1] : vector<8x8x4xf32> to vector<8x4xf32>
    %29 = vector.shape_cast %28 : vector<8x4xf32> to vector<8x1x4xf32>
    %30 = vector.broadcast %29 : vector<8x1x4xf32> to vector<8x8x4xf32>
    %31 = arith.subf %26, %30 : vector<8x8x4xf32>
    %32 = math.exp %31 : vector<8x8x4xf32>
    %cst_26 = arith.constant dense<0.000000e+00> : vector<8x4xf32>
    %33 = vector.multi_reduction <add>, %32, %cst_26 [1] : vector<8x8x4xf32> to vector<8x4xf32>
    %34 = vector.shape_cast %33 : vector<8x4xf32> to vector<8x1x4xf32>
    %35 = tpu.reciprocal %34 {approx = true} : vector<8x1x4xf32> -> vector<8x1x4xf32>
    %36 = vector.broadcast %35 : vector<8x1x4xf32> to vector<8x8x4xf32>
    %37 = arith.mulf %32, %36 : vector<8x8x4xf32>
    %38 = vector.broadcast %27 : vector<8x8x1xf32> to vector<8x8x4xf32>
    %39 = arith.mulf %37, %38 : vector<8x8x4xf32>
    %40 = vector.shape_cast %39 : vector<8x8x4xf32> to vector<64x4xf32>
    %c0_27 = arith.constant 0 : index
    %c0_28 = arith.constant 0 : index
    %41 = vector.load %arg12[%c0_27, %c0_28] : memref<4x32xf32, #tpu.memory_space<vmem>>, vector<4x32xf32>
    %cst_29 = arith.constant dense<0.000000e+00> : vector<64x32xf32>
    %42 = tpu.matmul %40, %41, %cst_29 {dimension_numbers = #tpu.dot_dimension_numbers<[1], [0], [0], [1], [0, 0, 1, 1], [], []>} : vector<64x4xf32>, vector<4x32xf32>, vector<64x32xf32> -> vector<64x32xf32>
    %43 = vector.shape_cast %42 : vector<64x32xf32> to vector<8x8x32xf32>
    %44 = arith.mulf %43, %19 : vector<8x8x32xf32>
    %cst_30 = arith.constant dense<0.000000e+00> : vector<8x32xf32>
    %45 = vector.multi_reduction <add>, %44, %cst_30 [1] : vector<8x8x32xf32> to vector<8x32xf32>
    %c0_31 = arith.constant 0 : index
    %c0_32 = arith.constant 0 : index
    %46 = vector.load %arg13[%c0_31, %c0_32] : memref<8x32xf32, #tpu.memory_space<vmem>>, vector<8x32xf32>
    tpu.vector_store %arg13[%c0_31, %c0_32], %45 {strides = array<i32>} : memref<8x32xf32, #tpu.memory_space<vmem>>, vector<8x32xf32>,
    return
  }
  func.func @transform_0(%arg0: i32) -> (i32, i32) {
    %c0_i32 = arith.constant 0 : i32
    %c0_i32_0 = arith.constant 0 : i32
    return %arg0, %c0_i32 : i32, i32
  }
  func.func @transform_1(%arg0: i32) -> (i32, i32) {
    %c0_i32 = arith.constant 0 : i32
    %c0_i32_0 = arith.constant 0 : i32
    return %arg0, %c0_i32 : i32, i32
  }
  func.func @transform_2(%arg0: i32) -> (i32, i32) {
    %c0_i32 = arith.constant 0 : i32
    %c0_i32_0 = arith.constant 0 : i32
    return %arg0, %c0_i32 : i32, i32
  }
  func.func @transform_3(%arg0: i32) -> (i32, i32, i32) {
    %c0_i32 = arith.constant 0 : i32
    %c0_i32_0 = arith.constant 0 : i32
    %c0_i32_1 = arith.constant 0 : i32
    return %arg0, %c0_i32, %c0_i32_0 : i32, i32, i32
  }
  func.func @transform_4(%arg0: i32) -> (i32, i32) {
    %c0_i32 = arith.constant 0 : i32
    %c0_i32_0 = arith.constant 0 : i32
    %c0_i32_1 = arith.constant 0 : i32
    return %c0_i32, %c0_i32_0 : i32, i32
  }
  func.func @transform_5(%arg0: i32) -> (i32, i32) {
    %c0_i32 = arith.constant 0 : i32
    %c0_i32_0 = arith.constant 0 : i32
    %c0_i32_1 = arith.constant 0 : i32
    return %c0_i32, %c0_i32_0 : i32, i32
  }
  func.func @transform_6(%arg0: i32) -> (i32, i32) {
    %c0_i32 = arith.constant 0 : i32
    %c0_i32_0 = arith.constant 0 : i32
    %c0_i32_1 = arith.constant 0 : i32
    return %c0_i32, %c0_i32_0 : i32, i32
  }
  func.func @transform_7(%arg0: i32) -> (i32, i32) {
    %c0_i32 = arith.constant 0 : i32
    %c0_i32_0 = arith.constant 0 : i32
    %c0_i32_1 = arith.constant 0 : i32
    return %c0_i32, %c0_i32_0 : i32, i32
  }
  func.func @transform_8(%arg0: i32) -> (i32, i32) {
    %c0_i32 = arith.constant 0 : i32
    %c0_i32_0 = arith.constant 0 : i32
    %c0_i32_1 = arith.constant 0 : i32
    return %c0_i32, %c0_i32_0 : i32, i32
  }
  func.func @transform_9(%arg0: i32) -> (i32, i32) {
    %c0_i32 = arith.constant 0 : i32
    %c0_i32_0 = arith.constant 0 : i32
    %c0_i32_1 = arith.constant 0 : i32
    return %c0_i32, %c0_i32_0 : i32, i32
  }
  func.func @transform_10(%arg0: i32) -> (i32, i32) {
    %c0_i32 = arith.constant 0 : i32
    %c0_i32_0 = arith.constant 0 : i32
    %c0_i32_1 = arith.constant 0 : i32
    return %c0_i32, %c0_i32_0 : i32, i32
  }
  func.func @transform_11(%arg0: i32) -> (i32, i32) {
    %c0_i32 = arith.constant 0 : i32
    %c0_i32_0 = arith.constant 0 : i32
    %c0_i32_1 = arith.constant 0 : i32
    return %c0_i32, %c0_i32_0 : i32, i32
  }
  func.func @transform_12(%arg0: i32) -> (i32, i32) {
    %c0_i32 = arith.constant 0 : i32
    %c0_i32_0 = arith.constant 0 : i32
    return %arg0, %c0_i32 : i32, i32
  }
}

module attributes {stable_mosaic.version = 11 : i64} {
  func.func @_attn_kernel(%arg0: i32, %arg1: memref<8x32xbf16, #tpu.memory_space<vmem>>, %arg2: memref<64x32xbf16, #tpu.memory_space<vmem>>, %arg3: memref<64x32xbf16, #tpu.memory_space<vmem>>, %arg4: memref<8x8x1xf32, #tpu.memory_space<vmem>>, %arg5: memref<32x32xbf16, #tpu.memory_space<vmem>>, %arg6: memref<1x32xf32, #tpu.memory_space<vmem>>, %arg7: memref<32x32xbf16, #tpu.memory_space<vmem>>, %arg8: memref<1x32xf32, #tpu.memory_space<vmem>>, %arg9: memref<32x32xbf16, #tpu.memory_space<vmem>>, %arg10: memref<1x32xf32, #tpu.memory_space<vmem>>, %arg11: memref<32x4xf32, #tpu.memory_space<vmem>>, %arg12: memref<4x32xf32, #tpu.memory_space<vmem>>, %arg13: memref<8x32xf32, #tpu.memory_space<vmem>>) attributes {dimension_semantics = [#tpu.dimension_semantics<parallel>], iteration_bounds = array<i64: 2>, scalar_prefetch = 0 : i64, scratch_operands = 0 : i64, tpu.core_type = #tpu.core_type<tc>, window_params = [{transform_indices = @transform_0, window_bounds = array<i64: 8, 32>}, {transform_indices = @transform_1, window_bounds = array<i64: 64, 32>}, {transform_indices = @transform_2, window_bounds = array<i64: 64, 32>}, {transform_indices = @transform_3, window_bounds = array<i64: 8, 8, 1>}, {pipeline_mode = #tpu.pipeline_mode<synchronous>, transform_indices = @transform_4, window_bounds = array<i64: 32, 32>}, {pipeline_mode = #tpu.pipeline_mode<synchronous>, transform_indices = @transform_5, window_bounds = array<i64: 1, 32>}, {pipeline_mode = #tpu.pipeline_mode<synchronous>, transform_indices = @transform_6, window_bounds = array<i64: 32, 32>}, {pipeline_mode = #tpu.pipeline_mode<synchronous>, transform_indices = @transform_7, window_bounds = array<i64: 1, 32>}, {pipeline_mode = #tpu.pipeline_mode<synchronous>, transform_indices = @transform_8, window_bounds = array<i64: 32, 32>}, {pipeline_mode = #tpu.pipeline_mode<synchronous>, transform_indices = @transform_9, window_bounds = array<i64: 1, 32>}, {pipeline_mode = #tpu.pipeline_mode<synchronous>, transform_indices = @transform_10, window_bounds = array<i64: 32, 4>}, {pipeline_mode = #tpu.pipeline_mode<synchronous>, transform_indices = @transform_11, window_bounds = array<i64: 4, 32>}, {transform_indices = @transform_12, window_bounds = array<i64: 8, 32>}]} {
    %c0 = arith.constant 0 : index
    %c0_0 = arith.constant 0 : index
    %0 = vector.load %arg1[%c0, %c0_0] : memref<8x32xbf16, #tpu.memory_space<vmem>>, vector<8x32xbf16>
    %c0_1 = arith.constant 0 : index
    %c0_2 = arith.constant 0 : index
    %1 = vector.load %arg5[%c0_1, %c0_2] : memref<32x32xbf16, #tpu.memory_space<vmem>>, vector<32x32xbf16>
    %cst = arith.constant dense<0.000000e+00> : vector<8x32xf32>
    %2 = tpu.matmul %0, %1, %cst {dimension_numbers = #tpu.dot_dimension_numbers<[1], [0], [0], [1], [0, 0, 1, 1], [], []>} : vector<8x32xbf16>, vector<32x32xbf16>, vector<8x32xf32> -> vector<8x32xf32>
    %c0_3 = arith.constant 0 : index
    %c0_4 = arith.constant 0 : index
    %3 = vector.load %arg6[%c0_3, %c0_4] : memref<1x32xf32, #tpu.memory_space<vmem>>, vector<1x32xf32>
    %4 = vector.broadcast %3 : vector<1x32xf32> to vector<8x32xf32>
    %5 = arith.addf %2, %4 : vector<8x32xf32>
    %c0_5 = arith.constant 0 : index
    %c0_6 = arith.constant 0 : index
    %6 = vector.load %arg2[%c0_5, %c0_6] : memref<64x32xbf16, #tpu.memory_space<vmem>>, vector<64x32xbf16>
    %c0_7 = arith.constant 0 : index
    %c0_8 = arith.constant 0 : index
    %7 = vector.load %arg7[%c0_7, %c0_8] : memref<32x32xbf16, #tpu.memory_space<vmem>>, vector<32x32xbf16>
    %cst_9 = arith.constant dense<0.000000e+00> : vector<64x32xf32>
    %8 = tpu.matmul %6, %7, %cst_9 {dimension_numbers = #tpu.dot_dimension_numbers<[1], [0], [0], [1], [0, 0, 1, 1], [], []>} : vector<64x32xbf16>, vector<32x32xbf16>, vector<64x32xf32> -> vector<64x32xf32>
    %c0_10 = arith.constant 0 : index
    %c0_11 = arith.constant 0 : index
    %9 = vector.load %arg8[%c0_10, %c0_11] : memref<1x32xf32, #tpu.memory_space<vmem>>, vector<1x32xf32>
    %10 = vector.broadcast %9 : vector<1x32xf32> to vector<64x32xf32>
    %11 = arith.addf %8, %10 : vector<64x32xf32>
    %c0_12 = arith.constant 0 : index
    %c0_13 = arith.constant 0 : index
    %12 = vector.load %arg3[%c0_12, %c0_13] : memref<64x32xbf16, #tpu.memory_space<vmem>>, vector<64x32xbf16>
    %c0_14 = arith.constant 0 : index
    %c0_15 = arith.constant 0 : index
    %13 = vector.load %arg9[%c0_14, %c0_15] : memref<32x32xbf16, #tpu.memory_space<vmem>>, vector<32x32xbf16>
    %cst_16 = arith.constant dense<0.000000e+00> : vector<64x32xf32>
    %14 = tpu.matmul %12, %13, %cst_16 {dimension_numbers = #tpu.dot_dimension_numbers<[1], [0], [0], [1], [0, 0, 1, 1], [], []>} : vector<64x32xbf16>, vector<32x32xbf16>, vector<64x32xf32> -> vector<64x32xf32>
    %c0_17 = arith.constant 0 : index
    %c0_18 = arith.constant 0 : index
    %15 = vector.load %arg10[%c0_17, %c0_18] : memref<1x32xf32, #tpu.memory_space<vmem>>, vector<1x32xf32>
    %16 = vector.broadcast %15 : vector<1x32xf32> to vector<64x32xf32>
    %17 = arith.addf %14, %16 : vector<64x32xf32>
    %18 = vector.shape_cast %11 : vector<64x32xf32> to vector<8x8x32xf32>
    %19 = vector.shape_cast %17 : vector<64x32xf32> to vector<8x8x32xf32>
    %20 = vector.shape_cast %5 : vector<8x32xf32> to vector<8x1x32xf32>
    %21 = vector.broadcast %20 : vector<8x1x32xf32> to vector<8x8x32xf32>
    %22 = arith.mulf %21, %18 : vector<8x8x32xf32>
    %23 = vector.shape_cast %22 : vector<8x8x32xf32> to vector<64x32xf32>
    %c0_19 = arith.constant 0 : index
    %c0_20 = arith.constant 0 : index
    %24 = vector.load %arg11[%c0_19, %c0_20] : memref<32x4xf32, #tpu.memory_space<vmem>>, vector<32x4xf32>
    %cst_21 = arith.constant dense<0.000000e+00> : vector<64x4xf32>
    %25 = tpu.matmul %23, %24, %cst_21 {dimension_numbers = #tpu.dot_dimension_numbers<[1], [0], [0], [1], [0, 0, 1, 1], [], []>} : vector<64x32xf32>, vector<32x4xf32>, vector<64x4xf32> -> vector<64x4xf32>
    %26 = vector.shape_cast %25 : vector<64x4xf32> to vector<8x8x4xf32>
    %c0_22 = arith.constant 0 : index
    %c0_23 = arith.constant 0 : index
    %c0_24 = arith.constant 0 : index
    %27 = vector.load %arg4[%c0_22, %c0_23, %c0_24] : memref<8x8x1xf32, #tpu.memory_space<vmem>>, vector<8x8x1xf32>
    %cst_25 = arith.constant dense<0xFF800000> : vector<8x4xf32>
    %28 = vector.multi_reduction <maximumf>, %26, %cst_25 [1] : vector<8x8x4xf32> to vector<8x4xf32>
    %29 = vector.shape_cast %28 : vector<8x4xf32> to vector<8x1x4xf32>
    %30 = vector.broadcast %29 : vector<8x1x4xf32> to vector<8x8x4xf32>
    %31 = arith.subf %26, %30 : vector<8x8x4xf32>
    %32 = math.exp %31 : vector<8x8x4xf32>
    %cst_26 = arith.constant dense<0.000000e+00> : vector<8x4xf32>
    %33 = vector.multi_reduction <add>, %32, %cst_26 [1] : vector<8x8x4xf32> to vector<8x4xf32>
    %34 = vector.shape_cast %33 : vector<8x4xf32> to vector<8x1x4xf32>
    %35 = tpu.reciprocal %34 {approx = true} : vector<8x1x4xf32> -> vector<8x1x4xf32>
    %36 = vector.broadcast %35 : vector<8x1x4xf32> to vector<8x8x4xf32>
    %37 = arith.mulf %32, %36 : vector<8x8x4xf32>
    %38 = vector.broadcast %27 : vector<8x8x1xf32> to vector<8x8x4xf32>
    %39 = arith.mulf %37, %38 : vector<8x8x4xf32>
    %40 = vector.shape_cast %39 : vector<8x8x4xf32> to vector<64x4xf32>
    %c0_27 = arith.constant 0 : index
    %c0_28 = arith.constant 0 : index
    %41 = vector.load %arg12[%c0_27, %c0_28] : memref<4x32xf32, #tpu.memory_space<vmem>>, vector<4x32xf32>
    %cst_29 = arith.constant dense<0.000000e+00> : vector<64x32xf32>
    %42 = tpu.matmul %40, %41, %cst_29 {dimension_numbers = #tpu.dot_dimension_numbers<[1], [0], [0], [1], [0, 0, 1, 1], [], []>} : vector<64x4xf32>, vector<4x32xf32>, vector<64x32xf32> -> vector<64x32xf32>
    %43 = vector.shape_cast %42 : vector<64x32xf32> to vector<8x8x32xf32>
    %44 = arith.mulf %43, %19 : vector<8x8x32xf32>
    %cst_30 = arith.constant dense<0.000000e+00> : vector<8x32xf32>
    %45 = vector.multi_reduction <add>, %44, %cst_30 [1] : vector<8x8x32xf32> to vector<8x32xf32>
    %c0_31 = arith.constant 0 : index
    %c0_32 = arith.constant 0 : index
    %46 = vector.load %arg13[%c0_31, %c0_32] : memref<8x32xf32, #tpu.memory_space<vmem>>, vector<8x32xf32>
    tpu.vector_store %arg13[%c0_31, %c0_32], %45 {strides = array<i32>} : memref<8x32xf32, #tpu.memory_space<vmem>>, vector<8x32xf32>,
    return
  }
  func.func @transform_0(%arg0: i32) -> (i32, i32) {
    %c0_i32 = arith.constant 0 : i32
    %c0_i32_0 = arith.constant 0 : i32
    return %arg0, %c0_i32 : i32, i32
  }
  func.func @transform_1(%arg0: i32) -> (i32, i32) {
    %c0_i32 = arith.constant 0 : i32
    %c0_i32_0 = arith.constant 0 : i32
    return %arg0, %c0_i32 : i32, i32
  }
  func.func @transform_2(%arg0: i32) -> (i32, i32) {
    %c0_i32 = arith.constant 0 : i32
    %c0_i32_0 = arith.constant 0 : i32
    return %arg0, %c0_i32 : i32, i32
  }
  func.func @transform_3(%arg0: i32) -> (i32, i32, i32) {
    %c0_i32 = arith.constant 0 : i32
    %c0_i32_0 = arith.constant 0 : i32
    %c0_i32_1 = arith.constant 0 : i32
    return %arg0, %c0_i32, %c0_i32_0 : i32, i32, i32
  }
  func.func @transform_4(%arg0: i32) -> (i32, i32) {
    %c0_i32 = arith.constant 0 : i32
    %c0_i32_0 = arith.constant 0 : i32
    %c0_i32_1 = arith.constant 0 : i32
    return %c0_i32, %c0_i32_0 : i32, i32
  }
  func.func @transform_5(%arg0: i32) -> (i32, i32) {
    %c0_i32 = arith.constant 0 : i32
    %c0_i32_0 = arith.constant 0 : i32
    %c0_i32_1 = arith.constant 0 : i32
    return %c0_i32, %c0_i32_0 : i32, i32
  }
  func.func @transform_6(%arg0: i32) -> (i32, i32) {
    %c0_i32 = arith.constant 0 : i32
    %c0_i32_0 = arith.constant 0 : i32
    %c0_i32_1 = arith.constant 0 : i32
    return %c0_i32, %c0_i32_0 : i32, i32
  }
  func.func @transform_7(%arg0: i32) -> (i32, i32) {
    %c0_i32 = arith.constant 0 : i32
    %c0_i32_0 = arith.constant 0 : i32
    %c0_i32_1 = arith.constant 0 : i32
    return %c0_i32, %c0_i32_0 : i32, i32
  }
  func.func @transform_8(%arg0: i32) -> (i32, i32) {
    %c0_i32 = arith.constant 0 : i32
    %c0_i32_0 = arith.constant 0 : i32
    %c0_i32_1 = arith.constant 0 : i32
    return %c0_i32, %c0_i32_0 : i32, i32
  }
  func.func @transform_9(%arg0: i32) -> (i32, i32) {
    %c0_i32 = arith.constant 0 : i32
    %c0_i32_0 = arith.constant 0 : i32
    %c0_i32_1 = arith.constant 0 : i32
    return %c0_i32, %c0_i32_0 : i32, i32
  }
  func.func @transform_10(%arg0: i32) -> (i32, i32) {
    %c0_i32 = arith.constant 0 : i32
    %c0_i32_0 = arith.constant 0 : i32
    %c0_i32_1 = arith.constant 0 : i32
    return %c0_i32, %c0_i32_0 : i32, i32
  }
  func.func @transform_11(%arg0: i32) -> (i32, i32) {
    %c0_i32 = arith.constant 0 : i32
    %c0_i32_0 = arith.constant 0 : i32
    %c0_i32_1 = arith.constant 0 : i32
    return %c0_i32, %c0_i32_0 : i32, i32
  }
  func.func @transform_12(%arg0: i32) -> (i32, i32) {
    %c0_i32 = arith.constant 0 : i32
    %c0_i32_0 = arith.constant 0 : i32
    return %arg0, %c0_i32 : i32, i32
  }
}

</mosaic_0001>

<llo_original>
// kernel: tpu_custom_call.1
$region0: #{tpu_custom_call.1}
  #allocation0 [shape = 'u32[]', space=smem, size = 0x4, offset = 0x4, fixed_abs, tag = 'smem constant byte address 0x4 - core index']
  #allocation1 [shape = 'u32[144,128]{1,0:T(1,128)}', space=vmem, size = 0x12000, scoped, tag = 'internal scratch']
  %s0 = inlined_call_operand.vmem [shape: bf16[16,32], index: 0, kind: input, shape index: {}]
  %s1 = inlined_call_operand.vmem [shape: bf16[128,32], index: 1, kind: input, shape index: {}]
  %s2 = inlined_call_operand.vmem [shape: bf16[128,32], index: 2, kind: input, shape index: {}]
  %s3 = inlined_call_operand.vmem [shape: f32[16,8,1], index: 3, kind: input, shape index: {}]
  %s4 = inlined_call_operand.vmem [shape: bf16[32,32], index: 4, kind: input, shape index: {}]
  %s5 = inlined_call_operand.vmem [shape: f32[1,32], index: 5, kind: input, shape index: {}]
  %s6 = inlined_call_operand.vmem [shape: bf16[32,32], index: 6, kind: input, shape index: {}]
  %s7 = inlined_call_operand.vmem [shape: f32[1,32], index: 7, kind: input, shape index: {}]
  %s8 = inlined_call_operand.vmem [shape: bf16[32,32], index: 8, kind: input, shape index: {}]
  %s9 = inlined_call_operand.vmem [shape: f32[1,32], index: 9, kind: input, shape index: {}]
  %s10 = inlined_call_operand.vmem [shape: f32[32,4], index: 10, kind: input, shape index: {}]
  %s11 = inlined_call_operand.vmem [shape: f32[4,32], index: 11, kind: input, shape index: {}]
  %s12 = inlined_call_operand.hbm [shape: f32[16,32], index: 12, kind: output, shape index: {}]
  %s13 = sld [smem:[#allocation0]]
  $region81: #{tpu_custom_call.1} parent=0
    _
  %s15 = ssub.s32 1, %s13
  %s16 = scalar_select 0, %s15, %s13
  $region1: #{tpu_custom_call.1} parent=0
    #allocation2 [shape = 'u8[8192]{0}', space=vmem, size = 0x2000, scoped, tag = 'output window, operand 0']
    #allocation3 [shape = 's32[2]{0}', space=sflag, size = 0x8, scoped, tag = 'scoped memory for tpu_custom_call.1']
    %17 = vsyncpa [#allocation3], 0
    %s18 = scalar_lea.sflag [#allocation3], 1
    %19 = vsyncpa %s18, 0
    loop: start=0, step=1, limit=4
    $region2: #{tpu_custom_call.1} parent=1 // loop_pre_header
      _
    $region3: #{tpu_custom_call.1} parent=1 // loop_header
      %s21 = sphi 0, %s25
      %p22 = scmp.ge.s32.totalorder %s21, 4
      %s31 = sphi 0, %s33
      %s34 = sphi 0, %s31
      %s35 = sphi 0, %s34
      %s51 = sphi 0, %s35
      %s57 = sphi 0, %s59
      %s60 = sphi 0, %s57
      %s61 = sphi 0, %s60
      %s77 = sphi 0, %s61
      %s83 = sphi 0, %s85
      %s86 = sphi 0, %s83
      %s87 = sphi 0, %s86
      %s103 = sphi 0, %s87
      %s109 = sphi 0, %s111
      %s112 = sphi 0, %s109
      %s113 = sphi 0, %s112
      %s129 = sphi 0, %s113
      %s133 = sphi 0, %s133
      %s135 = sphi 0, %s133
      %s136 = sphi 0, %s135
      %s150 = sphi 0, %s136
      %s154 = sphi 0, %s154
      %s156 = sphi 0, %s154
      %s157 = sphi 0, %s156
      %s171 = sphi 0, %s157
      %s175 = sphi 0, %s175
      %s177 = sphi 0, %s175
      %s178 = sphi 0, %s177
      %s192 = sphi 0, %s178
      %s196 = sphi 0, %s196
      %s198 = sphi 0, %s196
      %s199 = sphi 0, %s198
      %s213 = sphi 0, %s199
      %s217 = sphi 0, %s217
      %s219 = sphi 0, %s217
      %s220 = sphi 0, %s219
      %s234 = sphi 0, %s220
      %s238 = sphi 0, %s238
      %s240 = sphi 0, %s238
      %s241 = sphi 0, %s240
      %s255 = sphi 0, %s241
      %s259 = sphi 0, %s259
      %s261 = sphi 0, %s259
      %s262 = sphi 0, %s261
      %s276 = sphi 0, %s262
      %s280 = sphi 0, %s280
      %s282 = sphi 0, %s280
      %s283 = sphi 0, %s282
      %s297 = sphi 0, %s283
      %s303 = sphi 0, %s305
      %s306 = sphi 0, %s303
      %s307 = sphi 0, %s306
      %s323 = sphi 0, %s307
    $region4: #{tpu_custom_call.1} parent=1 // loop_header_branch
      %24 = sbr.rel (%p22) target = $region8
    $region5: #{tpu_custom_call.1} parent=1 // loop_body
      %s26 = ssub.s32 %s21, 1
      %s27 = ssub.s32 %s21, 2
      %s28 = sadd.s32 %s21, 1
      %s29 = ssub.s32 %s21, %s28
      %p30 = scmp.eq.s32.totalorder %s29, 0
      %s32 = sadd.s32 %s31, 1
      %s33 = scalar_select %p30, %s31, %s32
      %p36 = pneg %p30
      %p37 = scmp.eq.s32.totalorder %s21, 1
      %p38 = por %p36, %p37
      %p39 = scmp.ne.s32.totalorder %s31, %s34
      %p40 = scmp.eq.s32.totalorder %s21, 0
      %p41 = por %p39, %p40
      %p42 = scmp.ne.s32.totalorder %s31, %s34
      %p43 = scmp.eq.s32.totalorder %s26, 1
      %p44 = por %p42, %p43
      %p45 = scmp.ne.s32.totalorder %s34, %s35
      %p46 = scmp.eq.s32.totalorder %s26, 0
      %p47 = por %p45, %p46
      %p48 = scmp.ne.s32.totalorder %s34, %s35
      %p49 = scmp.eq.s32.totalorder %s27, 1
      %p50 = por %p48, %p49
      %p52 = scmp.ne.s32.totalorder %s35, %s51
      %p53 = scmp.eq.s32.totalorder %s27, 0
      %p54 = por %p52, %p53
      %s55 = ssub.s32 %s21, %s28
      %p56 = scmp.eq.s32.totalorder %s55, 0
      %s58 = sadd.s32 %s57, 1
      %s59 = scalar_select %p56, %s57, %s58
      %p62 = pneg %p56
      %p63 = scmp.eq.s32.totalorder %s21, 1
      %p64 = por %p62, %p63
      %p65 = scmp.ne.s32.totalorder %s57, %s60
      %p66 = scmp.eq.s32.totalorder %s21, 0
      %p67 = por %p65, %p66
      %p68 = scmp.ne.s32.totalorder %s57, %s60
      %p69 = scmp.eq.s32.totalorder %s26, 1
      %p70 = por %p68, %p69
      %p71 = scmp.ne.s32.totalorder %s60, %s61
      %p72 = scmp.eq.s32.totalorder %s26, 0
      %p73 = por %p71, %p72
      %p74 = scmp.ne.s32.totalorder %s60, %s61
      %p75 = scmp.eq.s32.totalorder %s27, 1
      %p76 = por %p74, %p75
      %p78 = scmp.ne.s32.totalorder %s61, %s77
      %p79 = scmp.eq.s32.totalorder %s27, 0
      %p80 = por %p78, %p79
      %s81 = ssub.s32 %s21, %s28
      %p82 = scmp.eq.s32.totalorder %s81, 0
      %s84 = sadd.s32 %s83, 1
      %s85 = scalar_select %p82, %s83, %s84
      %p88 = pneg %p82
      %p89 = scmp.eq.s32.totalorder %s21, 1
      %p90 = por %p88, %p89
      %p91 = scmp.ne.s32.totalorder %s83, %s86
      %p92 = scmp.eq.s32.totalorder %s21, 0
      %p93 = por %p91, %p92
      %p94 = scmp.ne.s32.totalorder %s83, %s86
      %p95 = scmp.eq.s32.totalorder %s26, 1
      %p96 = por %p94, %p95
      %p97 = scmp.ne.s32.totalorder %s86, %s87
      %p98 = scmp.eq.s32.totalorder %s26, 0
      %p99 = por %p97, %p98
      %p100 = scmp.ne.s32.totalorder %s86, %s87
      %p101 = scmp.eq.s32.totalorder %s27, 1
      %p102 = por %p100, %p101
      %p104 = scmp.ne.s32.totalorder %s87, %s103
      %p105 = scmp.eq.s32.totalorder %s27, 0
      %p106 = por %p104, %p105
      %s107 = ssub.s32 %s21, %s28
      %p108 = scmp.eq.s32.totalorder %s107, 0
      %s110 = sadd.s32 %s109, 1
      %s111 = scalar_select %p108, %s109, %s110
      %p114 = pneg %p108
      %p115 = scmp.eq.s32.totalorder %s21, 1
      %p116 = por %p114, %p115
      %p117 = scmp.ne.s32.totalorder %s109, %s112
      %p118 = scmp.eq.s32.totalorder %s21, 0
      %p119 = por %p117, %p118
      %p120 = scmp.ne.s32.totalorder %s109, %s112
      %p121 = scmp.eq.s32.totalorder %s26, 1
      %p122 = por %p120, %p121
      %p123 = scmp.ne.s32.totalorder %s112, %s113
      %p124 = scmp.eq.s32.totalorder %s26, 0
      %p125 = por %p123, %p124
      %p126 = scmp.ne.s32.totalorder %s112, %s113
      %p127 = scmp.eq.s32.totalorder %s27, 1
      %p128 = por %p126, %p127
      %p130 = scmp.ne.s32.totalorder %s113, %s129
      %p131 = scmp.eq.s32.totalorder %s27, 0
      %p132 = por %p130, %p131
      %s134 = sadd.s32 %s133, 1
      %p137 = scmp.eq.s32.totalorder %s21, 1
      %p138 = scmp.ne.s32.totalorder %s133, %s135
      %p139 = scmp.eq.s32.totalorder %s21, 0
      %p140 = por %p138, %p139
      %p141 = scmp.ne.s32.totalorder %s133, %s135
      %p142 = scmp.eq.s32.totalorder %s26, 1
      %p143 = por %p141, %p142
      %p144 = scmp.ne.s32.totalorder %s135, %s136
      %p145 = scmp.eq.s32.totalorder %s26, 0
      %p146 = por %p144, %p145
      %p147 = scmp.ne.s32.totalorder %s135, %s136
      %p148 = scmp.eq.s32.totalorder %s27, 1
      %p149 = por %p147, %p148
      %p151 = scmp.ne.s32.totalorder %s136, %s150
      %p152 = scmp.eq.s32.totalorder %s27, 0
      %p153 = por %p151, %p152
      %s155 = sadd.s32 %s154, 1
      %p158 = scmp.eq.s32.totalorder %s21, 1
      %p159 = scmp.ne.s32.totalorder %s154, %s156
      %p160 = scmp.eq.s32.totalorder %s21, 0
      %p161 = por %p159, %p160
      %p162 = scmp.ne.s32.totalorder %s154, %s156
      %p163 = scmp.eq.s32.totalorder %s26, 1
      %p164 = por %p162, %p163
      %p165 = scmp.ne.s32.totalorder %s156, %s157
      %p166 = scmp.eq.s32.totalorder %s26, 0
      %p167 = por %p165, %p166
      %p168 = scmp.ne.s32.totalorder %s156, %s157
      %p169 = scmp.eq.s32.totalorder %s27, 1
      %p170 = por %p168, %p169
      %p172 = scmp.ne.s32.totalorder %s157, %s171
      %p173 = scmp.eq.s32.totalorder %s27, 0
      %p174 = por %p172, %p173
      %s176 = sadd.s32 %s175, 1
      %p179 = scmp.eq.s32.totalorder %s21, 1
      %p180 = scmp.ne.s32.totalorder %s175, %s177
      %p181 = scmp.eq.s32.totalorder %s21, 0
      %p182 = por %p180, %p181
      %p183 = scmp.ne.s32.totalorder %s175, %s177
      %p184 = scmp.eq.s32.totalorder %s26, 1
      %p185 = por %p183, %p184
      %p186 = scmp.ne.s32.totalorder %s177, %s178
      %p187 = scmp.eq.s32.totalorder %s26, 0
      %p188 = por %p186, %p187
      %p189 = scmp.ne.s32.totalorder %s177, %s178
      %p190 = scmp.eq.s32.totalorder %s27, 1
      %p191 = por %p189, %p190
      %p193 = scmp.ne.s32.totalorder %s178, %s192
      %p194 = scmp.eq.s32.totalorder %s27, 0
      %p195 = por %p193, %p194
      %s197 = sadd.s32 %s196, 1
      %p200 = scmp.eq.s32.totalorder %s21, 1
      %p201 = scmp.ne.s32.totalorder %s196, %s198
      %p202 = scmp.eq.s32.totalorder %s21, 0
      %p203 = por %p201, %p202
      %p204 = scmp.ne.s32.totalorder %s196, %s198
      %p205 = scmp.eq.s32.totalorder %s26, 1
      %p206 = por %p204, %p205
      %p207 = scmp.ne.s32.totalorder %s198, %s199
      %p208 = scmp.eq.s32.totalorder %s26, 0
      %p209 = por %p207, %p208
      %p210 = scmp.ne.s32.totalorder %s198, %s199
      %p211 = scmp.eq.s32.totalorder %s27, 1
      %p212 = por %p210, %p211
      %p214 = scmp.ne.s32.totalorder %s199, %s213
      %p215 = scmp.eq.s32.totalorder %s27, 0
      %p216 = por %p214, %p215
      %s218 = sadd.s32 %s217, 1
      %p221 = scmp.eq.s32.totalorder %s21, 1
      %p222 = scmp.ne.s32.totalorder %s217, %s219
      %p223 = scmp.eq.s32.totalorder %s21, 0
      %p224 = por %p222, %p223
      %p225 = scmp.ne.s32.totalorder %s217, %s219
      %p226 = scmp.eq.s32.totalorder %s26, 1
      %p227 = por %p225, %p226
      %p228 = scmp.ne.s32.totalorder %s219, %s220
      %p229 = scmp.eq.s32.totalorder %s26, 0
      %p230 = por %p228, %p229
      %p231 = scmp.ne.s32.totalorder %s219, %s220
      %p232 = scmp.eq.s32.totalorder %s27, 1
      %p233 = por %p231, %p232
      %p235 = scmp.ne.s32.totalorder %s220, %s234
      %p236 = scmp.eq.s32.totalorder %s27, 0
      %p237 = por %p235, %p236
      %s239 = sadd.s32 %s238, 1
      %p242 = scmp.eq.s32.totalorder %s21, 1
      %p243 = scmp.ne.s32.totalorder %s238, %s240
      %p244 = scmp.eq.s32.totalorder %s21, 0
      %p245 = por %p243, %p244
      %p246 = scmp.ne.s32.totalorder %s238, %s240
      %p247 = scmp.eq.s32.totalorder %s26, 1
      %p248 = por %p246, %p247
      %p249 = scmp.ne.s32.totalorder %s240, %s241
      %p250 = scmp.eq.s32.totalorder %s26, 0
      %p251 = por %p249, %p250
      %p252 = scmp.ne.s32.totalorder %s240, %s241
      %p253 = scmp.eq.s32.totalorder %s27, 1
      %p254 = por %p252, %p253
      %p256 = scmp.ne.s32.totalorder %s241, %s255
      %p257 = scmp.eq.s32.totalorder %s27, 0
      %p258 = por %p256, %p257
      %s260 = sadd.s32 %s259, 1
      %p263 = scmp.eq.s32.totalorder %s21, 1
      %p264 = scmp.ne.s32.totalorder %s259, %s261
      %p265 = scmp.eq.s32.totalorder %s21, 0
      %p266 = por %p264, %p265
      %p267 = scmp.ne.s32.totalorder %s259, %s261
      %p268 = scmp.eq.s32.totalorder %s26, 1
      %p269 = por %p267, %p268
      %p270 = scmp.ne.s32.totalorder %s261, %s262
      %p271 = scmp.eq.s32.totalorder %s26, 0
      %p272 = por %p270, %p271
      %p273 = scmp.ne.s32.totalorder %s261, %s262
      %p274 = scmp.eq.s32.totalorder %s27, 1
      %p275 = por %p273, %p274
      %p277 = scmp.ne.s32.totalorder %s262, %s276
      %p278 = scmp.eq.s32.totalorder %s27, 0
      %p279 = por %p277, %p278
      %s281 = sadd.s32 %s280, 1
      %p284 = scmp.eq.s32.totalorder %s21, 1
      %p285 = scmp.ne.s32.totalorder %s280, %s282
      %p286 = scmp.eq.s32.totalorder %s21, 0
      %p287 = por %p285, %p286
      %p288 = scmp.ne.s32.totalorder %s280, %s282
      %p289 = scmp.eq.s32.totalorder %s26, 1
      %p290 = por %p288, %p289
      %p291 = scmp.ne.s32.totalorder %s282, %s283
      %p292 = scmp.eq.s32.totalorder %s26, 0
      %p293 = por %p291, %p292
      %p294 = scmp.ne.s32.totalorder %s282, %s283
      %p295 = scmp.eq.s32.totalorder %s27, 1
      %p296 = por %p294, %p295
      %p298 = scmp.ne.s32.totalorder %s283, %s297
      %p299 = scmp.eq.s32.totalorder %s27, 0
      %p300 = por %p298, %p299
      %s301 = ssub.s32 %s21, %s28
      %p302 = scmp.eq.s32.totalorder %s301, 0
      %s304 = sadd.s32 %s303, 1
      %s305 = scalar_select %p302, %s303, %s304
      %p308 = pneg %p302
      %p309 = scmp.eq.s32.totalorder %s21, 1
      %p310 = por %p308, %p309
      %p311 = scmp.ne.s32.totalorder %s303, %s306
      %p312 = scmp.eq.s32.totalorder %s21, 0
      %p313 = por %p311, %p312
      %p314 = scmp.ne.s32.totalorder %s303, %s306
      %p315 = scmp.eq.s32.totalorder %s26, 1
      %p316 = por %p314, %p315
      %p317 = scmp.ne.s32.totalorder %s306, %s307
      %p318 = scmp.eq.s32.totalorder %s26, 0
      %p319 = por %p317, %p318
      %p320 = scmp.ne.s32.totalorder %s306, %s307
      %p321 = scmp.eq.s32.totalorder %s27, 1
      %p322 = por %p320, %p321
      %p324 = scmp.ne.s32.totalorder %s307, %s323
      %p325 = scmp.eq.s32.totalorder %s27, 0
      %p326 = por %p324, %p325
      %p327 = scmp.le.s32.totalorder 1, %s21
      %p328 = scmp.lt.s32.totalorder %s21, 3
      %p329 = pnand %p327, %p328
      %p330 = pneg %p329
      // Predicated region
      $region9: #{tpu_custom_call.1} parent=5 // pred_check
        _
      $region10: #{tpu_custom_call.1} parent=5 // pred_check_branch
        %332 = sbr.rel (%p329) target = $region12
      $region11: #{tpu_custom_call.1} parent=5 // pred_region
        %s333 = ssub.s32 %s21, 1
        // Predicated region
        $region13: #{tpu_custom_call.1} parent=11 // pred_check
          %p334 = pneg %p146
        $region14: #{tpu_custom_call.1} parent=11 // pred_check_branch
          %336 = sbr.rel (%p334) target = $region16
        $region15: #{tpu_custom_call.1} parent=11 // pred_region
          _
        $region16: #{tpu_custom_call.1} parent=11 // pred_fallthru
          _
        // Predicated region
        $region17: #{tpu_custom_call.1} parent=11 // pred_check
          %p337 = pneg %p167
        $region18: #{tpu_custom_call.1} parent=11 // pred_check_branch
          %339 = sbr.rel (%p337) target = $region20
        $region19: #{tpu_custom_call.1} parent=11 // pred_region
          _
        $region20: #{tpu_custom_call.1} parent=11 // pred_fallthru
          _
        // Predicated region
        $region21: #{tpu_custom_call.1} parent=11 // pred_check
          %p340 = pneg %p188
        $region22: #{tpu_custom_call.1} parent=11 // pred_check_branch
          %342 = sbr.rel (%p340) target = $region24
        $region23: #{tpu_custom_call.1} parent=11 // pred_region
          _
        $region24: #{tpu_custom_call.1} parent=11 // pred_fallthru
          _
        // Predicated region
        $region25: #{tpu_custom_call.1} parent=11 // pred_check
          %p343 = pneg %p209
        $region26: #{tpu_custom_call.1} parent=11 // pred_check_branch
          %345 = sbr.rel (%p343) target = $region28
        $region27: #{tpu_custom_call.1} parent=11 // pred_region
          _
        $region28: #{tpu_custom_call.1} parent=11 // pred_fallthru
          _
        // Predicated region
        $region29: #{tpu_custom_call.1} parent=11 // pred_check
          %p346 = pneg %p230
        $region30: #{tpu_custom_call.1} parent=11 // pred_check_branch
          %348 = sbr.rel (%p346) target = $region32
        $region31: #{tpu_custom_call.1} parent=11 // pred_region
          _
        $region32: #{tpu_custom_call.1} parent=11 // pred_fallthru
          _
        // Predicated region
        $region33: #{tpu_custom_call.1} parent=11 // pred_check
          %p349 = pneg %p251
        $region34: #{tpu_custom_call.1} parent=11 // pred_check_branch
          %351 = sbr.rel (%p349) target = $region36
        $region35: #{tpu_custom_call.1} parent=11 // pred_region
          _
        $region36: #{tpu_custom_call.1} parent=11 // pred_fallthru
          _
        // Predicated region
        $region37: #{tpu_custom_call.1} parent=11 // pred_check
          %p352 = pneg %p272
        $region38: #{tpu_custom_call.1} parent=11 // pred_check_branch
          %354 = sbr.rel (%p352) target = $region40
        $region39: #{tpu_custom_call.1} parent=11 // pred_region
          _
        $region40: #{tpu_custom_call.1} parent=11 // pred_fallthru
          _
        // Predicated region
        $region41: #{tpu_custom_call.1} parent=11 // pred_check
          %p355 = pneg %p293
        $region42: #{tpu_custom_call.1} parent=11 // pred_check_branch
          %357 = sbr.rel (%p355) target = $region44
        $region43: #{tpu_custom_call.1} parent=11 // pred_region
          _
        $region44: #{tpu_custom_call.1} parent=11 // pred_fallthru
          _
      $region12: #{tpu_custom_call.1} parent=5 // pred_fallthru
        _
      %p358 = scmp.lt.s32.totalorder %s21, 2
      // Predicated region
      $region45: #{tpu_custom_call.1} parent=5 // pred_check
        %p359 = pneg %p358
      $region46: #{tpu_custom_call.1} parent=5 // pred_check_branch
        %361 = sbr.rel (%p359) target = $region48
      $region47: #{tpu_custom_call.1} parent=5 // pred_region
        // Predicated region
        $region49: #{tpu_custom_call.1} parent=47 // pred_check
          %p362 = pneg %p41
        $region50: #{tpu_custom_call.1} parent=47 // pred_check_branch
          %364 = sbr.rel (%p362) target = $region52
        $region51: #{tpu_custom_call.1} parent=47 // pred_region
          %p365 = scmp.lt.s32.totalorder %s21, 1
          %s366 = scalar_select %p365, %s21, 1
          %s367 = smul.addr %s366, 4
          %s368 = scalar_lea.vmem %s0, %s367
        $region52: #{tpu_custom_call.1} parent=47 // pred_fallthru
          _
        // Predicated region
        $region53: #{tpu_custom_call.1} parent=47 // pred_check
          %p369 = pneg %p67
        $region54: #{tpu_custom_call.1} parent=47 // pred_check_branch
          %371 = sbr.rel (%p369) target = $region56
        $region55: #{tpu_custom_call.1} parent=47 // pred_region
          %s372 = smul.u32 8, %s21
          %p373 = scmp.lt.s32.totalorder %s372, 15
          %s374 = scalar_select %p373, %s372, 15
          %s375 = smul.addr %s374, 4
          %s376 = scalar_lea.vmem %s1, %s375
          %s377 = smul.u32 8, %s21
        $region56: #{tpu_custom_call.1} parent=47 // pred_fallthru
          _
        // Predicated region
        $region57: #{tpu_custom_call.1} parent=47 // pred_check
          %p378 = pneg %p93
        $region58: #{tpu_custom_call.1} parent=47 // pred_check_branch
          %380 = sbr.rel (%p378) target = $region60
        $region59: #{tpu_custom_call.1} parent=47 // pred_region
          %s381 = smul.u32 8, %s21
          %p382 = scmp.lt.s32.totalorder %s381, 15
          %s383 = scalar_select %p382, %s381, 15
          %s384 = smul.addr %s383, 4
          %s385 = scalar_lea.vmem %s2, %s384
          %s386 = smul.u32 8, %s21
        $region60: #{tpu_custom_call.1} parent=47 // pred_fallthru
          _
        // Predicated region
        $region61: #{tpu_custom_call.1} parent=47 // pred_check
          %p387 = pneg %p119
        $region62: #{tpu_custom_call.1} parent=47 // pred_check_branch
          %389 = sbr.rel (%p387) target = $region64
        $region63: #{tpu_custom_call.1} parent=47 // pred_region
          %s390 = smul.u32 8, %s21
          %p391 = scmp.lt.s32.totalorder %s390, 15
          %s392 = scalar_select %p391, %s390, 15
          %s393 = smul.addr %s392, 8
          %s394 = scalar_lea.vmem %s3, %s393
          %s395 = smul.u32 8, %s21
        $region64: #{tpu_custom_call.1} parent=47 // pred_fallthru
          _
      $region48: #{tpu_custom_call.1} parent=5 // pred_fallthru
        _
      %p396 = scmp.le.s32.totalorder 1, %s21
      %p397 = scmp.lt.s32.totalorder %s21, 3
      %p398 = pnand %p396, %p397
      %p399 = pneg %p398
      // Predicated region
      $region65: #{tpu_custom_call.1} parent=5 // pred_check
        _
      $region66: #{tpu_custom_call.1} parent=5 // pred_check_branch
        %401 = sbr.rel (%p398) target = $region68
      $region67: #{tpu_custom_call.1} parent=5 // pred_region
        %s402 = ssub.s32 %s21, 1
        %p403 = scmp.lt.s32.totalorder %s26, 1
        %s404 = scalar_select %p403, %s26, 1
        %s405 = smul.addr %s404, 4
        %s406 = scalar_lea.vmem %s0, %s405
        %p407 = pneg %p47
        %p408 = pneg %p44
        %s409 = smul.u32 8, %s26
        %p410 = scmp.lt.s32.totalorder %s409, 15
        %s411 = scalar_select %p410, %s409, 15
        %s412 = smul.addr %s411, 4
        %s413 = scalar_lea.vmem %s1, %s412
        %p414 = pneg %p73
        %p415 = pneg %p70
        %s416 = smul.u32 8, %s26
        %p417 = scmp.lt.s32.totalorder %s416, 15
        %s418 = scalar_select %p417, %s416, 15
        %s419 = smul.addr %s418, 4
        %s420 = scalar_lea.vmem %s2, %s419
        %p421 = pneg %p99
        %p422 = pneg %p96
        %s423 = smul.u32 8, %s26
        %p424 = scmp.lt.s32.totalorder %s423, 15
        %s425 = scalar_select %p424, %s423, 15
        %s426 = smul.addr %s425, 8
        %s427 = scalar_lea.vmem %s3, %s426
        %p428 = pneg %p125
        %p429 = pneg %p122
        %p430 = pneg %p146
        %p431 = pneg %p143
        %p432 = pneg %p167
        %p433 = pneg %p164
        %p434 = pneg %p188
        %p435 = pneg %p185
        %p436 = pneg %p209
        %p437 = pneg %p206
        %p438 = pneg %p230
        %p439 = pneg %p227
        %p440 = pneg %p251
        %p441 = pneg %p248
        %p442 = pneg %p272
        %p443 = pneg %p269
        %p444 = pneg %p293
        %p445 = pneg %p290
        %p446 = pneg %p319
        %p447 = pneg %p316
        %s448 = sand.u32 %s306, 1
        %s449 = scalar_lea.sflag [#allocation3], %s448
        %s450 = sand.u32 %s306, 1
        %s451 = smul.addr %s450, 8
        %s452 = scalar_lea.vmem [#allocation2], %s451
        %p453 = scmp.lt.s32.totalorder %s26, 1
        %s454 = scalar_select %p453, %s26, 1
        %s455 = smul.addr %s454, 4
        %s456 = scalar_lea.vmem %s0, %s455
        %s457 = smul.u32 8, %s26
        %p458 = scmp.lt.s32.totalorder %s457, 15
        %s459 = scalar_select %p458, %s457, 15
        %s460 = smul.addr %s459, 4
        %s461 = scalar_lea.vmem %s1, %s460
        %s462 = smul.u32 8, %s26
        %s463 = smul.u32 8, %s26
        %p464 = scmp.lt.s32.totalorder %s463, 15
        %s465 = scalar_select %p464, %s463, 15
        %s466 = smul.addr %s465, 4
        %s467 = scalar_lea.vmem %s2, %s466
        %s468 = smul.u32 8, %s26
        %s469 = smul.u32 8, %s26
        %p470 = scmp.lt.s32.totalorder %s469, 15
        %s471 = scalar_select %p470, %s469, 15
        %s472 = smul.addr %s471, 8
        %s473 = scalar_lea.vmem %s3, %s472
        %s474 = smul.u32 8, %s26
        %v476 = vld [vmem:[%s456] sm:$0xf]
        %v477 = vld [vmem:[%s4] sm:$0xf]
        %v478 = vld [vmem:[%s4 + $0x4] sm:$0xf]
        %v479 = vld [vmem:[%s4 + $0x8] sm:$0xf]
        %v480 = vld [vmem:[%s4 + $0xc] sm:$0xf]
        %v481 = vld [vmem:[%s5] sm:$0x1]
        %v483 = vlaneseq
        %v484 = vshrl.u32 %v483, 7
        %v485 = vsub.s32 0, %v484
        %v486 = vrot.slane %v481, %v485
        %v492 = vunpack.c.l.b16 %v477
        %v493 = vunpack.c.l.b16 %v478
        %v494 = vunpack.c.l.b16 %v479
        %v495 = vunpack.c.l.b16 %v480
        %v496 = vpack.c.b16 %v493, %v492
        %v497 = vpack.c.b16 %v495, %v494
        %vm500 = vcmask 261120
        %v502 = vsel %vm500, %v476, 0
        %504 = vmatprep.subr.bf16.mxu0 0
        %505 = vmatpush1.bf16.msra.mxu0 %v496
        %506 = vmatprep.subr.bf16.mxu0 0
        %507 = vmatpush1.bf16.msra.mxu0 %v497
        %508 = vmatprep.subr.bf16.mxu0 0
        %509 = vmatpush1.bf16.msra.mxu0 0
        %510 = vmatprep.subr.bf16.mxu0 0
        %511 = vmatpush1.bf16.msra.mxu0 0
        %512 = vmatprep.subr.bf16.mxu0 0
        %513 = vmatpush1.bf16.msra.mxu0 0
        %514 = vmatprep.subr.bf16.mxu0 0
        %515 = vmatpush1.bf16.msra.mxu0 0
        %516 = vmatprep.subr.bf16.mxu0 0
        %517 = vmatpush1.bf16.msra.mxu0 0
        %518 = vmatprep.subr.bf16.mxu0 0
        %519 = vmatpush1.bf16.msra.mxu0 0
        %520 = vmatprep.subr.bf16.mxu0 0
        %521 = vmatpush1.bf16.msra.mxu0 0
        %522 = vmatprep.subr.bf16.mxu0 0
        %523 = vmatpush1.bf16.msra.mxu0 0
        %524 = vmatprep.subr.bf16.mxu0 0
        %525 = vmatpush1.bf16.msra.mxu0 0
        %526 = vmatprep.subr.bf16.mxu0 0
        %527 = vmatpush1.bf16.msra.mxu0 0
        %528 = vmatprep.subr.bf16.mxu0 0
        %529 = vmatpush1.bf16.msra.mxu0 0
        %530 = vmatprep.subr.bf16.mxu0 0
        %531 = vmatpush1.bf16.msra.mxu0 0
        %532 = vmatprep.subr.bf16.mxu0 0
        %533 = vmatpush1.bf16.msra.mxu0 0
        %534 = vmatprep.subr.bf16.mxu0 0
        %535 = vmatpush1.bf16.msra.mxu0 0
        %536 = vmatprep.mubr.bf16.mxu0 0
        %537 = vmatmul.mubr.bf16.gmra.mrb[0].mxu0 %v502
        %v538 = vpop.f32.mrb[0].mxu0
        %v539 = vadd.f32 %v486, %v538
        %v540 = vpop.f32.mrb[0].mxu0
        %v541 = vpop.f32.mrb[0].mxu0
        %v542 = vpop.f32.mrb[0].mxu0
        %543 = vdwg.mxu0
        %v544 = vld [vmem:[%s461] sm:$0xf]
        %v545 = vld [vmem:[%s461 + $0x4] sm:$0xf]
        %v546 = vld [vmem:[%s461 + $0x8] sm:$0xf]
        %v547 = vld [vmem:[%s461 + $0xc] sm:$0xf]
        %v548 = vld [vmem:[%s461 + $0x10] sm:$0xf]
        %v549 = vld [vmem:[%s461 + $0x14] sm:$0xf]
        %v550 = vld [vmem:[%s461 + $0x18] sm:$0xf]
        %v551 = vld [vmem:[%s461 + $0x1c] sm:$0xf]
        %v552 = vld [vmem:[%s6] sm:$0xf]
        %v553 = vld [vmem:[%s6 + $0x4] sm:$0xf]
        %v554 = vld [vmem:[%s6 + $0x8] sm:$0xf]
        %v555 = vld [vmem:[%s6 + $0xc] sm:$0xf]
        %v556 = vld [vmem:[%s7] sm:$0x1]
        %v558 = vlaneseq
        %v559 = vshrl.u32 %v558, 7
        %v560 = vsub.s32 0, %v559
        %v561 = vrot.slane %v556, %v560
        %v571 = vunpack.c.l.b16 %v544
        %v572 = vunpack.c.l.b16 %v545
        %v573 = vunpack.c.l.b16 %v546
        %v574 = vunpack.c.l.b16 %v547
        %v575 = vunpack.c.l.b16 %v548
        %v576 = vunpack.c.l.b16 %v549
        %v577 = vunpack.c.l.b16 %v550
        %v578 = vunpack.c.l.b16 %v551
        %v579 = vpack.c.b16 %v572, %v571
        %v580 = vpack.c.b16 %v574, %v573
        %v581 = vpack.c.b16 %v576, %v575
        %v582 = vpack.c.b16 %v578, %v577
        %v587 = vunpack.c.l.b16 %v552
        %v588 = vunpack.c.l.b16 %v553
        %v589 = vunpack.c.l.b16 %v554
        %v590 = vunpack.c.l.b16 %v555
        %v591 = vpack.c.b16 %v588, %v587
        %v592 = vpack.c.b16 %v590, %v589
        %v596 = vsel %vm500, %v579, 0
        %v599 = vsel %vm500, %v580, 0
        %v602 = vsel %vm500, %v581, 0
        %v605 = vsel %vm500, %v582, 0
        %607 = vmatprep.subr.bf16.mxu0 0
        %608 = vmatpush1.bf16.msra.mxu0 %v591
        %609 = vmatprep.subr.bf16.mxu0 0
        %610 = vmatpush1.bf16.msra.mxu0 %v592
        %611 = vmatprep.subr.bf16.mxu0 0
        %612 = vmatpush1.bf16.msra.mxu0 0
        %613 = vmatprep.subr.bf16.mxu0 0
        %614 = vmatpush1.bf16.msra.mxu0 0
        %615 = vmatprep.subr.bf16.mxu0 0
        %616 = vmatpush1.bf16.msra.mxu0 0
        %617 = vmatprep.subr.bf16.mxu0 0
        %618 = vmatpush1.bf16.msra.mxu0 0
        %619 = vmatprep.subr.bf16.mxu0 0
        %620 = vmatpush1.bf16.msra.mxu0 0
        %621 = vmatprep.subr.bf16.mxu0 0
        %622 = vmatpush1.bf16.msra.mxu0 0
        %623 = vmatprep.subr.bf16.mxu0 0
        %624 = vmatpush1.bf16.msra.mxu0 0
        %625 = vmatprep.subr.bf16.mxu0 0
        %626 = vmatpush1.bf16.msra.mxu0 0
        %627 = vmatprep.subr.bf16.mxu0 0
        %628 = vmatpush1.bf16.msra.mxu0 0
        %629 = vmatprep.subr.bf16.mxu0 0
        %630 = vmatpush1.bf16.msra.mxu0 0
        %631 = vmatprep.subr.bf16.mxu0 0
        %632 = vmatpush1.bf16.msra.mxu0 0
        %633 = vmatprep.subr.bf16.mxu0 0
        %634 = vmatpush1.bf16.msra.mxu0 0
        %635 = vmatprep.subr.bf16.mxu0 0
        %636 = vmatpush1.bf16.msra.mxu0 0
        %637 = vmatprep.subr.bf16.mxu0 0
        %638 = vmatpush1.bf16.msra.mxu0 0
        %639 = vmatprep.mubr.bf16.mxu0 0
        %640 = vmatmul.mubr.bf16.gmra.mrb[0].mxu0 %v596
        %v641 = vpop.f32.mrb[0].mxu0
        %v642 = vadd.f32 %v561, %v641
        %v643 = vpop.f32.mrb[0].mxu0
        %v644 = vpop.f32.mrb[0].mxu0
        %v645 = vadd.f32 %v561, %v644
        %v646 = vpop.f32.mrb[0].mxu0
        %647 = vmatprep.mubr.bf16.mxu0 0
        %648 = vmatmul.mubr.bf16.gmra.mrb[0].mxu0 %v599
        %v649 = vpop.f32.mrb[0].mxu0
        %v650 = vadd.f32 %v561, %v649
        %v651 = vpop.f32.mrb[0].mxu0
        %v652 = vpop.f32.mrb[0].mxu0
        %v653 = vadd.f32 %v561, %v652
        %v654 = vpop.f32.mrb[0].mxu0
        %655 = vmatprep.mubr.bf16.mxu0 0
        %656 = vmatmul.mubr.bf16.gmra.mrb[0].mxu0 %v602
        %v657 = vpop.f32.mrb[0].mxu0
        %v658 = vadd.f32 %v561, %v657
        %v659 = vpop.f32.mrb[0].mxu0
        %v660 = vpop.f32.mrb[0].mxu0
        %v661 = vadd.f32 %v561, %v660
        %v662 = vpop.f32.mrb[0].mxu0
        %663 = vmatprep.mubr.bf16.mxu0 0
        %664 = vmatmul.mubr.bf16.gmra.mrb[0].mxu0 %v605
        %v665 = vpop.f32.mrb[0].mxu0
        %v666 = vadd.f32 %v561, %v665
        %v667 = vpop.f32.mrb[0].mxu0
        %v668 = vpop.f32.mrb[0].mxu0
        %v669 = vadd.f32 %v561, %v668
        %v670 = vpop.f32.mrb[0].mxu0
        %671 = vdwg.mxu0
        %v672 = vld [vmem:[%s467] sm:$0xf]
        %v673 = vld [vmem:[%s467 + $0x4] sm:$0xf]
        %v674 = vld [vmem:[%s467 + $0x8] sm:$0xf]
        %v675 = vld [vmem:[%s467 + $0xc] sm:$0xf]
        %v676 = vld [vmem:[%s467 + $0x10] sm:$0xf]
        %v677 = vld [vmem:[%s467 + $0x14] sm:$0xf]
        %v678 = vld [vmem:[%s467 + $0x18] sm:$0xf]
        %v679 = vld [vmem:[%s467 + $0x1c] sm:$0xf]
        %v680 = vld [vmem:[%s8] sm:$0xf]
        %v681 = vld [vmem:[%s8 + $0x4] sm:$0xf]
        %v682 = vld [vmem:[%s8 + $0x8] sm:$0xf]
        %v683 = vld [vmem:[%s8 + $0xc] sm:$0xf]
        %v684 = vld [vmem:[%s9] sm:$0x1]
        %v686 = vlaneseq
        %v687 = vshrl.u32 %v686, 7
        %v688 = vsub.s32 0, %v687
        %v689 = vrot.slane %v684, %v688
        %v699 = vunpack.c.l.b16 %v672
        %v700 = vunpack.c.l.b16 %v673
        %v701 = vunpack.c.l.b16 %v674
        %v702 = vunpack.c.l.b16 %v675
        %v703 = vunpack.c.l.b16 %v676
        %v704 = vunpack.c.l.b16 %v677
        %v705 = vunpack.c.l.b16 %v678
        %v706 = vunpack.c.l.b16 %v679
        %v707 = vpack.c.b16 %v700, %v699
        %v708 = vpack.c.b16 %v702, %v701
        %v709 = vpack.c.b16 %v704, %v703
        %v710 = vpack.c.b16 %v706, %v705
        %v715 = vunpack.c.l.b16 %v680
        %v716 = vunpack.c.l.b16 %v681
        %v717 = vunpack.c.l.b16 %v682
        %v718 = vunpack.c.l.b16 %v683
        %v719 = vpack.c.b16 %v716, %v715
        %v720 = vpack.c.b16 %v718, %v717
        %v724 = vsel %vm500, %v707, 0
        %v727 = vsel %vm500, %v708, 0
        %v730 = vsel %vm500, %v709, 0
        %v733 = vsel %vm500, %v710, 0
        %735 = vmatprep.subr.bf16.mxu0 0
        %736 = vmatpush1.bf16.msra.mxu0 %v719
        %737 = vmatprep.subr.bf16.mxu0 0
        %738 = vmatpush1.bf16.msra.mxu0 %v720
        %739 = vmatprep.subr.bf16.mxu0 0
        %740 = vmatpush1.bf16.msra.mxu0 0
        %741 = vmatprep.subr.bf16.mxu0 0
        %742 = vmatpush1.bf16.msra.mxu0 0
        %743 = vmatprep.subr.bf16.mxu0 0
        %744 = vmatpush1.bf16.msra.mxu0 0
        %745 = vmatprep.subr.bf16.mxu0 0
        %746 = vmatpush1.bf16.msra.mxu0 0
        %747 = vmatprep.subr.bf16.mxu0 0
        %748 = vmatpush1.bf16.msra.mxu0 0
        %749 = vmatprep.subr.bf16.mxu0 0
        %750 = vmatpush1.bf16.msra.mxu0 0
        %751 = vmatprep.subr.bf16.mxu0 0
        %752 = vmatpush1.bf16.msra.mxu0 0
        %753 = vmatprep.subr.bf16.mxu0 0
        %754 = vmatpush1.bf16.msra.mxu0 0
        %755 = vmatprep.subr.bf16.mxu0 0
        %756 = vmatpush1.bf16.msra.mxu0 0
        %757 = vmatprep.subr.bf16.mxu0 0
        %758 = vmatpush1.bf16.msra.mxu0 0
        %759 = vmatprep.subr.bf16.mxu0 0
        %760 = vmatpush1.bf16.msra.mxu0 0
        %761 = vmatprep.subr.bf16.mxu0 0
        %762 = vmatpush1.bf16.msra.mxu0 0
        %763 = vmatprep.subr.bf16.mxu0 0
        %764 = vmatpush1.bf16.msra.mxu0 0
        %765 = vmatprep.subr.bf16.mxu0 0
        %766 = vmatpush1.bf16.msra.mxu0 0
        %767 = vmatprep.mubr.bf16.mxu0 0
        %768 = vmatmul.mubr.bf16.gmra.mrb[0].mxu0 %v724
        %v769 = vpop.f32.mrb[0].mxu0
        %v770 = vadd.f32 %v689, %v769
        %v771 = vpop.f32.mrb[0].mxu0
        %v772 = vpop.f32.mrb[0].mxu0
        %v773 = vadd.f32 %v689, %v772
        %v774 = vpop.f32.mrb[0].mxu0
        %775 = vmatprep.mubr.bf16.mxu0 0
        %776 = vmatmul.mubr.bf16.gmra.mrb[0].mxu0 %v727
        %v777 = vpop.f32.mrb[0].mxu0
        %v778 = vadd.f32 %v689, %v777
        %v779 = vpop.f32.mrb[0].mxu0
        %v780 = vpop.f32.mrb[0].mxu0
        %v781 = vadd.f32 %v689, %v780
        %v782 = vpop.f32.mrb[0].mxu0
        %783 = vmatprep.mubr.bf16.mxu0 0
        %784 = vmatmul.mubr.bf16.gmra.mrb[0].mxu0 %v730
        %v785 = vpop.f32.mrb[0].mxu0
        %v786 = vadd.f32 %v689, %v785
        %v787 = vpop.f32.mrb[0].mxu0
        %v788 = vpop.f32.mrb[0].mxu0
        %v789 = vadd.f32 %v689, %v788
        %v790 = vpop.f32.mrb[0].mxu0
        %791 = vmatprep.mubr.bf16.mxu0 0
        %792 = vmatmul.mubr.bf16.gmra.mrb[0].mxu0 %v733
        %v793 = vpop.f32.mrb[0].mxu0
        %v794 = vadd.f32 %v689, %v793
        %v795 = vpop.f32.mrb[0].mxu0
        %v796 = vpop.f32.mrb[0].mxu0
        %v797 = vadd.f32 %v689, %v796
        %v798 = vpop.f32.mrb[0].mxu0
        %799 = vdwg.mxu0
        %v801 = vcombine.high %v539, %v539
        %v803 = vunpack.c.l.s4 1966171168
        %v804 = vunpack.c.0.s8 %v803
        %v805 = vlaneseq
        %v806 = vshrl.u32 %v805, 7
        %v807 = vsub.s32 %v804, %v806
        %v808 = vrot.slane %v539, %v807
        %v810 = vunpack.c.l.s4 1966171168
        %v811 = vunpack.c.0.s8 %v810
        %v812 = vlaneseq
        %v813 = vshrl.u32 %v812, 7
        %v814 = vsub.s32 %v811, %v813
        %v815 = vrot.slane %v801, %v814
        %v816 = vcombine.high %v808, %v808
        %v817 = vcombine.high %v815, %v815
        %v819 = vunpack.c.l.s4 1966171168
        %v820 = vunpack.c.0.s8 %v819
        %v821 = vlaneseq
        %v822 = vshrl.u32 %v821, 7
        %v823 = vsub.s32 %v820, %v822
        %v824 = vrot.slane %v808, %v823
        %v826 = vunpack.c.l.s4 1966171168
        %v827 = vunpack.c.0.s8 %v826
        %v828 = vlaneseq
        %v829 = vshrl.u32 %v828, 7
        %v830 = vsub.s32 %v827, %v829
        %v831 = vrot.slane %v815, %v830
        %v833 = vunpack.c.l.s4 1966171168
        %v834 = vunpack.c.0.s8 %v833
        %v835 = vlaneseq
        %v836 = vshrl.u32 %v835, 7
        %v837 = vsub.s32 %v834, %v836
        %v838 = vrot.slane %v816, %v837
        %v840 = vunpack.c.l.s4 1966171168
        %v841 = vunpack.c.0.s8 %v840
        %v842 = vlaneseq
        %v843 = vshrl.u32 %v842, 7
        %v844 = vsub.s32 %v841, %v843
        %v845 = vrot.slane %v817, %v844
        %v846 = vcombine.high %v824, %v824
        %v847 = vcombine.high %v831, %v831
        %v848 = vcombine.high %v838, %v838
        %v849 = vcombine.high %v845, %v845
        %v850 = vlaneseq
        %v851 = vshrl.u32 %v850, 7
        %v852 = vsub.s32 0, %v851
        %v853 = vrot.slane %v824, %v852
        %v854 = vlaneseq
        %v855 = vshrl.u32 %v854, 7
        %v856 = vsub.s32 0, %v855
        %v857 = vrot.slane %v838, %v856
        %v858 = vlaneseq
        %v859 = vshrl.u32 %v858, 7
        %v860 = vsub.s32 0, %v859
        %v861 = vrot.slane %v846, %v860
        %v862 = vlaneseq
        %v863 = vshrl.u32 %v862, 7
        %v864 = vsub.s32 0, %v863
        %v865 = vrot.slane %v848, %v864
        %v866 = vlaneseq
        %v867 = vshrl.u32 %v866, 7
        %v868 = vsub.s32 0, %v867
        %v869 = vrot.slane %v831, %v868
        %v870 = vlaneseq
        %v871 = vshrl.u32 %v870, 7
        %v872 = vsub.s32 0, %v871
        %v873 = vrot.slane %v845, %v872
        %v874 = vlaneseq
        %v875 = vshrl.u32 %v874, 7
        %v876 = vsub.s32 0, %v875
        %v877 = vrot.slane %v847, %v876
        %v878 = vlaneseq
        %v879 = vshrl.u32 %v878, 7
        %v880 = vsub.s32 0, %v879
        %v881 = vrot.slane %v849, %v880
        %v890 = vmul.f32 %v853, %v642
        %v891 = vmul.f32 %v857, %v645
        %v892 = vmul.f32 %v861, %v650
        %v893 = vmul.f32 %v865, %v653
        %v894 = vmul.f32 %v869, %v658
        %v895 = vmul.f32 %v873, %v661
        %v896 = vmul.f32 %v877, %v666
        %v897 = vmul.f32 %v881, %v669
        %v898 = vld [vmem:[%s10] sm:$0xff]
        %v899 = vld [vmem:[%s10 + $0x8] sm:$0xff]
        %v900 = vld [vmem:[%s10 + $0x10] sm:$0xff]
        %v901 = vld [vmem:[%s10 + $0x18] sm:$0xff]
        %v903 = vsel %vm500, %v890, 0
        %v906 = vsel %vm500, %v891, 0
        %v909 = vsel %vm500, %v892, 0
        %v912 = vsel %vm500, %v893, 0
        %v915 = vsel %vm500, %v894, 0
        %v918 = vsel %vm500, %v895, 0
        %v921 = vsel %vm500, %v896, 0
        %v924 = vsel %vm500, %v897, 0
        %926 = vmatprep.subr.mxu0 0.0
        %927 = vmatpush1.msra.mxu0 %v898
        %928 = vmatprep.subr.mxu0 0.0
        %929 = vmatpush1.msra.mxu0 %v899
        %930 = vmatprep.subr.mxu0 0.0
        %931 = vmatpush1.msra.mxu0 %v900
        %932 = vmatprep.subr.mxu0 0.0
        %933 = vmatpush1.msra.mxu0 %v901
        %934 = vmatprep.subr.mxu0 0.0
        %935 = vmatpush1.msra.mxu0 0.0
        %936 = vmatprep.subr.mxu0 0.0
        %937 = vmatpush1.msra.mxu0 0.0
        %938 = vmatprep.subr.mxu0 0.0
        %939 = vmatpush1.msra.mxu0 0.0
        %940 = vmatprep.subr.mxu0 0.0
        %941 = vmatpush1.msra.mxu0 0.0
        %942 = vmatprep.subr.mxu0 0.0
        %943 = vmatpush1.msra.mxu0 0.0
        %944 = vmatprep.subr.mxu0 0.0
        %945 = vmatpush1.msra.mxu0 0.0
        %946 = vmatprep.subr.mxu0 0.0
        %947 = vmatpush1.msra.mxu0 0.0
        %948 = vmatprep.subr.mxu0 0.0
        %949 = vmatpush1.msra.mxu0 0.0
        %950 = vmatprep.subr.mxu0 0.0
        %951 = vmatpush1.msra.mxu0 0.0
        %952 = vmatprep.subr.mxu0 0.0
        %953 = vmatpush1.msra.mxu0 0.0
        %954 = vmatprep.subr.mxu0 0.0
        %955 = vmatpush1.msra.mxu0 0.0
        %956 = vmatprep.subr.mxu0 0.0
        %957 = vmatpush1.msra.mxu0 0.0
        %958 = vmatprep.subr.mxu0 0.0
        %959 = vmatpush1.msra.mxu0 0.0
        %960 = vmatprep.subr.mxu0 0.0
        %961 = vmatpush1.msra.mxu0 0.0
        %962 = vmatprep.subr.mxu0 0.0
        %963 = vmatpush1.msra.mxu0 0.0
        %964 = vmatprep.subr.mxu0 0.0
        %965 = vmatpush1.msra.mxu0 0.0
        %966 = vmatprep.subr.mxu0 0.0
        %967 = vmatpush1.msra.mxu0 0.0
        %968 = vmatprep.subr.mxu0 0.0
        %969 = vmatpush1.msra.mxu0 0.0
        %970 = vmatprep.subr.mxu0 0.0
        %971 = vmatpush1.msra.mxu0 0.0
        %972 = vmatprep.subr.mxu0 0.0
        %973 = vmatpush1.msra.mxu0 0.0
        %974 = vmatprep.subr.mxu0 0.0
        %975 = vmatpush1.msra.mxu0 0.0
        %976 = vmatprep.subr.mxu0 0.0
        %977 = vmatpush1.msra.mxu0 0.0
        %978 = vmatprep.subr.mxu0 0.0
        %979 = vmatpush1.msra.mxu0 0.0
        %980 = vmatprep.subr.mxu0 0.0
        %981 = vmatpush1.msra.mxu0 0.0
        %982 = vmatprep.subr.mxu0 0.0
        %983 = vmatpush1.msra.mxu0 0.0
        %984 = vmatprep.subr.mxu0 0.0
        %985 = vmatpush1.msra.mxu0 0.0
        %986 = vmatprep.subr.mxu0 0.0
        %987 = vmatpush1.msra.mxu0 0.0
        %988 = vmatprep.subr.mxu0 0.0
        %989 = vmatpush1.msra.mxu0 0.0
        %990 = vmatprep.mubr.f32.mxu0 0.0
        %991 = vmatmul.mubr.f32.gmra.mrb[0].mxu0 %v903
        %v992 = vpop.f32.mrb[0].mxu0
        %v993 = vadd.f32 0.0, %v992
        %v994 = vpop.f32.mrb[0].mxu0
        %995 = vmatprep.mubr.f32.mxu0 0.0
        %996 = vmatmul.mubr.f32.gmra.mrb[0].mxu0 %v906
        %v997 = vpop.f32.mrb[0].mxu0
        %v998 = vadd.f32 0.0, %v997
        %v999 = vpop.f32.mrb[0].mxu0
        %1000 = vmatprep.mubr.f32.mxu0 0.0
        %1001 = vmatmul.mubr.f32.gmra.mrb[0].mxu0 %v909
        %v1002 = vpop.f32.mrb[0].mxu0
        %v1003 = vadd.f32 0.0, %v1002
        %v1004 = vpop.f32.mrb[0].mxu0
        %1005 = vmatprep.mubr.f32.mxu0 0.0
        %1006 = vmatmul.mubr.f32.gmra.mrb[0].mxu0 %v912
        %v1007 = vpop.f32.mrb[0].mxu0
        %v1008 = vadd.f32 0.0, %v1007
        %v1009 = vpop.f32.mrb[0].mxu0
        %1010 = vmatprep.mubr.f32.mxu0 0.0
        %1011 = vmatmul.mubr.f32.gmra.mrb[0].mxu0 %v915
        %v1012 = vpop.f32.mrb[0].mxu0
        %v1013 = vadd.f32 0.0, %v1012
        %v1014 = vpop.f32.mrb[0].mxu0
        %1015 = vmatprep.mubr.f32.mxu0 0.0
        %1016 = vmatmul.mubr.f32.gmra.mrb[0].mxu0 %v918
        %v1017 = vpop.f32.mrb[0].mxu0
        %v1018 = vadd.f32 0.0, %v1017
        %v1019 = vpop.f32.mrb[0].mxu0
        %1020 = vmatprep.mubr.f32.mxu0 0.0
        %1021 = vmatmul.mubr.f32.gmra.mrb[0].mxu0 %v921
        %v1022 = vpop.f32.mrb[0].mxu0
        %v1023 = vadd.f32 0.0, %v1022
        %v1024 = vpop.f32.mrb[0].mxu0
        %1025 = vmatprep.mubr.f32.mxu0 0.0
        %1026 = vmatmul.mubr.f32.gmra.mrb[0].mxu0 %v924
        %v1027 = vpop.f32.mrb[0].mxu0
        %v1028 = vadd.f32 0.0, %v1027
        %v1029 = vpop.f32.mrb[0].mxu0
        %1030 = vdwg.mxu0
        %v1031 = vld [vmem:[%s473] sm:$0xff]
        %v1032 = vld [vmem:[%s473 + $0x8] sm:$0xff]
        %v1033 = vld [vmem:[%s473 + $0x10] sm:$0xff]
        %v1034 = vld [vmem:[%s473 + $0x18] sm:$0xff]
        %v1035 = vld [vmem:[%s473 + $0x20] sm:$0xff]
        %v1036 = vld [vmem:[%s473 + $0x28] sm:$0xff]
        %v1037 = vld [vmem:[%s473 + $0x30] sm:$0xff]
        %v1038 = vld [vmem:[%s473 + $0x38] sm:$0xff]
        %vm1039 = vcmask 31744
        %v1040 = vsel %vm1039, %v993, -inf
        %v1041 = vrot.slane %v1040, 4
        %v1042 = vmax.f32 %v1040, %v1041
        %v1043 = vrot.slane %v1042, 2
        %v1044 = vmax.f32 %v1042, %v1043
        %v1045 = vrot.slane %v1044, 1
        %v1046 = vmax.f32 %v1044, %v1045
        %v1047 = vsel %vm1039, %v998, -inf
        %v1048 = vrot.slane %v1047, 4
        %v1049 = vmax.f32 %v1047, %v1048
        %v1050 = vrot.slane %v1049, 2
        %v1051 = vmax.f32 %v1049, %v1050
        %v1052 = vrot.slane %v1051, 1
        %v1053 = vmax.f32 %v1051, %v1052
        %v1054 = vsel %vm1039, %v1003, -inf
        %v1055 = vrot.slane %v1054, 4
        %v1056 = vmax.f32 %v1054, %v1055
        %v1057 = vrot.slane %v1056, 2
        %v1058 = vmax.f32 %v1056, %v1057
        %v1059 = vrot.slane %v1058, 1
        %v1060 = vmax.f32 %v1058, %v1059
        %v1061 = vsel %vm1039, %v1008, -inf
        %v1062 = vrot.slane %v1061, 4
        %v1063 = vmax.f32 %v1061, %v1062
        %v1064 = vrot.slane %v1063, 2
        %v1065 = vmax.f32 %v1063, %v1064
        %v1066 = vrot.slane %v1065, 1
        %v1067 = vmax.f32 %v1065, %v1066
        %v1068 = vsel %vm1039, %v1013, -inf
        %v1069 = vrot.slane %v1068, 4
        %v1070 = vmax.f32 %v1068, %v1069
        %v1071 = vrot.slane %v1070, 2
        %v1072 = vmax.f32 %v1070, %v1071
        %v1073 = vrot.slane %v1072, 1
        %v1074 = vmax.f32 %v1072, %v1073
        %v1075 = vsel %vm1039, %v1018, -inf
        %v1076 = vrot.slane %v1075, 4
        %v1077 = vmax.f32 %v1075, %v1076
        %v1078 = vrot.slane %v1077, 2
        %v1079 = vmax.f32 %v1077, %v1078
        %v1080 = vrot.slane %v1079, 1
        %v1081 = vmax.f32 %v1079, %v1080
        %v1082 = vsel %vm1039, %v1023, -inf
        %v1083 = vrot.slane %v1082, 4
        %v1084 = vmax.f32 %v1082, %v1083
        %v1085 = vrot.slane %v1084, 2
        %v1086 = vmax.f32 %v1084, %v1085
        %v1087 = vrot.slane %v1086, 1
        %v1088 = vmax.f32 %v1086, %v1087
        %v1089 = vsel %vm1039, %v1028, -inf
        %v1090 = vrot.slane %v1089, 4
        %v1091 = vmax.f32 %v1089, %v1090
        %v1092 = vrot.slane %v1091, 2
        %v1093 = vmax.f32 %v1091, %v1092
        %v1094 = vrot.slane %v1093, 1
        %v1095 = vmax.f32 %v1093, %v1094
        %v1096 = vsub.f32 %v993, %v1046
        %v1097 = vsub.f32 %v998, %v1053
        %v1098 = vsub.f32 %v1003, %v1060
        %v1099 = vsub.f32 %v1008, %v1067
        %v1100 = vsub.f32 %v1013, %v1074
        %v1101 = vsub.f32 %v1018, %v1081
        %v1102 = vsub.f32 %v1023, %v1088
        %v1103 = vsub.f32 %v1028, %v1095
        %v1104 = vmul.f32 %v1096, 1.442695
        %v1105 = vpow.pop %v1104
        %v1106 = vmul.f32 %v1097, 1.442695
        %v1107 = vpow.pop %v1106
        %v1108 = vmul.f32 %v1098, 1.442695
        %v1109 = vpow.pop %v1108
        %v1110 = vmul.f32 %v1099, 1.442695
        %v1111 = vpow.pop %v1110
        %v1112 = vmul.f32 %v1100, 1.442695
        %v1113 = vpow.pop %v1112
        %v1114 = vmul.f32 %v1101, 1.442695
        %v1115 = vpow.pop %v1114
        %v1116 = vmul.f32 %v1102, 1.442695
        %v1117 = vpow.pop %v1116
        %v1118 = vmul.f32 %v1103, 1.442695
        %v1119 = vpow.pop %v1118
        %v1120 = vsel %vm1039, %v1105, 0.0
        %v1121 = vrot.slane %v1120, 4
        %v1122 = vadd.f32 %v1120, %v1121
        %v1123 = vrot.slane %v1122, 2
        %v1124 = vadd.f32 %v1122, %v1123
        %v1125 = vrot.slane %v1124, 1
        %v1126 = vadd.f32 %v1124, %v1125
        %v1127 = vsel %vm1039, %v1107, 0.0
        %v1128 = vrot.slane %v1127, 4
        %v1129 = vadd.f32 %v1127, %v1128
        %v1130 = vrot.slane %v1129, 2
        %v1131 = vadd.f32 %v1129, %v1130
        %v1132 = vrot.slane %v1131, 1
        %v1133 = vadd.f32 %v1131, %v1132
        %v1134 = vsel %vm1039, %v1109, 0.0
        %v1135 = vrot.slane %v1134, 4
        %v1136 = vadd.f32 %v1134, %v1135
        %v1137 = vrot.slane %v1136, 2
        %v1138 = vadd.f32 %v1136, %v1137
        %v1139 = vrot.slane %v1138, 1
        %v1140 = vadd.f32 %v1138, %v1139
        %v1141 = vsel %vm1039, %v1111, 0.0
        %v1142 = vrot.slane %v1141, 4
        %v1143 = vadd.f32 %v1141, %v1142
        %v1144 = vrot.slane %v1143, 2
        %v1145 = vadd.f32 %v1143, %v1144
        %v1146 = vrot.slane %v1145, 1
        %v1147 = vadd.f32 %v1145, %v1146
        %v1148 = vsel %vm1039, %v1113, 0.0
        %v1149 = vrot.slane %v1148, 4
        %v1150 = vadd.f32 %v1148, %v1149
        %v1151 = vrot.slane %v1150, 2
        %v1152 = vadd.f32 %v1150, %v1151
        %v1153 = vrot.slane %v1152, 1
        %v1154 = vadd.f32 %v1152, %v1153
        %v1155 = vsel %vm1039, %v1115, 0.0
        %v1156 = vrot.slane %v1155, 4
        %v1157 = vadd.f32 %v1155, %v1156
        %v1158 = vrot.slane %v1157, 2
        %v1159 = vadd.f32 %v1157, %v1158
        %v1160 = vrot.slane %v1159, 1
        %v1161 = vadd.f32 %v1159, %v1160
        %v1162 = vsel %vm1039, %v1117, 0.0
        %v1163 = vrot.slane %v1162, 4
        %v1164 = vadd.f32 %v1162, %v1163
        %v1165 = vrot.slane %v1164, 2
        %v1166 = vadd.f32 %v1164, %v1165
        %v1167 = vrot.slane %v1166, 1
        %v1168 = vadd.f32 %v1166, %v1167
        %v1169 = vsel %vm1039, %v1119, 0.0
        %v1170 = vrot.slane %v1169, 4
        %v1171 = vadd.f32 %v1169, %v1170
        %v1172 = vrot.slane %v1171, 2
        %v1173 = vadd.f32 %v1171, %v1172
        %v1174 = vrot.slane %v1173, 1
        %v1175 = vadd.f32 %v1173, %v1174
        %v1176 = vrcp.pop %v1126
        %v1177 = vrcp.pop %v1133
        %v1178 = vrcp.pop %v1140
        %v1179 = vrcp.pop %v1147
        %v1180 = vrcp.pop %v1154
        %v1181 = vrcp.pop %v1161
        %v1182 = vrcp.pop %v1168
        %v1183 = vrcp.pop %v1175
        %v1184 = vmul.f32 %v1105, %v1176
        %v1185 = vmul.f32 %v1107, %v1177
        %v1186 = vmul.f32 %v1109, %v1178
        %v1187 = vmul.f32 %v1111, %v1179
        %v1188 = vmul.f32 %v1113, %v1180
        %v1189 = vmul.f32 %v1115, %v1181
        %v1190 = vmul.f32 %v1117, %v1182
        %v1191 = vmul.f32 %v1119, %v1183
        %1193 = vset.pattern.permute.xlu0 0
        %1194 = vperm.xlu0 %1193, %v1031
        %v1195 = vpop.permute.xlu0 %1194
        %1198 = vset.pattern.permute.xlu0 0
        %1199 = vperm.xlu0 %1198, %v1032
        %v1200 = vpop.permute.xlu0 %1199
        %1203 = vset.pattern.permute.xlu0 0
        %1204 = vperm.xlu0 %1203, %v1033
        %v1205 = vpop.permute.xlu0 %1204
        %1208 = vset.pattern.permute.xlu0 0
        %1209 = vperm.xlu0 %1208, %v1034
        %v1210 = vpop.permute.xlu0 %1209
        %1213 = vset.pattern.permute.xlu0 0
        %1214 = vperm.xlu0 %1213, %v1035
        %v1215 = vpop.permute.xlu0 %1214
        %1218 = vset.pattern.permute.xlu0 0
        %1219 = vperm.xlu0 %1218, %v1036
        %v1220 = vpop.permute.xlu0 %1219
        %1223 = vset.pattern.permute.xlu0 0
        %1224 = vperm.xlu0 %1223, %v1037
        %v1225 = vpop.permute.xlu0 %1224
        %1228 = vset.pattern.permute.xlu0 0
        %1229 = vperm.xlu0 %1228, %v1038
        %v1230 = vpop.permute.xlu0 %1229
        %v1232 = vmul.f32 %v1184, %v1195
        %v1233 = vmul.f32 %v1185, %v1200
        %v1234 = vmul.f32 %v1186, %v1205
        %v1235 = vmul.f32 %v1187, %v1210
        %v1236 = vmul.f32 %v1188, %v1215
        %v1237 = vmul.f32 %v1189, %v1220
        %v1238 = vmul.f32 %v1190, %v1225
        %v1239 = vmul.f32 %v1191, %v1230
        %v1240 = vld [vmem:[%s11] sm:$0xf]
        %v1242 = vsel %vm1039, %v1232, 0
        %v1245 = vsel %vm1039, %v1233, 0
        %v1248 = vsel %vm1039, %v1234, 0
        %v1251 = vsel %vm1039, %v1235, 0
        %v1254 = vsel %vm1039, %v1236, 0
        %v1257 = vsel %vm1039, %v1237, 0
        %v1260 = vsel %vm1039, %v1238, 0
        %v1263 = vsel %vm1039, %v1239, 0
        %vm1265 = vcmask 1043456
        %v1267 = vsel %vm1265, %v1240, 0
        %1269 = vmatprep.subr.mxu0 0.0
        %1270 = vmatpush1.msra.mxu0 %v1267
        %1271 = vmatprep.subr.mxu0 0.0
        %1272 = vmatpush1.msra.mxu0 0.0
        %1273 = vmatprep.subr.mxu0 0.0
        %1274 = vmatpush1.msra.mxu0 0.0
        %1275 = vmatprep.subr.mxu0 0.0
        %1276 = vmatpush1.msra.mxu0 0.0
        %1277 = vmatprep.subr.mxu0 0.0
        %1278 = vmatpush1.msra.mxu0 0.0
        %1279 = vmatprep.subr.mxu0 0.0
        %1280 = vmatpush1.msra.mxu0 0.0
        %1281 = vmatprep.subr.mxu0 0.0
        %1282 = vmatpush1.msra.mxu0 0.0
        %1283 = vmatprep.subr.mxu0 0.0
        %1284 = vmatpush1.msra.mxu0 0.0
        %1285 = vmatprep.subr.mxu0 0.0
        %1286 = vmatpush1.msra.mxu0 0.0
        %1287 = vmatprep.subr.mxu0 0.0
        %1288 = vmatpush1.msra.mxu0 0.0
        %1289 = vmatprep.subr.mxu0 0.0
        %1290 = vmatpush1.msra.mxu0 0.0
        %1291 = vmatprep.subr.mxu0 0.0
        %1292 = vmatpush1.msra.mxu0 0.0
        %1293 = vmatprep.subr.mxu0 0.0
        %1294 = vmatpush1.msra.mxu0 0.0
        %1295 = vmatprep.subr.mxu0 0.0
        %1296 = vmatpush1.msra.mxu0 0.0
        %1297 = vmatprep.subr.mxu0 0.0
        %1298 = vmatpush1.msra.mxu0 0.0
        %1299 = vmatprep.subr.mxu0 0.0
        %1300 = vmatpush1.msra.mxu0 0.0
        %1301 = vmatprep.subr.mxu0 0.0
        %1302 = vmatpush1.msra.mxu0 0.0
        %1303 = vmatprep.subr.mxu0 0.0
        %1304 = vmatpush1.msra.mxu0 0.0
        %1305 = vmatprep.subr.mxu0 0.0
        %1306 = vmatpush1.msra.mxu0 0.0
        %1307 = vmatprep.subr.mxu0 0.0
        %1308 = vmatpush1.msra.mxu0 0.0
        %1309 = vmatprep.subr.mxu0 0.0
        %1310 = vmatpush1.msra.mxu0 0.0
        %1311 = vmatprep.subr.mxu0 0.0
        %1312 = vmatpush1.msra.mxu0 0.0
        %1313 = vmatprep.subr.mxu0 0.0
        %1314 = vmatpush1.msra.mxu0 0.0
        %1315 = vmatprep.subr.mxu0 0.0
        %1316 = vmatpush1.msra.mxu0 0.0
        %1317 = vmatprep.subr.mxu0 0.0
        %1318 = vmatpush1.msra.mxu0 0.0
        %1319 = vmatprep.subr.mxu0 0.0
        %1320 = vmatpush1.msra.mxu0 0.0
        %1321 = vmatprep.subr.mxu0 0.0
        %1322 = vmatpush1.msra.mxu0 0.0
        %1323 = vmatprep.subr.mxu0 0.0
        %1324 = vmatpush1.msra.mxu0 0.0
        %1325 = vmatprep.subr.mxu0 0.0
        %1326 = vmatpush1.msra.mxu0 0.0
        %1327 = vmatprep.subr.mxu0 0.0
        %1328 = vmatpush1.msra.mxu0 0.0
        %1329 = vmatprep.subr.mxu0 0.0
        %1330 = vmatpush1.msra.mxu0 0.0
        %1331 = vmatprep.subr.mxu0 0.0
        %1332 = vmatpush1.msra.mxu0 0.0
        %1333 = vmatprep.mubr.f32.mxu0 0.0
        %1334 = vmatmul.mubr.f32.gmra.mrb[0].mxu0 %v1242
        %v1335 = vpop.f32.mrb[0].mxu0
        %v1336 = vadd.f32 0.0, %v1335
        %v1337 = vpop.f32.mrb[0].mxu0
        %1338 = vmatprep.mubr.f32.mxu0 0.0
        %1339 = vmatmul.mubr.f32.gmra.mrb[0].mxu0 %v1245
        %v1340 = vpop.f32.mrb[0].mxu0
        %v1341 = vadd.f32 0.0, %v1340
        %v1342 = vpop.f32.mrb[0].mxu0
        %1343 = vmatprep.mubr.f32.mxu0 0.0
        %1344 = vmatmul.mubr.f32.gmra.mrb[0].mxu0 %v1248
        %v1345 = vpop.f32.mrb[0].mxu0
        %v1346 = vadd.f32 0.0, %v1345
        %v1347 = vpop.f32.mrb[0].mxu0
        %1348 = vmatprep.mubr.f32.mxu0 0.0
        %1349 = vmatmul.mubr.f32.gmra.mrb[0].mxu0 %v1251
        %v1350 = vpop.f32.mrb[0].mxu0
        %v1351 = vadd.f32 0.0, %v1350
        %v1352 = vpop.f32.mrb[0].mxu0
        %1353 = vmatprep.mubr.f32.mxu0 0.0
        %1354 = vmatmul.mubr.f32.gmra.mrb[0].mxu0 %v1254
        %v1355 = vpop.f32.mrb[0].mxu0
        %v1356 = vadd.f32 0.0, %v1355
        %v1357 = vpop.f32.mrb[0].mxu0
        %1358 = vmatprep.mubr.f32.mxu0 0.0
        %1359 = vmatmul.mubr.f32.gmra.mrb[0].mxu0 %v1257
        %v1360 = vpop.f32.mrb[0].mxu0
        %v1361 = vadd.f32 0.0, %v1360
        %v1362 = vpop.f32.mrb[0].mxu0
        %1363 = vmatprep.mubr.f32.mxu0 0.0
        %1364 = vmatmul.mubr.f32.gmra.mrb[0].mxu0 %v1260
        %v1365 = vpop.f32.mrb[0].mxu0
        %v1366 = vadd.f32 0.0, %v1365
        %v1367 = vpop.f32.mrb[0].mxu0
        %1368 = vmatprep.mubr.f32.mxu0 0.0
        %1369 = vmatmul.mubr.f32.gmra.mrb[0].mxu0 %v1263
        %v1370 = vpop.f32.mrb[0].mxu0
        %v1371 = vadd.f32 0.0, %v1370
        %v1372 = vpop.f32.mrb[0].mxu0
        %1373 = vdwg.mxu0
        %v1374 = vmul.f32 %v1336, %v770
        %v1375 = vmul.f32 %v1341, %v773
        %v1376 = vmul.f32 %v1346, %v778
        %v1377 = vmul.f32 %v1351, %v781
        %v1378 = vmul.f32 %v1356, %v786
        %v1379 = vmul.f32 %v1361, %v789
        %v1380 = vmul.f32 %v1366, %v794
        %v1381 = vmul.f32 %v1371, %v797
        %v1382 = vsel %vm500, %v1374, 0.0
        %v1383 = vrot.slane %v1382, 4
        %v1384 = vadd.f32 %v1382, %v1383
        %v1385 = vrot.slane %v1384, 2
        %v1386 = vadd.f32 %v1384, %v1385
        %v1387 = vrot.slane %v1386, 1
        %v1388 = vadd.f32 %v1386, %v1387
        %v1389 = vsel %vm500, %v1375, 0.0
        %v1390 = vrot.slane %v1389, 4
        %v1391 = vadd.f32 %v1389, %v1390
        %v1392 = vrot.slane %v1391, 2
        %v1393 = vadd.f32 %v1391, %v1392
        %v1394 = vrot.slane %v1393, 1
        %v1395 = vadd.f32 %v1393, %v1394
        %v1396 = vsel %vm500, %v1376, 0.0
        %v1397 = vrot.slane %v1396, 4
        %v1398 = vadd.f32 %v1396, %v1397
        %v1399 = vrot.slane %v1398, 2
        %v1400 = vadd.f32 %v1398, %v1399
        %v1401 = vrot.slane %v1400, 1
        %v1402 = vadd.f32 %v1400, %v1401
        %v1403 = vsel %vm500, %v1377, 0.0
        %v1404 = vrot.slane %v1403, 4
        %v1405 = vadd.f32 %v1403, %v1404
        %v1406 = vrot.slane %v1405, 2
        %v1407 = vadd.f32 %v1405, %v1406
        %v1408 = vrot.slane %v1407, 1
        %v1409 = vadd.f32 %v1407, %v1408
        %v1410 = vsel %vm500, %v1378, 0.0
        %v1411 = vrot.slane %v1410, 4
        %v1412 = vadd.f32 %v1410, %v1411
        %v1413 = vrot.slane %v1412, 2
        %v1414 = vadd.f32 %v1412, %v1413
        %v1415 = vrot.slane %v1414, 1
        %v1416 = vadd.f32 %v1414, %v1415
        %v1417 = vsel %vm500, %v1379, 0.0
        %v1418 = vrot.slane %v1417, 4
        %v1419 = vadd.f32 %v1417, %v1418
        %v1420 = vrot.slane %v1419, 2
        %v1421 = vadd.f32 %v1419, %v1420
        %v1422 = vrot.slane %v1421, 1
        %v1423 = vadd.f32 %v1421, %v1422
        %v1424 = vsel %vm500, %v1380, 0.0
        %v1425 = vrot.slane %v1424, 4
        %v1426 = vadd.f32 %v1424, %v1425
        %v1427 = vrot.slane %v1426, 2
        %v1428 = vadd.f32 %v1426, %v1427
        %v1429 = vrot.slane %v1428, 1
        %v1430 = vadd.f32 %v1428, %v1429
        %v1431 = vsel %vm500, %v1381, 0.0
        %v1432 = vrot.slane %v1431, 4
        %v1433 = vadd.f32 %v1431, %v1432
        %v1434 = vrot.slane %v1433, 2
        %v1435 = vadd.f32 %v1433, %v1434
        %v1436 = vrot.slane %v1435, 1
        %v1437 = vadd.f32 %v1435, %v1436
        %vm1446 = vcmask 1041409
        %v1447 = vsel %vm1446, %v1395, %v1388
        %vm1448 = vcmask 1042434
        %v1449 = vsel %vm1448, %v1402, %v1447
        %vm1450 = vcmask 1043459
        %v1451 = vsel %vm1450, %v1409, %v1449
        %vm1452 = vcmask 1044484
        %v1453 = vsel %vm1452, %v1416, %v1451
        %vm1454 = vcmask 1045509
        %v1455 = vsel %vm1454, %v1423, %v1453
        %vm1456 = vcmask 1046534
        %v1457 = vsel %vm1456, %v1430, %v1455
        %vm1458 = vcmask 1047559
        %v1459 = vsel %vm1458, %v1437, %v1457
        %1461 = vst.msk [vmem:[%s452] sm:$0xff] %vm500, %v1459
        %s1462 = sand.u32 %s306, 1
        %s1463 = scalar_lea.sflag [#allocation3], %s1462
        %s1464 = sand.u32 %s306, 1
        %s1465 = smul.addr %s1464, 8
        %s1466 = scalar_lea.vmem [#allocation2], %s1465
        // Predicated region
        $region69: #{tpu_custom_call.1} parent=67 // pred_check
          %p1467 = pneg %p316
        $region70: #{tpu_custom_call.1} parent=67 // pred_check_branch
          %1469 = sbr.rel (%p1467) target = $region72
        $region71: #{tpu_custom_call.1} parent=67 // pred_region
          %s1471 = ssub.s32 128, 128
          %1472 = vsyncadd %s1463, %s1471
          %s1473 = smul.addr %s26, 128
          %s1474 = scalar_lea.hbm %s12, %s1473
          %s1476 = sshll.u32 %s1466, 4
          %s1477 = int_to_ptr.vmem [resolvable:$true] %s1476
          %1479 = dma.vmem_to_hbm [thread:$0]  %s1477, 128, %s1474, %s1463
        $region72: #{tpu_custom_call.1} parent=67 // pred_fallthru
          _
      $region68: #{tpu_custom_call.1} parent=5 // pred_fallthru
        _
      %p1480 = scmp.le.s32.totalorder 2, %s21
      // Predicated region
      $region73: #{tpu_custom_call.1} parent=5 // pred_check
        %p1481 = pneg %p1480
      $region74: #{tpu_custom_call.1} parent=5 // pred_check_branch
        %1483 = sbr.rel (%p1481) target = $region76
      $region75: #{tpu_custom_call.1} parent=5 // pred_region
        %s1484 = ssub.s32 %s21, 2
        // Predicated region
        $region77: #{tpu_custom_call.1} parent=75 // pred_check
          %p1485 = pneg %p322
        $region78: #{tpu_custom_call.1} parent=75 // pred_check_branch
          %1487 = sbr.rel (%p1485) target = $region80
        $region79: #{tpu_custom_call.1} parent=75 // pred_region
          %s1488 = sand.u32 %s307, 1
          %s1489 = scalar_lea.sflag [#allocation3], %s1488
          %s1490 = sand.u32 %s307, 1
          %s1491 = smul.addr %s1490, 8
          %s1492 = scalar_lea.vmem [#allocation2], %s1491
          %1493 = dma.done %s1489, 128
        $region80: #{tpu_custom_call.1} parent=75 // pred_fallthru
          _
      $region76: #{tpu_custom_call.1} parent=5 // pred_fallthru
        _
    $region6: #{tpu_custom_call.1} parent=1 // loop_footer
      %s25 = sadd.s32 1, %s21
    $region7: #{tpu_custom_call.1} parent=1 // loop_footer_branch
      %20 = sbr.rel target = $region3
    $region8: #{tpu_custom_call.1} parent=1 // loop_exit
      _
    %1494 = vsyncpa [#allocation3], 1
    %s1495 = scalar_lea.sflag [#allocation3], 1
    %1496 = vsyncpa %s1495, 1

// kernel: tpu_custom_call.1
$region0: #{tpu_custom_call.1}
  #allocation0 [shape = 'u32[]', space=smem, size = 0x4, offset = 0x4, fixed_abs, tag = 'smem constant byte address 0x4 - core index']
  #allocation1 [shape = 'u32[144,128]{1,0:T(1,128)}', space=vmem, size = 0x12000, scoped, tag = 'internal scratch']
  %s0 = inlined_call_operand.vmem [shape: bf16[16,32], index: 0, kind: input, shape index: {}]
  %s1 = inlined_call_operand.vmem [shape: bf16[128,32], index: 1, kind: input, shape index: {}]
  %s2 = inlined_call_operand.vmem [shape: bf16[128,32], index: 2, kind: input, shape index: {}]
  %s3 = inlined_call_operand.vmem [shape: f32[16,8,1], index: 3, kind: input, shape index: {}]
  %s4 = inlined_call_operand.vmem [shape: bf16[32,32], index: 4, kind: input, shape index: {}]
  %s5 = inlined_call_operand.vmem [shape: f32[1,32], index: 5, kind: input, shape index: {}]
  %s6 = inlined_call_operand.vmem [shape: bf16[32,32], index: 6, kind: input, shape index: {}]
  %s7 = inlined_call_operand.vmem [shape: f32[1,32], index: 7, kind: input, shape index: {}]
  %s8 = inlined_call_operand.vmem [shape: bf16[32,32], index: 8, kind: input, shape index: {}]
  %s9 = inlined_call_operand.vmem [shape: f32[1,32], index: 9, kind: input, shape index: {}]
  %s10 = inlined_call_operand.vmem [shape: f32[32,4], index: 10, kind: input, shape index: {}]
  %s11 = inlined_call_operand.vmem [shape: f32[4,32], index: 11, kind: input, shape index: {}]
  %s12 = inlined_call_operand.hbm [shape: f32[16,32], index: 12, kind: output, shape index: {}]
  %s13 = sld [smem:[#allocation0]]
  $region81: #{tpu_custom_call.1} parent=0
    _
  %s15 = ssub.s32 1, %s13
  %s16 = scalar_select 0, %s15, %s13
  $region1: #{tpu_custom_call.1} parent=0
    #allocation2 [shape = 'u8[8192]{0}', space=vmem, size = 0x2000, scoped, tag = 'output window, operand 0']
    #allocation3 [shape = 's32[2]{0}', space=sflag, size = 0x8, scoped, tag = 'scoped memory for tpu_custom_call.1']
    %17 = vsyncpa [#allocation3], 0
    %s18 = scalar_lea.sflag [#allocation3], 1
    %19 = vsyncpa %s18, 0
    loop: start=0, step=1, limit=4
    $region2: #{tpu_custom_call.1} parent=1 // loop_pre_header
      _
    $region3: #{tpu_custom_call.1} parent=1 // loop_header
      %s21 = sphi 0, %s25
      %p22 = scmp.ge.s32.totalorder %s21, 4
      %s31 = sphi 0, %s33
      %s34 = sphi 0, %s31
      %s35 = sphi 0, %s34
      %s51 = sphi 0, %s35
      %s57 = sphi 0, %s59
      %s60 = sphi 0, %s57
      %s61 = sphi 0, %s60
      %s77 = sphi 0, %s61
      %s83 = sphi 0, %s85
      %s86 = sphi 0, %s83
      %s87 = sphi 0, %s86
      %s103 = sphi 0, %s87
      %s109 = sphi 0, %s111
      %s112 = sphi 0, %s109
      %s113 = sphi 0, %s112
      %s129 = sphi 0, %s113
      %s133 = sphi 0, %s133
      %s135 = sphi 0, %s133
      %s136 = sphi 0, %s135
      %s150 = sphi 0, %s136
      %s154 = sphi 0, %s154
      %s156 = sphi 0, %s154
      %s157 = sphi 0, %s156
      %s171 = sphi 0, %s157
      %s175 = sphi 0, %s175
      %s177 = sphi 0, %s175
      %s178 = sphi 0, %s177
      %s192 = sphi 0, %s178
      %s196 = sphi 0, %s196
      %s198 = sphi 0, %s196
      %s199 = sphi 0, %s198
      %s213 = sphi 0, %s199
      %s217 = sphi 0, %s217
      %s219 = sphi 0, %s217
      %s220 = sphi 0, %s219
      %s234 = sphi 0, %s220
      %s238 = sphi 0, %s238
      %s240 = sphi 0, %s238
      %s241 = sphi 0, %s240
      %s255 = sphi 0, %s241
      %s259 = sphi 0, %s259
      %s261 = sphi 0, %s259
      %s262 = sphi 0, %s261
      %s276 = sphi 0, %s262
      %s280 = sphi 0, %s280
      %s282 = sphi 0, %s280
      %s283 = sphi 0, %s282
      %s297 = sphi 0, %s283
      %s303 = sphi 0, %s305
      %s306 = sphi 0, %s303
      %s307 = sphi 0, %s306
      %s323 = sphi 0, %s307
    $region4: #{tpu_custom_call.1} parent=1 // loop_header_branch
      %24 = sbr.rel (%p22) target = $region8
    $region5: #{tpu_custom_call.1} parent=1 // loop_body
      %s26 = ssub.s32 %s21, 1
      %s27 = ssub.s32 %s21, 2
      %s28 = sadd.s32 %s21, 1
      %s29 = ssub.s32 %s21, %s28
      %p30 = scmp.eq.s32.totalorder %s29, 0
      %s32 = sadd.s32 %s31, 1
      %s33 = scalar_select %p30, %s31, %s32
      %p36 = pneg %p30
      %p37 = scmp.eq.s32.totalorder %s21, 1
      %p38 = por %p36, %p37
      %p39 = scmp.ne.s32.totalorder %s31, %s34
      %p40 = scmp.eq.s32.totalorder %s21, 0
      %p41 = por %p39, %p40
      %p42 = scmp.ne.s32.totalorder %s31, %s34
      %p43 = scmp.eq.s32.totalorder %s26, 1
      %p44 = por %p42, %p43
      %p45 = scmp.ne.s32.totalorder %s34, %s35
      %p46 = scmp.eq.s32.totalorder %s26, 0
      %p47 = por %p45, %p46
      %p48 = scmp.ne.s32.totalorder %s34, %s35
      %p49 = scmp.eq.s32.totalorder %s27, 1
      %p50 = por %p48, %p49
      %p52 = scmp.ne.s32.totalorder %s35, %s51
      %p53 = scmp.eq.s32.totalorder %s27, 0
      %p54 = por %p52, %p53
      %s55 = ssub.s32 %s21, %s28
      %p56 = scmp.eq.s32.totalorder %s55, 0
      %s58 = sadd.s32 %s57, 1
      %s59 = scalar_select %p56, %s57, %s58
      %p62 = pneg %p56
      %p63 = scmp.eq.s32.totalorder %s21, 1
      %p64 = por %p62, %p63
      %p65 = scmp.ne.s32.totalorder %s57, %s60
      %p66 = scmp.eq.s32.totalorder %s21, 0
      %p67 = por %p65, %p66
      %p68 = scmp.ne.s32.totalorder %s57, %s60
      %p69 = scmp.eq.s32.totalorder %s26, 1
      %p70 = por %p68, %p69
      %p71 = scmp.ne.s32.totalorder %s60, %s61
      %p72 = scmp.eq.s32.totalorder %s26, 0
      %p73 = por %p71, %p72
      %p74 = scmp.ne.s32.totalorder %s60, %s61
      %p75 = scmp.eq.s32.totalorder %s27, 1
      %p76 = por %p74, %p75
      %p78 = scmp.ne.s32.totalorder %s61, %s77
      %p79 = scmp.eq.s32.totalorder %s27, 0
      %p80 = por %p78, %p79
      %s81 = ssub.s32 %s21, %s28
      %p82 = scmp.eq.s32.totalorder %s81, 0
      %s84 = sadd.s32 %s83, 1
      %s85 = scalar_select %p82, %s83, %s84
      %p88 = pneg %p82
      %p89 = scmp.eq.s32.totalorder %s21, 1
      %p90 = por %p88, %p89
      %p91 = scmp.ne.s32.totalorder %s83, %s86
      %p92 = scmp.eq.s32.totalorder %s21, 0
      %p93 = por %p91, %p92
      %p94 = scmp.ne.s32.totalorder %s83, %s86
      %p95 = scmp.eq.s32.totalorder %s26, 1
      %p96 = por %p94, %p95
      %p97 = scmp.ne.s32.totalorder %s86, %s87
      %p98 = scmp.eq.s32.totalorder %s26, 0
      %p99 = por %p97, %p98
      %p100 = scmp.ne.s32.totalorder %s86, %s87
      %p101 = scmp.eq.s32.totalorder %s27, 1
      %p102 = por %p100, %p101
      %p104 = scmp.ne.s32.totalorder %s87, %s103
      %p105 = scmp.eq.s32.totalorder %s27, 0
      %p106 = por %p104, %p105
      %s107 = ssub.s32 %s21, %s28
      %p108 = scmp.eq.s32.totalorder %s107, 0
      %s110 = sadd.s32 %s109, 1
      %s111 = scalar_select %p108, %s109, %s110
      %p114 = pneg %p108
      %p115 = scmp.eq.s32.totalorder %s21, 1
      %p116 = por %p114, %p115
      %p117 = scmp.ne.s32.totalorder %s109, %s112
      %p118 = scmp.eq.s32.totalorder %s21, 0
      %p119 = por %p117, %p118
      %p120 = scmp.ne.s32.totalorder %s109, %s112
      %p121 = scmp.eq.s32.totalorder %s26, 1
      %p122 = por %p120, %p121
      %p123 = scmp.ne.s32.totalorder %s112, %s113
      %p124 = scmp.eq.s32.totalorder %s26, 0
      %p125 = por %p123, %p124
      %p126 = scmp.ne.s32.totalorder %s112, %s113
      %p127 = scmp.eq.s32.totalorder %s27, 1
      %p128 = por %p126, %p127
      %p130 = scmp.ne.s32.totalorder %s113, %s129
      %p131 = scmp.eq.s32.totalorder %s27, 0
      %p132 = por %p130, %p131
      %s134 = sadd.s32 %s133, 1
      %p137 = scmp.eq.s32.totalorder %s21, 1
      %p138 = scmp.ne.s32.totalorder %s133, %s135
      %p139 = scmp.eq.s32.totalorder %s21, 0
      %p140 = por %p138, %p139
      %p141 = scmp.ne.s32.totalorder %s133, %s135
      %p142 = scmp.eq.s32.totalorder %s26, 1
      %p143 = por %p141, %p142
      %p144 = scmp.ne.s32.totalorder %s135, %s136
      %p145 = scmp.eq.s32.totalorder %s26, 0
      %p146 = por %p144, %p145
      %p147 = scmp.ne.s32.totalorder %s135, %s136
      %p148 = scmp.eq.s32.totalorder %s27, 1
      %p149 = por %p147, %p148
      %p151 = scmp.ne.s32.totalorder %s136, %s150
      %p152 = scmp.eq.s32.totalorder %s27, 0
      %p153 = por %p151, %p152
      %s155 = sadd.s32 %s154, 1
      %p158 = scmp.eq.s32.totalorder %s21, 1
      %p159 = scmp.ne.s32.totalorder %s154, %s156
      %p160 = scmp.eq.s32.totalorder %s21, 0
      %p161 = por %p159, %p160
      %p162 = scmp.ne.s32.totalorder %s154, %s156
      %p163 = scmp.eq.s32.totalorder %s26, 1
      %p164 = por %p162, %p163
      %p165 = scmp.ne.s32.totalorder %s156, %s157
      %p166 = scmp.eq.s32.totalorder %s26, 0
      %p167 = por %p165, %p166
      %p168 = scmp.ne.s32.totalorder %s156, %s157
      %p169 = scmp.eq.s32.totalorder %s27, 1
      %p170 = por %p168, %p169
      %p172 = scmp.ne.s32.totalorder %s157, %s171
      %p173 = scmp.eq.s32.totalorder %s27, 0
      %p174 = por %p172, %p173
      %s176 = sadd.s32 %s175, 1
      %p179 = scmp.eq.s32.totalorder %s21, 1
      %p180 = scmp.ne.s32.totalorder %s175, %s177
      %p181 = scmp.eq.s32.totalorder %s21, 0
      %p182 = por %p180, %p181
      %p183 = scmp.ne.s32.totalorder %s175, %s177
      %p184 = scmp.eq.s32.totalorder %s26, 1
      %p185 = por %p183, %p184
      %p186 = scmp.ne.s32.totalorder %s177, %s178
      %p187 = scmp.eq.s32.totalorder %s26, 0
      %p188 = por %p186, %p187
      %p189 = scmp.ne.s32.totalorder %s177, %s178
      %p190 = scmp.eq.s32.totalorder %s27, 1
      %p191 = por %p189, %p190
      %p193 = scmp.ne.s32.totalorder %s178, %s192
      %p194 = scmp.eq.s32.totalorder %s27, 0
      %p195 = por %p193, %p194
      %s197 = sadd.s32 %s196, 1
      %p200 = scmp.eq.s32.totalorder %s21, 1
      %p201 = scmp.ne.s32.totalorder %s196, %s198
      %p202 = scmp.eq.s32.totalorder %s21, 0
      %p203 = por %p201, %p202
      %p204 = scmp.ne.s32.totalorder %s196, %s198
      %p205 = scmp.eq.s32.totalorder %s26, 1
      %p206 = por %p204, %p205
      %p207 = scmp.ne.s32.totalorder %s198, %s199
      %p208 = scmp.eq.s32.totalorder %s26, 0
      %p209 = por %p207, %p208
      %p210 = scmp.ne.s32.totalorder %s198, %s199
      %p211 = scmp.eq.s32.totalorder %s27, 1
      %p212 = por %p210, %p211
      %p214 = scmp.ne.s32.totalorder %s199, %s213
      %p215 = scmp.eq.s32.totalorder %s27, 0
      %p216 = por %p214, %p215
      %s218 = sadd.s32 %s217, 1
      %p221 = scmp.eq.s32.totalorder %s21, 1
      %p222 = scmp.ne.s32.totalorder %s217, %s219
      %p223 = scmp.eq.s32.totalorder %s21, 0
      %p224 = por %p222, %p223
      %p225 = scmp.ne.s32.totalorder %s217, %s219
      %p226 = scmp.eq.s32.totalorder %s26, 1
      %p227 = por %p225, %p226
      %p228 = scmp.ne.s32.totalorder %s219, %s220
      %p229 = scmp.eq.s32.totalorder %s26, 0
      %p230 = por %p228, %p229
      %p231 = scmp.ne.s32.totalorder %s219, %s220
      %p232 = scmp.eq.s32.totalorder %s27, 1
      %p233 = por %p231, %p232
      %p235 = scmp.ne.s32.totalorder %s220, %s234
      %p236 = scmp.eq.s32.totalorder %s27, 0
      %p237 = por %p235, %p236
      %s239 = sadd.s32 %s238, 1
      %p242 = scmp.eq.s32.totalorder %s21, 1
      %p243 = scmp.ne.s32.totalorder %s238, %s240
      %p244 = scmp.eq.s32.totalorder %s21, 0
      %p245 = por %p243, %p244
      %p246 = scmp.ne.s32.totalorder %s238, %s240
      %p247 = scmp.eq.s32.totalorder %s26, 1
      %p248 = por %p246, %p247
      %p249 = scmp.ne.s32.totalorder %s240, %s241
      %p250 = scmp.eq.s32.totalorder %s26, 0
      %p251 = por %p249, %p250
      %p252 = scmp.ne.s32.totalorder %s240, %s241
      %p253 = scmp.eq.s32.totalorder %s27, 1
      %p254 = por %p252, %p253
      %p256 = scmp.ne.s32.totalorder %s241, %s255
      %p257 = scmp.eq.s32.totalorder %s27, 0
      %p258 = por %p256, %p257
      %s260 = sadd.s32 %s259, 1
      %p263 = scmp.eq.s32.totalorder %s21, 1
      %p264 = scmp.ne.s32.totalorder %s259, %s261
      %p265 = scmp.eq.s32.totalorder %s21, 0
      %p266 = por %p264, %p265
      %p267 = scmp.ne.s32.totalorder %s259, %s261
      %p268 = scmp.eq.s32.totalorder %s26, 1
      %p269 = por %p267, %p268
      %p270 = scmp.ne.s32.totalorder %s261, %s262
      %p271 = scmp.eq.s32.totalorder %s26, 0
      %p272 = por %p270, %p271
      %p273 = scmp.ne.s32.totalorder %s261, %s262
      %p274 = scmp.eq.s32.totalorder %s27, 1
      %p275 = por %p273, %p274
      %p277 = scmp.ne.s32.totalorder %s262, %s276
      %p278 = scmp.eq.s32.totalorder %s27, 0
      %p279 = por %p277, %p278
      %s281 = sadd.s32 %s280, 1
      %p284 = scmp.eq.s32.totalorder %s21, 1
      %p285 = scmp.ne.s32.totalorder %s280, %s282
      %p286 = scmp.eq.s32.totalorder %s21, 0
      %p287 = por %p285, %p286
      %p288 = scmp.ne.s32.totalorder %s280, %s282
      %p289 = scmp.eq.s32.totalorder %s26, 1
      %p290 = por %p288, %p289
      %p291 = scmp.ne.s32.totalorder %s282, %s283
      %p292 = scmp.eq.s32.totalorder %s26, 0
      %p293 = por %p291, %p292
      %p294 = scmp.ne.s32.totalorder %s282, %s283
      %p295 = scmp.eq.s32.totalorder %s27, 1
      %p296 = por %p294, %p295
      %p298 = scmp.ne.s32.totalorder %s283, %s297
      %p299 = scmp.eq.s32.totalorder %s27, 0
      %p300 = por %p298, %p299
      %s301 = ssub.s32 %s21, %s28
      %p302 = scmp.eq.s32.totalorder %s301, 0
      %s304 = sadd.s32 %s303, 1
      %s305 = scalar_select %p302, %s303, %s304
      %p308 = pneg %p302
      %p309 = scmp.eq.s32.totalorder %s21, 1
      %p310 = por %p308, %p309
      %p311 = scmp.ne.s32.totalorder %s303, %s306
      %p312 = scmp.eq.s32.totalorder %s21, 0
      %p313 = por %p311, %p312
      %p314 = scmp.ne.s32.totalorder %s303, %s306
      %p315 = scmp.eq.s32.totalorder %s26, 1
      %p316 = por %p314, %p315
      %p317 = scmp.ne.s32.totalorder %s306, %s307
      %p318 = scmp.eq.s32.totalorder %s26, 0
      %p319 = por %p317, %p318
      %p320 = scmp.ne.s32.totalorder %s306, %s307
      %p321 = scmp.eq.s32.totalorder %s27, 1
      %p322 = por %p320, %p321
      %p324 = scmp.ne.s32.totalorder %s307, %s323
      %p325 = scmp.eq.s32.totalorder %s27, 0
      %p326 = por %p324, %p325
      %p327 = scmp.le.s32.totalorder 1, %s21
      %p328 = scmp.lt.s32.totalorder %s21, 3
      %p329 = pnand %p327, %p328
      %p330 = pneg %p329
      // Predicated region
      $region9: #{tpu_custom_call.1} parent=5 // pred_check
        _
      $region10: #{tpu_custom_call.1} parent=5 // pred_check_branch
        %332 = sbr.rel (%p329) target = $region12
      $region11: #{tpu_custom_call.1} parent=5 // pred_region
        %s333 = ssub.s32 %s21, 1
        // Predicated region
        $region13: #{tpu_custom_call.1} parent=11 // pred_check
          %p334 = pneg %p146
        $region14: #{tpu_custom_call.1} parent=11 // pred_check_branch
          %336 = sbr.rel (%p334) target = $region16
        $region15: #{tpu_custom_call.1} parent=11 // pred_region
          _
        $region16: #{tpu_custom_call.1} parent=11 // pred_fallthru
          _
        // Predicated region
        $region17: #{tpu_custom_call.1} parent=11 // pred_check
          %p337 = pneg %p167
        $region18: #{tpu_custom_call.1} parent=11 // pred_check_branch
          %339 = sbr.rel (%p337) target = $region20
        $region19: #{tpu_custom_call.1} parent=11 // pred_region
          _
        $region20: #{tpu_custom_call.1} parent=11 // pred_fallthru
          _
        // Predicated region
        $region21: #{tpu_custom_call.1} parent=11 // pred_check
          %p340 = pneg %p188
        $region22: #{tpu_custom_call.1} parent=11 // pred_check_branch
          %342 = sbr.rel (%p340) target = $region24
        $region23: #{tpu_custom_call.1} parent=11 // pred_region
          _
        $region24: #{tpu_custom_call.1} parent=11 // pred_fallthru
          _
        // Predicated region
        $region25: #{tpu_custom_call.1} parent=11 // pred_check
          %p343 = pneg %p209
        $region26: #{tpu_custom_call.1} parent=11 // pred_check_branch
          %345 = sbr.rel (%p343) target = $region28
        $region27: #{tpu_custom_call.1} parent=11 // pred_region
          _
        $region28: #{tpu_custom_call.1} parent=11 // pred_fallthru
          _
        // Predicated region
        $region29: #{tpu_custom_call.1} parent=11 // pred_check
          %p346 = pneg %p230
        $region30: #{tpu_custom_call.1} parent=11 // pred_check_branch
          %348 = sbr.rel (%p346) target = $region32
        $region31: #{tpu_custom_call.1} parent=11 // pred_region
          _
        $region32: #{tpu_custom_call.1} parent=11 // pred_fallthru
          _
        // Predicated region
        $region33: #{tpu_custom_call.1} parent=11 // pred_check
          %p349 = pneg %p251
        $region34: #{tpu_custom_call.1} parent=11 // pred_check_branch
          %351 = sbr.rel (%p349) target = $region36
        $region35: #{tpu_custom_call.1} parent=11 // pred_region
          _
        $region36: #{tpu_custom_call.1} parent=11 // pred_fallthru
          _
        // Predicated region
        $region37: #{tpu_custom_call.1} parent=11 // pred_check
          %p352 = pneg %p272
        $region38: #{tpu_custom_call.1} parent=11 // pred_check_branch
          %354 = sbr.rel (%p352) target = $region40
        $region39: #{tpu_custom_call.1} parent=11 // pred_region
          _
        $region40: #{tpu_custom_call.1} parent=11 // pred_fallthru
          _
        // Predicated region
        $region41: #{tpu_custom_call.1} parent=11 // pred_check
          %p355 = pneg %p293
        $region42: #{tpu_custom_call.1} parent=11 // pred_check_branch
          %357 = sbr.rel (%p355) target = $region44
        $region43: #{tpu_custom_call.1} parent=11 // pred_region
          _
        $region44: #{tpu_custom_call.1} parent=11 // pred_fallthru
          _
      $region12: #{tpu_custom_call.1} parent=5 // pred_fallthru
        _
      %p358 = scmp.lt.s32.totalorder %s21, 2
      // Predicated region
      $region45: #{tpu_custom_call.1} parent=5 // pred_check
        %p359 = pneg %p358
      $region46: #{tpu_custom_call.1} parent=5 // pred_check_branch
        %361 = sbr.rel (%p359) target = $region48
      $region47: #{tpu_custom_call.1} parent=5 // pred_region
        // Predicated region
        $region49: #{tpu_custom_call.1} parent=47 // pred_check
          %p362 = pneg %p41
        $region50: #{tpu_custom_call.1} parent=47 // pred_check_branch
          %364 = sbr.rel (%p362) target = $region52
        $region51: #{tpu_custom_call.1} parent=47 // pred_region
          %p365 = scmp.lt.s32.totalorder %s21, 1
          %s366 = scalar_select %p365, %s21, 1
          %s367 = smul.addr %s366, 4
          %s368 = scalar_lea.vmem %s0, %s367
        $region52: #{tpu_custom_call.1} parent=47 // pred_fallthru
          _
        // Predicated region
        $region53: #{tpu_custom_call.1} parent=47 // pred_check
          %p369 = pneg %p67
        $region54: #{tpu_custom_call.1} parent=47 // pred_check_branch
          %371 = sbr.rel (%p369) target = $region56
        $region55: #{tpu_custom_call.1} parent=47 // pred_region
          %s372 = smul.u32 8, %s21
          %p373 = scmp.lt.s32.totalorder %s372, 15
          %s374 = scalar_select %p373, %s372, 15
          %s375 = smul.addr %s374, 4
          %s376 = scalar_lea.vmem %s1, %s375
          %s377 = smul.u32 8, %s21
        $region56: #{tpu_custom_call.1} parent=47 // pred_fallthru
          _
        // Predicated region
        $region57: #{tpu_custom_call.1} parent=47 // pred_check
          %p378 = pneg %p93
        $region58: #{tpu_custom_call.1} parent=47 // pred_check_branch
          %380 = sbr.rel (%p378) target = $region60
        $region59: #{tpu_custom_call.1} parent=47 // pred_region
          %s381 = smul.u32 8, %s21
          %p382 = scmp.lt.s32.totalorder %s381, 15
          %s383 = scalar_select %p382, %s381, 15
          %s384 = smul.addr %s383, 4
          %s385 = scalar_lea.vmem %s2, %s384
          %s386 = smul.u32 8, %s21
        $region60: #{tpu_custom_call.1} parent=47 // pred_fallthru
          _
        // Predicated region
        $region61: #{tpu_custom_call.1} parent=47 // pred_check
          %p387 = pneg %p119
        $region62: #{tpu_custom_call.1} parent=47 // pred_check_branch
          %389 = sbr.rel (%p387) target = $region64
        $region63: #{tpu_custom_call.1} parent=47 // pred_region
          %s390 = smul.u32 8, %s21
          %p391 = scmp.lt.s32.totalorder %s390, 15
          %s392 = scalar_select %p391, %s390, 15
          %s393 = smul.addr %s392, 8
          %s394 = scalar_lea.vmem %s3, %s393
          %s395 = smul.u32 8, %s21
        $region64: #{tpu_custom_call.1} parent=47 // pred_fallthru
          _
      $region48: #{tpu_custom_call.1} parent=5 // pred_fallthru
        _
      %p396 = scmp.le.s32.totalorder 1, %s21
      %p397 = scmp.lt.s32.totalorder %s21, 3
      %p398 = pnand %p396, %p397
      %p399 = pneg %p398
      // Predicated region
      $region65: #{tpu_custom_call.1} parent=5 // pred_check
        _
      $region66: #{tpu_custom_call.1} parent=5 // pred_check_branch
        %401 = sbr.rel (%p398) target = $region68
      $region67: #{tpu_custom_call.1} parent=5 // pred_region
        %s402 = ssub.s32 %s21, 1
        %p403 = scmp.lt.s32.totalorder %s26, 1
        %s404 = scalar_select %p403, %s26, 1
        %s405 = smul.addr %s404, 4
        %s406 = scalar_lea.vmem %s0, %s405
        %p407 = pneg %p47
        %p408 = pneg %p44
        %s409 = smul.u32 8, %s26
        %p410 = scmp.lt.s32.totalorder %s409, 15
        %s411 = scalar_select %p410, %s409, 15
        %s412 = smul.addr %s411, 4
        %s413 = scalar_lea.vmem %s1, %s412
        %p414 = pneg %p73
        %p415 = pneg %p70
        %s416 = smul.u32 8, %s26
        %p417 = scmp.lt.s32.totalorder %s416, 15
        %s418 = scalar_select %p417, %s416, 15
        %s419 = smul.addr %s418, 4
        %s420 = scalar_lea.vmem %s2, %s419
        %p421 = pneg %p99
        %p422 = pneg %p96
        %s423 = smul.u32 8, %s26
        %p424 = scmp.lt.s32.totalorder %s423, 15
        %s425 = scalar_select %p424, %s423, 15
        %s426 = smul.addr %s425, 8
        %s427 = scalar_lea.vmem %s3, %s426
        %p428 = pneg %p125
        %p429 = pneg %p122
        %p430 = pneg %p146
        %p431 = pneg %p143
        %p432 = pneg %p167
        %p433 = pneg %p164
        %p434 = pneg %p188
        %p435 = pneg %p185
        %p436 = pneg %p209
        %p437 = pneg %p206
        %p438 = pneg %p230
        %p439 = pneg %p227
        %p440 = pneg %p251
        %p441 = pneg %p248
        %p442 = pneg %p272
        %p443 = pneg %p269
        %p444 = pneg %p293
        %p445 = pneg %p290
        %p446 = pneg %p319
        %p447 = pneg %p316
        %s448 = sand.u32 %s306, 1
        %s449 = scalar_lea.sflag [#allocation3], %s448
        %s450 = sand.u32 %s306, 1
        %s451 = smul.addr %s450, 8
        %s452 = scalar_lea.vmem [#allocation2], %s451
        %p453 = scmp.lt.s32.totalorder %s26, 1
        %s454 = scalar_select %p453, %s26, 1
        %s455 = smul.addr %s454, 4
        %s456 = scalar_lea.vmem %s0, %s455
        %s457 = smul.u32 8, %s26
        %p458 = scmp.lt.s32.totalorder %s457, 15
        %s459 = scalar_select %p458, %s457, 15
        %s460 = smul.addr %s459, 4
        %s461 = scalar_lea.vmem %s1, %s460
        %s462 = smul.u32 8, %s26
        %s463 = smul.u32 8, %s26
        %p464 = scmp.lt.s32.totalorder %s463, 15
        %s465 = scalar_select %p464, %s463, 15
        %s466 = smul.addr %s465, 4
        %s467 = scalar_lea.vmem %s2, %s466
        %s468 = smul.u32 8, %s26
        %s469 = smul.u32 8, %s26
        %p470 = scmp.lt.s32.totalorder %s469, 15
        %s471 = scalar_select %p470, %s469, 15
        %s472 = smul.addr %s471, 8
        %s473 = scalar_lea.vmem %s3, %s472
        %s474 = smul.u32 8, %s26
        %v476 = vld [vmem:[%s456] sm:$0xf]
        %v477 = vld [vmem:[%s4] sm:$0xf]
        %v478 = vld [vmem:[%s4 + $0x4] sm:$0xf]
        %v479 = vld [vmem:[%s4 + $0x8] sm:$0xf]
        %v480 = vld [vmem:[%s4 + $0xc] sm:$0xf]
        %v481 = vld [vmem:[%s5] sm:$0x1]
        %v483 = vlaneseq
        %v484 = vshrl.u32 %v483, 7
        %v485 = vsub.s32 0, %v484
        %v486 = vrot.slane %v481, %v485
        %v492 = vunpack.c.l.b16 %v477
        %v493 = vunpack.c.l.b16 %v478
        %v494 = vunpack.c.l.b16 %v479
        %v495 = vunpack.c.l.b16 %v480
        %v496 = vpack.c.b16 %v493, %v492
        %v497 = vpack.c.b16 %v495, %v494
        %vm500 = vcmask 261120
        %v502 = vsel %vm500, %v476, 0
        %504 = vmatprep.subr.bf16.mxu0 0
        %505 = vmatpush1.bf16.msra.mxu0 %v496
        %506 = vmatprep.subr.bf16.mxu0 0
        %507 = vmatpush1.bf16.msra.mxu0 %v497
        %508 = vmatprep.subr.bf16.mxu0 0
        %509 = vmatpush1.bf16.msra.mxu0 0
        %510 = vmatprep.subr.bf16.mxu0 0
        %511 = vmatpush1.bf16.msra.mxu0 0
        %512 = vmatprep.subr.bf16.mxu0 0
        %513 = vmatpush1.bf16.msra.mxu0 0
        %514 = vmatprep.subr.bf16.mxu0 0
        %515 = vmatpush1.bf16.msra.mxu0 0
        %516 = vmatprep.subr.bf16.mxu0 0
        %517 = vmatpush1.bf16.msra.mxu0 0
        %518 = vmatprep.subr.bf16.mxu0 0
        %519 = vmatpush1.bf16.msra.mxu0 0
        %520 = vmatprep.subr.bf16.mxu0 0
        %521 = vmatpush1.bf16.msra.mxu0 0
        %522 = vmatprep.subr.bf16.mxu0 0
        %523 = vmatpush1.bf16.msra.mxu0 0
        %524 = vmatprep.subr.bf16.mxu0 0
        %525 = vmatpush1.bf16.msra.mxu0 0
        %526 = vmatprep.subr.bf16.mxu0 0
        %527 = vmatpush1.bf16.msra.mxu0 0
        %528 = vmatprep.subr.bf16.mxu0 0
        %529 = vmatpush1.bf16.msra.mxu0 0
        %530 = vmatprep.subr.bf16.mxu0 0
        %531 = vmatpush1.bf16.msra.mxu0 0
        %532 = vmatprep.subr.bf16.mxu0 0
        %533 = vmatpush1.bf16.msra.mxu0 0
        %534 = vmatprep.subr.bf16.mxu0 0
        %535 = vmatpush1.bf16.msra.mxu0 0
        %536 = vmatprep.mubr.bf16.mxu0 0
        %537 = vmatmul.mubr.bf16.gmra.mrb[0].mxu0 %v502
        %v538 = vpop.f32.mrb[0].mxu0
        %v539 = vadd.f32 %v486, %v538
        %v540 = vpop.f32.mrb[0].mxu0
        %v541 = vpop.f32.mrb[0].mxu0
        %v542 = vpop.f32.mrb[0].mxu0
        %543 = vdwg.mxu0
        %v544 = vld [vmem:[%s461] sm:$0xf]
        %v545 = vld [vmem:[%s461 + $0x4] sm:$0xf]
        %v546 = vld [vmem:[%s461 + $0x8] sm:$0xf]
        %v547 = vld [vmem:[%s461 + $0xc] sm:$0xf]
        %v548 = vld [vmem:[%s461 + $0x10] sm:$0xf]
        %v549 = vld [vmem:[%s461 + $0x14] sm:$0xf]
        %v550 = vld [vmem:[%s461 + $0x18] sm:$0xf]
        %v551 = vld [vmem:[%s461 + $0x1c] sm:$0xf]
        %v552 = vld [vmem:[%s6] sm:$0xf]
        %v553 = vld [vmem:[%s6 + $0x4] sm:$0xf]
        %v554 = vld [vmem:[%s6 + $0x8] sm:$0xf]
        %v555 = vld [vmem:[%s6 + $0xc] sm:$0xf]
        %v556 = vld [vmem:[%s7] sm:$0x1]
        %v558 = vlaneseq
        %v559 = vshrl.u32 %v558, 7
        %v560 = vsub.s32 0, %v559
        %v561 = vrot.slane %v556, %v560
        %v571 = vunpack.c.l.b16 %v544
        %v572 = vunpack.c.l.b16 %v545
        %v573 = vunpack.c.l.b16 %v546
        %v574 = vunpack.c.l.b16 %v547
        %v575 = vunpack.c.l.b16 %v548
        %v576 = vunpack.c.l.b16 %v549
        %v577 = vunpack.c.l.b16 %v550
        %v578 = vunpack.c.l.b16 %v551
        %v579 = vpack.c.b16 %v572, %v571
        %v580 = vpack.c.b16 %v574, %v573
        %v581 = vpack.c.b16 %v576, %v575
        %v582 = vpack.c.b16 %v578, %v577
        %v587 = vunpack.c.l.b16 %v552
        %v588 = vunpack.c.l.b16 %v553
        %v589 = vunpack.c.l.b16 %v554
        %v590 = vunpack.c.l.b16 %v555
        %v591 = vpack.c.b16 %v588, %v587
        %v592 = vpack.c.b16 %v590, %v589
        %v596 = vsel %vm500, %v579, 0
        %v599 = vsel %vm500, %v580, 0
        %v602 = vsel %vm500, %v581, 0
        %v605 = vsel %vm500, %v582, 0
        %607 = vmatprep.subr.bf16.mxu0 0
        %608 = vmatpush1.bf16.msra.mxu0 %v591
        %609 = vmatprep.subr.bf16.mxu0 0
        %610 = vmatpush1.bf16.msra.mxu0 %v592
        %611 = vmatprep.subr.bf16.mxu0 0
        %612 = vmatpush1.bf16.msra.mxu0 0
        %613 = vmatprep.subr.bf16.mxu0 0
        %614 = vmatpush1.bf16.msra.mxu0 0
        %615 = vmatprep.subr.bf16.mxu0 0
        %616 = vmatpush1.bf16.msra.mxu0 0
        %617 = vmatprep.subr.bf16.mxu0 0
        %618 = vmatpush1.bf16.msra.mxu0 0
        %619 = vmatprep.subr.bf16.mxu0 0
        %620 = vmatpush1.bf16.msra.mxu0 0
        %621 = vmatprep.subr.bf16.mxu0 0
        %622 = vmatpush1.bf16.msra.mxu0 0
        %623 = vmatprep.subr.bf16.mxu0 0
        %624 = vmatpush1.bf16.msra.mxu0 0
        %625 = vmatprep.subr.bf16.mxu0 0
        %626 = vmatpush1.bf16.msra.mxu0 0
        %627 = vmatprep.subr.bf16.mxu0 0
        %628 = vmatpush1.bf16.msra.mxu0 0
        %629 = vmatprep.subr.bf16.mxu0 0
        %630 = vmatpush1.bf16.msra.mxu0 0
        %631 = vmatprep.subr.bf16.mxu0 0
        %632 = vmatpush1.bf16.msra.mxu0 0
        %633 = vmatprep.subr.bf16.mxu0 0
        %634 = vmatpush1.bf16.msra.mxu0 0
        %635 = vmatprep.subr.bf16.mxu0 0
        %636 = vmatpush1.bf16.msra.mxu0 0
        %637 = vmatprep.subr.bf16.mxu0 0
        %638 = vmatpush1.bf16.msra.mxu0 0
        %639 = vmatprep.mubr.bf16.mxu0 0
        %640 = vmatmul.mubr.bf16.gmra.mrb[0].mxu0 %v596
        %v641 = vpop.f32.mrb[0].mxu0
        %v642 = vadd.f32 %v561, %v641
        %v643 = vpop.f32.mrb[0].mxu0
        %v644 = vpop.f32.mrb[0].mxu0
        %v645 = vadd.f32 %v561, %v644
        %v646 = vpop.f32.mrb[0].mxu0
        %647 = vmatprep.mubr.bf16.mxu0 0
        %648 = vmatmul.mubr.bf16.gmra.mrb[0].mxu0 %v599
        %v649 = vpop.f32.mrb[0].mxu0
        %v650 = vadd.f32 %v561, %v649
        %v651 = vpop.f32.mrb[0].mxu0
        %v652 = vpop.f32.mrb[0].mxu0
        %v653 = vadd.f32 %v561, %v652
        %v654 = vpop.f32.mrb[0].mxu0
        %655 = vmatprep.mubr.bf16.mxu0 0
        %656 = vmatmul.mubr.bf16.gmra.mrb[0].mxu0 %v602
        %v657 = vpop.f32.mrb[0].mxu0
        %v658 = vadd.f32 %v561, %v657
        %v659 = vpop.f32.mrb[0].mxu0
        %v660 = vpop.f32.mrb[0].mxu0
        %v661 = vadd.f32 %v561, %v660
        %v662 = vpop.f32.mrb[0].mxu0
        %663 = vmatprep.mubr.bf16.mxu0 0
        %664 = vmatmul.mubr.bf16.gmra.mrb[0].mxu0 %v605
        %v665 = vpop.f32.mrb[0].mxu0
        %v666 = vadd.f32 %v561, %v665
        %v667 = vpop.f32.mrb[0].mxu0
        %v668 = vpop.f32.mrb[0].mxu0
        %v669 = vadd.f32 %v561, %v668
        %v670 = vpop.f32.mrb[0].mxu0
        %671 = vdwg.mxu0
        %v672 = vld [vmem:[%s467] sm:$0xf]
        %v673 = vld [vmem:[%s467 + $0x4] sm:$0xf]
        %v674 = vld [vmem:[%s467 + $0x8] sm:$0xf]
        %v675 = vld [vmem:[%s467 + $0xc] sm:$0xf]
        %v676 = vld [vmem:[%s467 + $0x10] sm:$0xf]
        %v677 = vld [vmem:[%s467 + $0x14] sm:$0xf]
        %v678 = vld [vmem:[%s467 + $0x18] sm:$0xf]
        %v679 = vld [vmem:[%s467 + $0x1c] sm:$0xf]
        %v680 = vld [vmem:[%s8] sm:$0xf]
        %v681 = vld [vmem:[%s8 + $0x4] sm:$0xf]
        %v682 = vld [vmem:[%s8 + $0x8] sm:$0xf]
        %v683 = vld [vmem:[%s8 + $0xc] sm:$0xf]
        %v684 = vld [vmem:[%s9] sm:$0x1]
        %v686 = vlaneseq
        %v687 = vshrl.u32 %v686, 7
        %v688 = vsub.s32 0, %v687
        %v689 = vrot.slane %v684, %v688
        %v699 = vunpack.c.l.b16 %v672
        %v700 = vunpack.c.l.b16 %v673
        %v701 = vunpack.c.l.b16 %v674
        %v702 = vunpack.c.l.b16 %v675
        %v703 = vunpack.c.l.b16 %v676
        %v704 = vunpack.c.l.b16 %v677
        %v705 = vunpack.c.l.b16 %v678
        %v706 = vunpack.c.l.b16 %v679
        %v707 = vpack.c.b16 %v700, %v699
        %v708 = vpack.c.b16 %v702, %v701
        %v709 = vpack.c.b16 %v704, %v703
        %v710 = vpack.c.b16 %v706, %v705
        %v715 = vunpack.c.l.b16 %v680
        %v716 = vunpack.c.l.b16 %v681
        %v717 = vunpack.c.l.b16 %v682
        %v718 = vunpack.c.l.b16 %v683
        %v719 = vpack.c.b16 %v716, %v715
        %v720 = vpack.c.b16 %v718, %v717
        %v724 = vsel %vm500, %v707, 0
        %v727 = vsel %vm500, %v708, 0
        %v730 = vsel %vm500, %v709, 0
        %v733 = vsel %vm500, %v710, 0
        %735 = vmatprep.subr.bf16.mxu0 0
        %736 = vmatpush1.bf16.msra.mxu0 %v719
        %737 = vmatprep.subr.bf16.mxu0 0
        %738 = vmatpush1.bf16.msra.mxu0 %v720
        %739 = vmatprep.subr.bf16.mxu0 0
        %740 = vmatpush1.bf16.msra.mxu0 0
        %741 = vmatprep.subr.bf16.mxu0 0
        %742 = vmatpush1.bf16.msra.mxu0 0
        %743 = vmatprep.subr.bf16.mxu0 0
        %744 = vmatpush1.bf16.msra.mxu0 0
        %745 = vmatprep.subr.bf16.mxu0 0
        %746 = vmatpush1.bf16.msra.mxu0 0
        %747 = vmatprep.subr.bf16.mxu0 0
        %748 = vmatpush1.bf16.msra.mxu0 0
        %749 = vmatprep.subr.bf16.mxu0 0
        %750 = vmatpush1.bf16.msra.mxu0 0
        %751 = vmatprep.subr.bf16.mxu0 0
        %752 = vmatpush1.bf16.msra.mxu0 0
        %753 = vmatprep.subr.bf16.mxu0 0
        %754 = vmatpush1.bf16.msra.mxu0 0
        %755 = vmatprep.subr.bf16.mxu0 0
        %756 = vmatpush1.bf16.msra.mxu0 0
        %757 = vmatprep.subr.bf16.mxu0 0
        %758 = vmatpush1.bf16.msra.mxu0 0
        %759 = vmatprep.subr.bf16.mxu0 0
        %760 = vmatpush1.bf16.msra.mxu0 0
        %761 = vmatprep.subr.bf16.mxu0 0
        %762 = vmatpush1.bf16.msra.mxu0 0
        %763 = vmatprep.subr.bf16.mxu0 0
        %764 = vmatpush1.bf16.msra.mxu0 0
        %765 = vmatprep.subr.bf16.mxu0 0
        %766 = vmatpush1.bf16.msra.mxu0 0
        %767 = vmatprep.mubr.bf16.mxu0 0
        %768 = vmatmul.mubr.bf16.gmra.mrb[0].mxu0 %v724
        %v769 = vpop.f32.mrb[0].mxu0
        %v770 = vadd.f32 %v689, %v769
        %v771 = vpop.f32.mrb[0].mxu0
        %v772 = vpop.f32.mrb[0].mxu0
        %v773 = vadd.f32 %v689, %v772
        %v774 = vpop.f32.mrb[0].mxu0
        %775 = vmatprep.mubr.bf16.mxu0 0
        %776 = vmatmul.mubr.bf16.gmra.mrb[0].mxu0 %v727
        %v777 = vpop.f32.mrb[0].mxu0
        %v778 = vadd.f32 %v689, %v777
        %v779 = vpop.f32.mrb[0].mxu0
        %v780 = vpop.f32.mrb[0].mxu0
        %v781 = vadd.f32 %v689, %v780
        %v782 = vpop.f32.mrb[0].mxu0
        %783 = vmatprep.mubr.bf16.mxu0 0
        %784 = vmatmul.mubr.bf16.gmra.mrb[0].mxu0 %v730
        %v785 = vpop.f32.mrb[0].mxu0
        %v786 = vadd.f32 %v689, %v785
        %v787 = vpop.f32.mrb[0].mxu0
        %v788 = vpop.f32.mrb[0].mxu0
        %v789 = vadd.f32 %v689, %v788
        %v790 = vpop.f32.mrb[0].mxu0
        %791 = vmatprep.mubr.bf16.mxu0 0
        %792 = vmatmul.mubr.bf16.gmra.mrb[0].mxu0 %v733
        %v793 = vpop.f32.mrb[0].mxu0
        %v794 = vadd.f32 %v689, %v793
        %v795 = vpop.f32.mrb[0].mxu0
        %v796 = vpop.f32.mrb[0].mxu0
        %v797 = vadd.f32 %v689, %v796
        %v798 = vpop.f32.mrb[0].mxu0
        %799 = vdwg.mxu0
        %v801 = vcombine.high %v539, %v539
        %v803 = vunpack.c.l.s4 1966171168
        %v804 = vunpack.c.0.s8 %v803
        %v805 = vlaneseq
        %v806 = vshrl.u32 %v805, 7
        %v807 = vsub.s32 %v804, %v806
        %v808 = vrot.slane %v539, %v807
        %v810 = vunpack.c.l.s4 1966171168
        %v811 = vunpack.c.0.s8 %v810
        %v812 = vlaneseq
        %v813 = vshrl.u32 %v812, 7
        %v814 = vsub.s32 %v811, %v813
        %v815 = vrot.slane %v801, %v814
        %v816 = vcombine.high %v808, %v808
        %v817 = vcombine.high %v815, %v815
        %v819 = vunpack.c.l.s4 1966171168
        %v820 = vunpack.c.0.s8 %v819
        %v821 = vlaneseq
        %v822 = vshrl.u32 %v821, 7
        %v823 = vsub.s32 %v820, %v822
        %v824 = vrot.slane %v808, %v823
        %v826 = vunpack.c.l.s4 1966171168
        %v827 = vunpack.c.0.s8 %v826
        %v828 = vlaneseq
        %v829 = vshrl.u32 %v828, 7
        %v830 = vsub.s32 %v827, %v829
        %v831 = vrot.slane %v815, %v830
        %v833 = vunpack.c.l.s4 1966171168
        %v834 = vunpack.c.0.s8 %v833
        %v835 = vlaneseq
        %v836 = vshrl.u32 %v835, 7
        %v837 = vsub.s32 %v834, %v836
        %v838 = vrot.slane %v816, %v837
        %v840 = vunpack.c.l.s4 1966171168
        %v841 = vunpack.c.0.s8 %v840
        %v842 = vlaneseq
        %v843 = vshrl.u32 %v842, 7
        %v844 = vsub.s32 %v841, %v843
        %v845 = vrot.slane %v817, %v844
        %v846 = vcombine.high %v824, %v824
        %v847 = vcombine.high %v831, %v831
        %v848 = vcombine.high %v838, %v838
        %v849 = vcombine.high %v845, %v845
        %v850 = vlaneseq
        %v851 = vshrl.u32 %v850, 7
        %v852 = vsub.s32 0, %v851
        %v853 = vrot.slane %v824, %v852
        %v854 = vlaneseq
        %v855 = vshrl.u32 %v854, 7
        %v856 = vsub.s32 0, %v855
        %v857 = vrot.slane %v838, %v856
        %v858 = vlaneseq
        %v859 = vshrl.u32 %v858, 7
        %v860 = vsub.s32 0, %v859
        %v861 = vrot.slane %v846, %v860
        %v862 = vlaneseq
        %v863 = vshrl.u32 %v862, 7
        %v864 = vsub.s32 0, %v863
        %v865 = vrot.slane %v848, %v864
        %v866 = vlaneseq
        %v867 = vshrl.u32 %v866, 7
        %v868 = vsub.s32 0, %v867
        %v869 = vrot.slane %v831, %v868
        %v870 = vlaneseq
        %v871 = vshrl.u32 %v870, 7
        %v872 = vsub.s32 0, %v871
        %v873 = vrot.slane %v845, %v872
        %v874 = vlaneseq
        %v875 = vshrl.u32 %v874, 7
        %v876 = vsub.s32 0, %v875
        %v877 = vrot.slane %v847, %v876
        %v878 = vlaneseq
        %v879 = vshrl.u32 %v878, 7
        %v880 = vsub.s32 0, %v879
        %v881 = vrot.slane %v849, %v880
        %v890 = vmul.f32 %v853, %v642
        %v891 = vmul.f32 %v857, %v645
        %v892 = vmul.f32 %v861, %v650
        %v893 = vmul.f32 %v865, %v653
        %v894 = vmul.f32 %v869, %v658
        %v895 = vmul.f32 %v873, %v661
        %v896 = vmul.f32 %v877, %v666
        %v897 = vmul.f32 %v881, %v669
        %v898 = vld [vmem:[%s10] sm:$0xff]
        %v899 = vld [vmem:[%s10 + $0x8] sm:$0xff]
        %v900 = vld [vmem:[%s10 + $0x10] sm:$0xff]
        %v901 = vld [vmem:[%s10 + $0x18] sm:$0xff]
        %v903 = vsel %vm500, %v890, 0
        %v906 = vsel %vm500, %v891, 0
        %v909 = vsel %vm500, %v892, 0
        %v912 = vsel %vm500, %v893, 0
        %v915 = vsel %vm500, %v894, 0
        %v918 = vsel %vm500, %v895, 0
        %v921 = vsel %vm500, %v896, 0
        %v924 = vsel %vm500, %v897, 0
        %926 = vmatprep.subr.mxu0 0.0
        %927 = vmatpush1.msra.mxu0 %v898
        %928 = vmatprep.subr.mxu0 0.0
        %929 = vmatpush1.msra.mxu0 %v899
        %930 = vmatprep.subr.mxu0 0.0
        %931 = vmatpush1.msra.mxu0 %v900
        %932 = vmatprep.subr.mxu0 0.0
        %933 = vmatpush1.msra.mxu0 %v901
        %934 = vmatprep.subr.mxu0 0.0
        %935 = vmatpush1.msra.mxu0 0.0
        %936 = vmatprep.subr.mxu0 0.0
        %937 = vmatpush1.msra.mxu0 0.0
        %938 = vmatprep.subr.mxu0 0.0
        %939 = vmatpush1.msra.mxu0 0.0
        %940 = vmatprep.subr.mxu0 0.0
        %941 = vmatpush1.msra.mxu0 0.0
        %942 = vmatprep.subr.mxu0 0.0
        %943 = vmatpush1.msra.mxu0 0.0
        %944 = vmatprep.subr.mxu0 0.0
        %945 = vmatpush1.msra.mxu0 0.0
        %946 = vmatprep.subr.mxu0 0.0
        %947 = vmatpush1.msra.mxu0 0.0
        %948 = vmatprep.subr.mxu0 0.0
        %949 = vmatpush1.msra.mxu0 0.0
        %950 = vmatprep.subr.mxu0 0.0
        %951 = vmatpush1.msra.mxu0 0.0
        %952 = vmatprep.subr.mxu0 0.0
        %953 = vmatpush1.msra.mxu0 0.0
        %954 = vmatprep.subr.mxu0 0.0
        %955 = vmatpush1.msra.mxu0 0.0
        %956 = vmatprep.subr.mxu0 0.0
        %957 = vmatpush1.msra.mxu0 0.0
        %958 = vmatprep.subr.mxu0 0.0
        %959 = vmatpush1.msra.mxu0 0.0
        %960 = vmatprep.subr.mxu0 0.0
        %961 = vmatpush1.msra.mxu0 0.0
        %962 = vmatprep.subr.mxu0 0.0
        %963 = vmatpush1.msra.mxu0 0.0
        %964 = vmatprep.subr.mxu0 0.0
        %965 = vmatpush1.msra.mxu0 0.0
        %966 = vmatprep.subr.mxu0 0.0
        %967 = vmatpush1.msra.mxu0 0.0
        %968 = vmatprep.subr.mxu0 0.0
        %969 = vmatpush1.msra.mxu0 0.0
        %970 = vmatprep.subr.mxu0 0.0
        %971 = vmatpush1.msra.mxu0 0.0
        %972 = vmatprep.subr.mxu0 0.0
        %973 = vmatpush1.msra.mxu0 0.0
        %974 = vmatprep.subr.mxu0 0.0
        %975 = vmatpush1.msra.mxu0 0.0
        %976 = vmatprep.subr.mxu0 0.0
        %977 = vmatpush1.msra.mxu0 0.0
        %978 = vmatprep.subr.mxu0 0.0
        %979 = vmatpush1.msra.mxu0 0.0
        %980 = vmatprep.subr.mxu0 0.0
        %981 = vmatpush1.msra.mxu0 0.0
        %982 = vmatprep.subr.mxu0 0.0
        %983 = vmatpush1.msra.mxu0 0.0
        %984 = vmatprep.subr.mxu0 0.0
        %985 = vmatpush1.msra.mxu0 0.0
        %986 = vmatprep.subr.mxu0 0.0
        %987 = vmatpush1.msra.mxu0 0.0
        %988 = vmatprep.subr.mxu0 0.0
        %989 = vmatpush1.msra.mxu0 0.0
        %990 = vmatprep.mubr.f32.mxu0 0.0
        %991 = vmatmul.mubr.f32.gmra.mrb[0].mxu0 %v903
        %v992 = vpop.f32.mrb[0].mxu0
        %v993 = vadd.f32 0.0, %v992
        %v994 = vpop.f32.mrb[0].mxu0
        %995 = vmatprep.mubr.f32.mxu0 0.0
        %996 = vmatmul.mubr.f32.gmra.mrb[0].mxu0 %v906
        %v997 = vpop.f32.mrb[0].mxu0
        %v998 = vadd.f32 0.0, %v997
        %v999 = vpop.f32.mrb[0].mxu0
        %1000 = vmatprep.mubr.f32.mxu0 0.0
        %1001 = vmatmul.mubr.f32.gmra.mrb[0].mxu0 %v909
        %v1002 = vpop.f32.mrb[0].mxu0
        %v1003 = vadd.f32 0.0, %v1002
        %v1004 = vpop.f32.mrb[0].mxu0
        %1005 = vmatprep.mubr.f32.mxu0 0.0
        %1006 = vmatmul.mubr.f32.gmra.mrb[0].mxu0 %v912
        %v1007 = vpop.f32.mrb[0].mxu0
        %v1008 = vadd.f32 0.0, %v1007
        %v1009 = vpop.f32.mrb[0].mxu0
        %1010 = vmatprep.mubr.f32.mxu0 0.0
        %1011 = vmatmul.mubr.f32.gmra.mrb[0].mxu0 %v915
        %v1012 = vpop.f32.mrb[0].mxu0
        %v1013 = vadd.f32 0.0, %v1012
        %v1014 = vpop.f32.mrb[0].mxu0
        %1015 = vmatprep.mubr.f32.mxu0 0.0
        %1016 = vmatmul.mubr.f32.gmra.mrb[0].mxu0 %v918
        %v1017 = vpop.f32.mrb[0].mxu0
        %v1018 = vadd.f32 0.0, %v1017
        %v1019 = vpop.f32.mrb[0].mxu0
        %1020 = vmatprep.mubr.f32.mxu0 0.0
        %1021 = vmatmul.mubr.f32.gmra.mrb[0].mxu0 %v921
        %v1022 = vpop.f32.mrb[0].mxu0
        %v1023 = vadd.f32 0.0, %v1022
        %v1024 = vpop.f32.mrb[0].mxu0
        %1025 = vmatprep.mubr.f32.mxu0 0.0
        %1026 = vmatmul.mubr.f32.gmra.mrb[0].mxu0 %v924
        %v1027 = vpop.f32.mrb[0].mxu0
        %v1028 = vadd.f32 0.0, %v1027
        %v1029 = vpop.f32.mrb[0].mxu0
        %1030 = vdwg.mxu0
        %v1031 = vld [vmem:[%s473] sm:$0xff]
        %v1032 = vld [vmem:[%s473 + $0x8] sm:$0xff]
        %v1033 = vld [vmem:[%s473 + $0x10] sm:$0xff]
        %v1034 = vld [vmem:[%s473 + $0x18] sm:$0xff]
        %v1035 = vld [vmem:[%s473 + $0x20] sm:$0xff]
        %v1036 = vld [vmem:[%s473 + $0x28] sm:$0xff]
        %v1037 = vld [vmem:[%s473 + $0x30] sm:$0xff]
        %v1038 = vld [vmem:[%s473 + $0x38] sm:$0xff]
        %vm1039 = vcmask 31744
        %v1040 = vsel %vm1039, %v993, -inf
        %v1041 = vrot.slane %v1040, 4
        %v1042 = vmax.f32 %v1040, %v1041
        %v1043 = vrot.slane %v1042, 2
        %v1044 = vmax.f32 %v1042, %v1043
        %v1045 = vrot.slane %v1044, 1
        %v1046 = vmax.f32 %v1044, %v1045
        %v1047 = vsel %vm1039, %v998, -inf
        %v1048 = vrot.slane %v1047, 4
        %v1049 = vmax.f32 %v1047, %v1048
        %v1050 = vrot.slane %v1049, 2
        %v1051 = vmax.f32 %v1049, %v1050
        %v1052 = vrot.slane %v1051, 1
        %v1053 = vmax.f32 %v1051, %v1052
        %v1054 = vsel %vm1039, %v1003, -inf
        %v1055 = vrot.slane %v1054, 4
        %v1056 = vmax.f32 %v1054, %v1055
        %v1057 = vrot.slane %v1056, 2
        %v1058 = vmax.f32 %v1056, %v1057
        %v1059 = vrot.slane %v1058, 1
        %v1060 = vmax.f32 %v1058, %v1059
        %v1061 = vsel %vm1039, %v1008, -inf
        %v1062 = vrot.slane %v1061, 4
        %v1063 = vmax.f32 %v1061, %v1062
        %v1064 = vrot.slane %v1063, 2
        %v1065 = vmax.f32 %v1063, %v1064
        %v1066 = vrot.slane %v1065, 1
        %v1067 = vmax.f32 %v1065, %v1066
        %v1068 = vsel %vm1039, %v1013, -inf
        %v1069 = vrot.slane %v1068, 4
        %v1070 = vmax.f32 %v1068, %v1069
        %v1071 = vrot.slane %v1070, 2
        %v1072 = vmax.f32 %v1070, %v1071
        %v1073 = vrot.slane %v1072, 1
        %v1074 = vmax.f32 %v1072, %v1073
        %v1075 = vsel %vm1039, %v1018, -inf
        %v1076 = vrot.slane %v1075, 4
        %v1077 = vmax.f32 %v1075, %v1076
        %v1078 = vrot.slane %v1077, 2
        %v1079 = vmax.f32 %v1077, %v1078
        %v1080 = vrot.slane %v1079, 1
        %v1081 = vmax.f32 %v1079, %v1080
        %v1082 = vsel %vm1039, %v1023, -inf
        %v1083 = vrot.slane %v1082, 4
        %v1084 = vmax.f32 %v1082, %v1083
        %v1085 = vrot.slane %v1084, 2
        %v1086 = vmax.f32 %v1084, %v1085
        %v1087 = vrot.slane %v1086, 1
        %v1088 = vmax.f32 %v1086, %v1087
        %v1089 = vsel %vm1039, %v1028, -inf
        %v1090 = vrot.slane %v1089, 4
        %v1091 = vmax.f32 %v1089, %v1090
        %v1092 = vrot.slane %v1091, 2
        %v1093 = vmax.f32 %v1091, %v1092
        %v1094 = vrot.slane %v1093, 1
        %v1095 = vmax.f32 %v1093, %v1094
        %v1096 = vsub.f32 %v993, %v1046
        %v1097 = vsub.f32 %v998, %v1053
        %v1098 = vsub.f32 %v1003, %v1060
        %v1099 = vsub.f32 %v1008, %v1067
        %v1100 = vsub.f32 %v1013, %v1074
        %v1101 = vsub.f32 %v1018, %v1081
        %v1102 = vsub.f32 %v1023, %v1088
        %v1103 = vsub.f32 %v1028, %v1095
        %v1104 = vmul.f32 %v1096, 1.442695
        %v1105 = vpow.pop %v1104
        %v1106 = vmul.f32 %v1097, 1.442695
        %v1107 = vpow.pop %v1106
        %v1108 = vmul.f32 %v1098, 1.442695
        %v1109 = vpow.pop %v1108
        %v1110 = vmul.f32 %v1099, 1.442695
        %v1111 = vpow.pop %v1110
        %v1112 = vmul.f32 %v1100, 1.442695
        %v1113 = vpow.pop %v1112
        %v1114 = vmul.f32 %v1101, 1.442695
        %v1115 = vpow.pop %v1114
        %v1116 = vmul.f32 %v1102, 1.442695
        %v1117 = vpow.pop %v1116
        %v1118 = vmul.f32 %v1103, 1.442695
        %v1119 = vpow.pop %v1118
        %v1120 = vsel %vm1039, %v1105, 0.0
        %v1121 = vrot.slane %v1120, 4
        %v1122 = vadd.f32 %v1120, %v1121
        %v1123 = vrot.slane %v1122, 2
        %v1124 = vadd.f32 %v1122, %v1123
        %v1125 = vrot.slane %v1124, 1
        %v1126 = vadd.f32 %v1124, %v1125
        %v1127 = vsel %vm1039, %v1107, 0.0
        %v1128 = vrot.slane %v1127, 4
        %v1129 = vadd.f32 %v1127, %v1128
        %v1130 = vrot.slane %v1129, 2
        %v1131 = vadd.f32 %v1129, %v1130
        %v1132 = vrot.slane %v1131, 1
        %v1133 = vadd.f32 %v1131, %v1132
        %v1134 = vsel %vm1039, %v1109, 0.0
        %v1135 = vrot.slane %v1134, 4
        %v1136 = vadd.f32 %v1134, %v1135
        %v1137 = vrot.slane %v1136, 2
        %v1138 = vadd.f32 %v1136, %v1137
        %v1139 = vrot.slane %v1138, 1
        %v1140 = vadd.f32 %v1138, %v1139
        %v1141 = vsel %vm1039, %v1111, 0.0
        %v1142 = vrot.slane %v1141, 4
        %v1143 = vadd.f32 %v1141, %v1142
        %v1144 = vrot.slane %v1143, 2
        %v1145 = vadd.f32 %v1143, %v1144
        %v1146 = vrot.slane %v1145, 1
        %v1147 = vadd.f32 %v1145, %v1146
        %v1148 = vsel %vm1039, %v1113, 0.0
        %v1149 = vrot.slane %v1148, 4
        %v1150 = vadd.f32 %v1148, %v1149
        %v1151 = vrot.slane %v1150, 2
        %v1152 = vadd.f32 %v1150, %v1151
        %v1153 = vrot.slane %v1152, 1
        %v1154 = vadd.f32 %v1152, %v1153
        %v1155 = vsel %vm1039, %v1115, 0.0
        %v1156 = vrot.slane %v1155, 4
        %v1157 = vadd.f32 %v1155, %v1156
        %v1158 = vrot.slane %v1157, 2
        %v1159 = vadd.f32 %v1157, %v1158
        %v1160 = vrot.slane %v1159, 1
        %v1161 = vadd.f32 %v1159, %v1160
        %v1162 = vsel %vm1039, %v1117, 0.0
        %v1163 = vrot.slane %v1162, 4
        %v1164 = vadd.f32 %v1162, %v1163
        %v1165 = vrot.slane %v1164, 2
        %v1166 = vadd.f32 %v1164, %v1165
        %v1167 = vrot.slane %v1166, 1
        %v1168 = vadd.f32 %v1166, %v1167
        %v1169 = vsel %vm1039, %v1119, 0.0
        %v1170 = vrot.slane %v1169, 4
        %v1171 = vadd.f32 %v1169, %v1170
        %v1172 = vrot.slane %v1171, 2
        %v1173 = vadd.f32 %v1171, %v1172
        %v1174 = vrot.slane %v1173, 1
        %v1175 = vadd.f32 %v1173, %v1174
        %v1176 = vrcp.pop %v1126
        %v1177 = vrcp.pop %v1133
        %v1178 = vrcp.pop %v1140
        %v1179 = vrcp.pop %v1147
        %v1180 = vrcp.pop %v1154
        %v1181 = vrcp.pop %v1161
        %v1182 = vrcp.pop %v1168
        %v1183 = vrcp.pop %v1175
        %v1184 = vmul.f32 %v1105, %v1176
        %v1185 = vmul.f32 %v1107, %v1177
        %v1186 = vmul.f32 %v1109, %v1178
        %v1187 = vmul.f32 %v1111, %v1179
        %v1188 = vmul.f32 %v1113, %v1180
        %v1189 = vmul.f32 %v1115, %v1181
        %v1190 = vmul.f32 %v1117, %v1182
        %v1191 = vmul.f32 %v1119, %v1183
        %1193 = vset.pattern.permute.xlu0 0
        %1194 = vperm.xlu0 %1193, %v1031
        %v1195 = vpop.permute.xlu0 %1194
        %1198 = vset.pattern.permute.xlu0 0
        %1199 = vperm.xlu0 %1198, %v1032
        %v1200 = vpop.permute.xlu0 %1199
        %1203 = vset.pattern.permute.xlu0 0
        %1204 = vperm.xlu0 %1203, %v1033
        %v1205 = vpop.permute.xlu0 %1204
        %1208 = vset.pattern.permute.xlu0 0
        %1209 = vperm.xlu0 %1208, %v1034
        %v1210 = vpop.permute.xlu0 %1209
        %1213 = vset.pattern.permute.xlu0 0
        %1214 = vperm.xlu0 %1213, %v1035
        %v1215 = vpop.permute.xlu0 %1214
        %1218 = vset.pattern.permute.xlu0 0
        %1219 = vperm.xlu0 %1218, %v1036
        %v1220 = vpop.permute.xlu0 %1219
        %1223 = vset.pattern.permute.xlu0 0
        %1224 = vperm.xlu0 %1223, %v1037
        %v1225 = vpop.permute.xlu0 %1224
        %1228 = vset.pattern.permute.xlu0 0
        %1229 = vperm.xlu0 %1228, %v1038
        %v1230 = vpop.permute.xlu0 %1229
        %v1232 = vmul.f32 %v1184, %v1195
        %v1233 = vmul.f32 %v1185, %v1200
        %v1234 = vmul.f32 %v1186, %v1205
        %v1235 = vmul.f32 %v1187, %v1210
        %v1236 = vmul.f32 %v1188, %v1215
        %v1237 = vmul.f32 %v1189, %v1220
        %v1238 = vmul.f32 %v1190, %v1225
        %v1239 = vmul.f32 %v1191, %v1230
        %v1240 = vld [vmem:[%s11] sm:$0xf]
        %v1242 = vsel %vm1039, %v1232, 0
        %v1245 = vsel %vm1039, %v1233, 0
        %v1248 = vsel %vm1039, %v1234, 0
        %v1251 = vsel %vm1039, %v1235, 0
        %v1254 = vsel %vm1039, %v1236, 0
        %v1257 = vsel %vm1039, %v1237, 0
        %v1260 = vsel %vm1039, %v1238, 0
        %v1263 = vsel %vm1039, %v1239, 0
        %vm1265 = vcmask 1043456
        %v1267 = vsel %vm1265, %v1240, 0
        %1269 = vmatprep.subr.mxu0 0.0
        %1270 = vmatpush1.msra.mxu0 %v1267
        %1271 = vmatprep.subr.mxu0 0.0
        %1272 = vmatpush1.msra.mxu0 0.0
        %1273 = vmatprep.subr.mxu0 0.0
        %1274 = vmatpush1.msra.mxu0 0.0
        %1275 = vmatprep.subr.mxu0 0.0
        %1276 = vmatpush1.msra.mxu0 0.0
        %1277 = vmatprep.subr.mxu0 0.0
        %1278 = vmatpush1.msra.mxu0 0.0
        %1279 = vmatprep.subr.mxu0 0.0
        %1280 = vmatpush1.msra.mxu0 0.0
        %1281 = vmatprep.subr.mxu0 0.0
        %1282 = vmatpush1.msra.mxu0 0.0
        %1283 = vmatprep.subr.mxu0 0.0
        %1284 = vmatpush1.msra.mxu0 0.0
        %1285 = vmatprep.subr.mxu0 0.0
        %1286 = vmatpush1.msra.mxu0 0.0
        %1287 = vmatprep.subr.mxu0 0.0
        %1288 = vmatpush1.msra.mxu0 0.0
        %1289 = vmatprep.subr.mxu0 0.0
        %1290 = vmatpush1.msra.mxu0 0.0
        %1291 = vmatprep.subr.mxu0 0.0
        %1292 = vmatpush1.msra.mxu0 0.0
        %1293 = vmatprep.subr.mxu0 0.0
        %1294 = vmatpush1.msra.mxu0 0.0
        %1295 = vmatprep.subr.mxu0 0.0
        %1296 = vmatpush1.msra.mxu0 0.0
        %1297 = vmatprep.subr.mxu0 0.0
        %1298 = vmatpush1.msra.mxu0 0.0
        %1299 = vmatprep.subr.mxu0 0.0
        %1300 = vmatpush1.msra.mxu0 0.0
        %1301 = vmatprep.subr.mxu0 0.0
        %1302 = vmatpush1.msra.mxu0 0.0
        %1303 = vmatprep.subr.mxu0 0.0
        %1304 = vmatpush1.msra.mxu0 0.0
        %1305 = vmatprep.subr.mxu0 0.0
        %1306 = vmatpush1.msra.mxu0 0.0
        %1307 = vmatprep.subr.mxu0 0.0
        %1308 = vmatpush1.msra.mxu0 0.0
        %1309 = vmatprep.subr.mxu0 0.0
        %1310 = vmatpush1.msra.mxu0 0.0
        %1311 = vmatprep.subr.mxu0 0.0
        %1312 = vmatpush1.msra.mxu0 0.0
        %1313 = vmatprep.subr.mxu0 0.0
        %1314 = vmatpush1.msra.mxu0 0.0
        %1315 = vmatprep.subr.mxu0 0.0
        %1316 = vmatpush1.msra.mxu0 0.0
        %1317 = vmatprep.subr.mxu0 0.0
        %1318 = vmatpush1.msra.mxu0 0.0
        %1319 = vmatprep.subr.mxu0 0.0
        %1320 = vmatpush1.msra.mxu0 0.0
        %1321 = vmatprep.subr.mxu0 0.0
        %1322 = vmatpush1.msra.mxu0 0.0
        %1323 = vmatprep.subr.mxu0 0.0
        %1324 = vmatpush1.msra.mxu0 0.0
        %1325 = vmatprep.subr.mxu0 0.0
        %1326 = vmatpush1.msra.mxu0 0.0
        %1327 = vmatprep.subr.mxu0 0.0
        %1328 = vmatpush1.msra.mxu0 0.0
        %1329 = vmatprep.subr.mxu0 0.0
        %1330 = vmatpush1.msra.mxu0 0.0
        %1331 = vmatprep.subr.mxu0 0.0
        %1332 = vmatpush1.msra.mxu0 0.0
        %1333 = vmatprep.mubr.f32.mxu0 0.0
        %1334 = vmatmul.mubr.f32.gmra.mrb[0].mxu0 %v1242
        %v1335 = vpop.f32.mrb[0].mxu0
        %v1336 = vadd.f32 0.0, %v1335
        %v1337 = vpop.f32.mrb[0].mxu0
        %1338 = vmatprep.mubr.f32.mxu0 0.0
        %1339 = vmatmul.mubr.f32.gmra.mrb[0].mxu0 %v1245
        %v1340 = vpop.f32.mrb[0].mxu0
        %v1341 = vadd.f32 0.0, %v1340
        %v1342 = vpop.f32.mrb[0].mxu0
        %1343 = vmatprep.mubr.f32.mxu0 0.0
        %1344 = vmatmul.mubr.f32.gmra.mrb[0].mxu0 %v1248
        %v1345 = vpop.f32.mrb[0].mxu0
        %v1346 = vadd.f32 0.0, %v1345
        %v1347 = vpop.f32.mrb[0].mxu0
        %1348 = vmatprep.mubr.f32.mxu0 0.0
        %1349 = vmatmul.mubr.f32.gmra.mrb[0].mxu0 %v1251
        %v1350 = vpop.f32.mrb[0].mxu0
        %v1351 = vadd.f32 0.0, %v1350
        %v1352 = vpop.f32.mrb[0].mxu0
        %1353 = vmatprep.mubr.f32.mxu0 0.0
        %1354 = vmatmul.mubr.f32.gmra.mrb[0].mxu0 %v1254
        %v1355 = vpop.f32.mrb[0].mxu0
        %v1356 = vadd.f32 0.0, %v1355
        %v1357 = vpop.f32.mrb[0].mxu0
        %1358 = vmatprep.mubr.f32.mxu0 0.0
        %1359 = vmatmul.mubr.f32.gmra.mrb[0].mxu0 %v1257
        %v1360 = vpop.f32.mrb[0].mxu0
        %v1361 = vadd.f32 0.0, %v1360
        %v1362 = vpop.f32.mrb[0].mxu0
        %1363 = vmatprep.mubr.f32.mxu0 0.0
        %1364 = vmatmul.mubr.f32.gmra.mrb[0].mxu0 %v1260
        %v1365 = vpop.f32.mrb[0].mxu0
        %v1366 = vadd.f32 0.0, %v1365
        %v1367 = vpop.f32.mrb[0].mxu0
        %1368 = vmatprep.mubr.f32.mxu0 0.0
        %1369 = vmatmul.mubr.f32.gmra.mrb[0].mxu0 %v1263
        %v1370 = vpop.f32.mrb[0].mxu0
        %v1371 = vadd.f32 0.0, %v1370
        %v1372 = vpop.f32.mrb[0].mxu0
        %1373 = vdwg.mxu0
        %v1374 = vmul.f32 %v1336, %v770
        %v1375 = vmul.f32 %v1341, %v773
        %v1376 = vmul.f32 %v1346, %v778
        %v1377 = vmul.f32 %v1351, %v781
        %v1378 = vmul.f32 %v1356, %v786
        %v1379 = vmul.f32 %v1361, %v789
        %v1380 = vmul.f32 %v1366, %v794
        %v1381 = vmul.f32 %v1371, %v797
        %v1382 = vsel %vm500, %v1374, 0.0
        %v1383 = vrot.slane %v1382, 4
        %v1384 = vadd.f32 %v1382, %v1383
        %v1385 = vrot.slane %v1384, 2
        %v1386 = vadd.f32 %v1384, %v1385
        %v1387 = vrot.slane %v1386, 1
        %v1388 = vadd.f32 %v1386, %v1387
        %v1389 = vsel %vm500, %v1375, 0.0
        %v1390 = vrot.slane %v1389, 4
        %v1391 = vadd.f32 %v1389, %v1390
        %v1392 = vrot.slane %v1391, 2
        %v1393 = vadd.f32 %v1391, %v1392
        %v1394 = vrot.slane %v1393, 1
        %v1395 = vadd.f32 %v1393, %v1394
        %v1396 = vsel %vm500, %v1376, 0.0
        %v1397 = vrot.slane %v1396, 4
        %v1398 = vadd.f32 %v1396, %v1397
        %v1399 = vrot.slane %v1398, 2
        %v1400 = vadd.f32 %v1398, %v1399
        %v1401 = vrot.slane %v1400, 1
        %v1402 = vadd.f32 %v1400, %v1401
        %v1403 = vsel %vm500, %v1377, 0.0
        %v1404 = vrot.slane %v1403, 4
        %v1405 = vadd.f32 %v1403, %v1404
        %v1406 = vrot.slane %v1405, 2
        %v1407 = vadd.f32 %v1405, %v1406
        %v1408 = vrot.slane %v1407, 1
        %v1409 = vadd.f32 %v1407, %v1408
        %v1410 = vsel %vm500, %v1378, 0.0
        %v1411 = vrot.slane %v1410, 4
        %v1412 = vadd.f32 %v1410, %v1411
        %v1413 = vrot.slane %v1412, 2
        %v1414 = vadd.f32 %v1412, %v1413
        %v1415 = vrot.slane %v1414, 1
        %v1416 = vadd.f32 %v1414, %v1415
        %v1417 = vsel %vm500, %v1379, 0.0
        %v1418 = vrot.slane %v1417, 4
        %v1419 = vadd.f32 %v1417, %v1418
        %v1420 = vrot.slane %v1419, 2
        %v1421 = vadd.f32 %v1419, %v1420
        %v1422 = vrot.slane %v1421, 1
        %v1423 = vadd.f32 %v1421, %v1422
        %v1424 = vsel %vm500, %v1380, 0.0
        %v1425 = vrot.slane %v1424, 4
        %v1426 = vadd.f32 %v1424, %v1425
        %v1427 = vrot.slane %v1426, 2
        %v1428 = vadd.f32 %v1426, %v1427
        %v1429 = vrot.slane %v1428, 1
        %v1430 = vadd.f32 %v1428, %v1429
        %v1431 = vsel %vm500, %v1381, 0.0
        %v1432 = vrot.slane %v1431, 4
        %v1433 = vadd.f32 %v1431, %v1432
        %v1434 = vrot.slane %v1433, 2
        %v1435 = vadd.f32 %v1433, %v1434
        %v1436 = vrot.slane %v1435, 1
        %v1437 = vadd.f32 %v1435, %v1436
        %vm1446 = vcmask 1041409
        %v1447 = vsel %vm1446, %v1395, %v1388
        %vm1448 = vcmask 1042434
        %v1449 = vsel %vm1448, %v1402, %v1447
        %vm1450 = vcmask 1043459
        %v1451 = vsel %vm1450, %v1409, %v1449
        %vm1452 = vcmask 1044484
        %v1453 = vsel %vm1452, %v1416, %v1451
        %vm1454 = vcmask 1045509
        %v1455 = vsel %vm1454, %v1423, %v1453
        %vm1456 = vcmask 1046534
        %v1457 = vsel %vm1456, %v1430, %v1455
        %vm1458 = vcmask 1047559
        %v1459 = vsel %vm1458, %v1437, %v1457
        %1461 = vst.msk [vmem:[%s452] sm:$0xff] %vm500, %v1459
        %s1462 = sand.u32 %s306, 1
        %s1463 = scalar_lea.sflag [#allocation3], %s1462
        %s1464 = sand.u32 %s306, 1
        %s1465 = smul.addr %s1464, 8
        %s1466 = scalar_lea.vmem [#allocation2], %s1465
        // Predicated region
        $region69: #{tpu_custom_call.1} parent=67 // pred_check
          %p1467 = pneg %p316
        $region70: #{tpu_custom_call.1} parent=67 // pred_check_branch
          %1469 = sbr.rel (%p1467) target = $region72
        $region71: #{tpu_custom_call.1} parent=67 // pred_region
          %s1471 = ssub.s32 128, 128
          %1472 = vsyncadd %s1463, %s1471
          %s1473 = smul.addr %s26, 128
          %s1474 = scalar_lea.hbm %s12, %s1473
          %s1476 = sshll.u32 %s1466, 4
          %s1477 = int_to_ptr.vmem [resolvable:$true] %s1476
          %1479 = dma.vmem_to_hbm [thread:$0]  %s1477, 128, %s1474, %s1463
        $region72: #{tpu_custom_call.1} parent=67 // pred_fallthru
          _
      $region68: #{tpu_custom_call.1} parent=5 // pred_fallthru
        _
      %p1480 = scmp.le.s32.totalorder 2, %s21
      // Predicated region
      $region73: #{tpu_custom_call.1} parent=5 // pred_check
        %p1481 = pneg %p1480
      $region74: #{tpu_custom_call.1} parent=5 // pred_check_branch
        %1483 = sbr.rel (%p1481) target = $region76
      $region75: #{tpu_custom_call.1} parent=5 // pred_region
        %s1484 = ssub.s32 %s21, 2
        // Predicated region
        $region77: #{tpu_custom_call.1} parent=75 // pred_check
          %p1485 = pneg %p322
        $region78: #{tpu_custom_call.1} parent=75 // pred_check_branch
          %1487 = sbr.rel (%p1485) target = $region80
        $region79: #{tpu_custom_call.1} parent=75 // pred_region
          %s1488 = sand.u32 %s307, 1
          %s1489 = scalar_lea.sflag [#allocation3], %s1488
          %s1490 = sand.u32 %s307, 1
          %s1491 = smul.addr %s1490, 8
          %s1492 = scalar_lea.vmem [#allocation2], %s1491
          %1493 = dma.done %s1489, 128
        $region80: #{tpu_custom_call.1} parent=75 // pred_fallthru
          _
      $region76: #{tpu_custom_call.1} parent=5 // pred_fallthru
        _
    $region6: #{tpu_custom_call.1} parent=1 // loop_footer
      %s25 = sadd.s32 1, %s21
    $region7: #{tpu_custom_call.1} parent=1 // loop_footer_branch
      %20 = sbr.rel target = $region3
    $region8: #{tpu_custom_call.1} parent=1 // loop_exit
      _
    %1494 = vsyncpa [#allocation3], 1
    %s1495 = scalar_lea.sflag [#allocation3], 1
    %1496 = vsyncpa %s1495, 1

</llo_original>
